<compile_context>
chip_gen: v5e
topology: v5e:2x2
jax: 0.10.0
libtpu: 0.0.40
codegen_flags: <defaults>
</compile_context>

<pallas_src>
import functools

import jax
import jax.numpy as jnp
from jax.experimental import pallas as pl
from jax.experimental.pallas import tpu as pltpu


def _round_up(x: int, m: int) -> int:
    return ((x + m - 1) // m) * m


def _pick_tile(total: int, preferred: int, align: int) -> int:
    """Largest multiple of `align` that divides `total` and is <= `preferred`.

    `total` must already be a multiple of `align` (we pad before calling)."""
    t = max((min(preferred, total) // align) * align, align)
    while total % t != 0:
        t -= align
    return t


def _vmem_cap_bytes() -> int:
    """~70% of physical VMEM (128 MiB on v5e/v6e, 64 MiB on v7x)."""
    try:
        phys = pltpu.get_tpu_info().vmem_capacity_bytes
    except Exception:
        phys = 64 * 1024 * 1024  # conservative (v7x-sized) fallback
    return int(phys * 0.7)


def _make_skipgram_kernel(nj: int, tn: int):
    """Fused linear + online log-softmax over vocab tiles.

    Grid = (batch tiles, vocab tiles); vocab axis is the reduction ("arbitrary")
    axis.  Refs seen by the kernel:
      xg_ref : VMEM bf16 [TB, N_dim]   gathered embeddings (block (b, 0))
      w_ref  : VMEM bf16 [N_dim, TN]   weight tile (block (0, j), streamed)
      b_ref  : VMEM f32  [nj, 1, TN]   full bias (resident, constant block)
      o_ref  : VMEM f32  [TB, N_pad]   output block, resident across j
      strip  : VMEM f32  [nj, TB, TN]  raw logits strip (scratch)
      m_scr  : VMEM f32  [TB, 1]       running max
      l_scr  : VMEM f32  [TB, 1]       running sum of exp
    """

    def kernel(xg_ref, w_ref, b_ref, o_ref, strip, m_scr, l_scr):
        j = pl.program_id(1)

        @pl.when(j == 0)
        def _init():
            m_scr[...] = jnp.full_like(m_scr, -jnp.inf)
            l_scr[...] = jnp.zeros_like(l_scr)

        # Logits for this vocab tile on the MXU (bf16 x bf16 -> f32 accumulate).
        logits = (
            jnp.dot(xg_ref[...], w_ref[...], preferred_element_type=jnp.float32)
            + b_ref[j]
        )
        # Stash raw logits (dynamic index only on the leading scratch axis).
        strip[j] = logits

        # Online log-sum-exp update (f32 math).
        m_prev = m_scr[...]
        m_new = jnp.maximum(m_prev, jnp.max(logits, axis=-1, keepdims=True))
        l_scr[...] = (l_scr[...] * jnp.exp(m_prev - m_new)
                      + jnp.sum(jnp.exp(logits - m_new), axis=-1, keepdims=True))
        m_scr[...] = m_new

        @pl.when(j == nj - 1)
        def _finalize():
            lse = m_scr[...] + jnp.log(l_scr[...])
            # Static unroll -> static lane offsets -> dense, unmasked stores
            # into the resident [TB, N_pad] output block.
            for jj in range(nj):
                o_ref[:, jj * tn:(jj + 1) * tn] = strip[jj] - lse

    return kernel


@functools.partial(jax.jit, static_argnames=("tb", "tn"))
def skipgram_forward(indices, emb_table, weight_t, bias, *, tb=128, tn=2048):
    """DL_SkipGram forward: log_softmax(embedding(x) @ W^T + b, axis=1).

    indices   : int32 [B]               center-word indices
    emb_table : f32   [N_word, N_dim]   embedding table
    weight_t  : f32   [N_dim, N_word]   linear weight, transposed
    bias      : f32   [N_word] or [1, N_word]
    returns   : f32   [B, N_word]       log-probabilities

    Tiling knobs: tb = batch tile (128 default; 256 on v6e when B >= 256; keep
    B/tb >= 2 on v7x so both TensorCores are used), tn = vocab tile (>= 1024).
    """
    B = indices.shape[0]
    N_word, N_dim = emb_table.shape
    assert weight_t.shape == (N_dim, N_word), weight_t.shape

    # ---- Pad batch / vocab so tiles always exist --------------------------------
    B_pad = _round_up(max(B, 8), 8)
    N_pad = _round_up(max(N_word, 128), 128)
    TB = _pick_tile(B_pad, tb, 8)
    TN = _pick_tile(N_pad, tn, 128)
    nb, nj = B_pad // TB, N_pad // TN

    # ---- Host-side prep (tiny next to the B x N_word matmul) --------------------
    idx = jnp.clip(indices.astype(jnp.int32), 0, N_word - 1)   # clamp (vs. raise)
    if B_pad != B:
        idx = jnp.pad(idx, (0, B_pad - B))
    # Embedding gather outside the kernel (per perf review); pre-cast to bf16 once.
    xg = jnp.take(emb_table, idx, axis=0).astype(jnp.bfloat16)      # [B_pad, N_dim]

    w = weight_t.astype(jnp.bfloat16)                  # halve weight HBM traffic
    bias_flat = jnp.reshape(bias, (-1,)).astype(jnp.float32)
    if N_pad != N_word:
        w = jnp.pad(w, ((0, 0), (0, N_pad - N_word)))
        bias_flat = jnp.pad(bias_flat, (0, N_pad - N_word),
                            constant_values=-1e30)     # padded cols: exp(.) -> 0
    bias3 = bias_flat.reshape(nj, 1, TN)               # resident bias, indexed by j

    # ---- VMEM budget -------------------------------------------------------------
    vmem_est = (2 * TB * N_dim * 2          # xg blocks (bf16, double-buffered)
                + 2 * N_dim * TN * 2        # weight tiles (bf16, double-buffered)
                + 2 * nj * 8 * TN * 4       # bias (resident, sublane-padded)
                + 2 * TB * N_pad * 4        # output blocks (f32, double-buffered)
                + TB * N_pad * 4            # raw-logits strip scratch (f32)
                + 4 * TB * 4)               # running max / sum-exp
    cap = _vmem_cap_bytes()
    if vmem_est > cap:
        raise ValueError(
            f"Tile config needs ~{vmem_est >> 20} MiB VMEM > per-chip cap "
            f"{cap >> 20} MiB; reduce tb and/or tn.")
    vmem_limit = int(min(max(2 * vmem_est, 24 << 20), cap))

    out = pl.pallas_call(
        _make_skipgram_kernel(nj, TN),
        out_shape=jax.ShapeDtypeStruct((B_pad, N_pad), jnp.float32),
        grid=(nb, nj),
        in_specs=[
            pl.BlockSpec((TB, N_dim), lambda bi, ji: (bi, 0)),     # gathered embeddings
            pl.BlockSpec((N_dim, TN), lambda bi, ji: (0, ji)),     # weight tile (streamed)
            pl.BlockSpec((nj, 1, TN), lambda bi, ji: (0, 0, 0)),   # full bias (resident)
        ],
        out_specs=pl.BlockSpec((TB, N_pad), lambda bi, ji: (bi, 0)),  # resident strip
        scratch_shapes=[
            pltpu.VMEM((nj, TB, TN), jnp.float32),   # raw logits strip
            pltpu.VMEM((TB, 1), jnp.float32),        # running max
            pltpu.VMEM((TB, 1), jnp.float32),        # running sum-exp
        ],
        compiler_params=pltpu.CompilerParams(
            dimension_semantics=("parallel", "arbitrary"),
            vmem_limit_bytes=vmem_limit,
        ),
    )(xg, w, bias3)

    return out[:B, :N_word]


if __name__ == "__main__":
    # Small but multi-tile shapes consistent with the module's __init__:
    # N_word x N_dim embedding, Linear(N_dim -> N_word).  N_gram is unused by
    # the layers, exactly as in the PyTorch reference.
    N_word = 4096    # vocab size  -> nj = 2 vocab tiles at TN=2048
    N_dim = 128      # embedding dim
    N_gram = 2       # unused (kept for spec parity)
    B = 256          # batch of center-word indices -> nb = 2 batch tiles (v7x: 2 TCs)

    key = jax.random.PRNGKey(0)
    k_idx, k_emb, k_w, k_b = jax.random.split(key, 4)

    # Parameter init in the spirit of torch defaults:
    #   nn.Embedding -> N(0, 1); nn.Linear -> U(-1/sqrt(in), 1/sqrt(in)).
    emb_table = jax.random.normal(k_emb, (N_word, N_dim), dtype=jnp.float32)
    bound = float(N_dim) ** -0.5
    weight = jax.random.uniform(k_w, (N_word, N_dim), jnp.float32, -bound, bound)
    bias = jax.random.uniform(k_b, (1, N_word), jnp.float32, -bound, bound)
    weight_t = weight.T                      # [N_dim, N_word]

    indices = jax.random.randint(k_idx, (B,), 0, N_word, dtype=jnp.int32)

    out = skipgram_forward(indices, emb_table, weight_t, bias, tb=128, tn=2048)
    out = jax.block_until_ready(out)

    # Pure-JAX reference using the same bf16 operand precision as the kernel.
    x_bf = jnp.take(emb_table, indices, axis=0).astype(jnp.bfloat16).astype(jnp.float32)
    w_bf = weight_t.astype(jnp.bfloat16).astype(jnp.float32)
    logits_ref = jnp.dot(x_bf, w_bf, precision=jax.lax.Precision.HIGHEST) + bias
    ref = jax.nn.log_softmax(logits_ref, axis=-1)

    assert out.shape == (B, N_word)
    err = float(jnp.max(jnp.abs(out - ref)))
    assert jnp.allclose(out, ref, atol=2e-3, rtol=2e-3), f"max abs err = {err}"

    print("KERNEL_OK")
</pallas_src>

<mosaic_0001>
module attributes {stable_mosaic.version = 11 : i64} {
  func.func @kernel(%arg0: i32, %arg1: i32, %arg2: memref<128x128xbf16, #tpu.memory_space<vmem>>, %arg3: memref<128x2048xbf16, #tpu.memory_space<vmem>>, %arg4: memref<2x1x2048xf32, #tpu.memory_space<vmem>>, %arg5: memref<128x4096xf32, #tpu.memory_space<vmem>>, %arg6: memref<2x128x2048xf32, #tpu.memory_space<vmem>>, %arg7: memref<128x1xf32, #tpu.memory_space<vmem>>, %arg8: memref<128x1xf32, #tpu.memory_space<vmem>>) attributes {dimension_semantics = [#tpu.dimension_semantics<parallel>, #tpu.dimension_semantics<arbitrary>], iteration_bounds = array<i64: 2, 2>, scalar_prefetch = 0 : i64, scratch_operands = 3 : i64, tpu.core_type = #tpu.core_type<tc>, window_params = [{transform_indices = @transform_0, window_bounds = array<i64: 128, 128>}, {transform_indices = @transform_1, window_bounds = array<i64: 128, 2048>}, {pipeline_mode = #tpu.pipeline_mode<synchronous>, transform_indices = @transform_2, window_bounds = array<i64: 2, 1, 2048>}, {transform_indices = @transform_3, window_bounds = array<i64: 128, 4096>}]} {
    %c0_i32 = arith.constant 0 : i32
    %0 = arith.cmpi eq, %arg1, %c0_i32 : i32
    %1 = arith.extui %0 : i1 to i32
    %c0_i32_0 = arith.constant 0 : i32
    %2 = arith.cmpi ne, %1, %c0_i32_0 : i32
    scf.if %2 {
      %cst_19 = arith.constant 0xFF800000 : f32
      %34 = vector.broadcast %cst_19 : f32 to vector<128x1xf32>
      %c0_20 = arith.constant 0 : index
      %c0_21 = arith.constant 0 : index
      %35 = vector.load %arg7[%c0_20, %c0_21] : memref<128x1xf32, #tpu.memory_space<vmem>>, vector<128x1xf32>
      tpu.vector_store %arg7[%c0_20, %c0_21], %34 {strides = array<i32>} : memref<128x1xf32, #tpu.memory_space<vmem>>, vector<128x1xf32>,
      %cst_22 = arith.constant 0.000000e+00 : f32
      %36 = vector.broadcast %cst_22 : f32 to vector<128x1xf32>
      %c0_23 = arith.constant 0 : index
      %c0_24 = arith.constant 0 : index
      %37 = vector.load %arg8[%c0_23, %c0_24] : memref<128x1xf32, #tpu.memory_space<vmem>>, vector<128x1xf32>
      tpu.vector_store %arg8[%c0_23, %c0_24], %36 {strides = array<i32>} : memref<128x1xf32, #tpu.memory_space<vmem>>, vector<128x1xf32>,
    } else {
    }
    %c0 = arith.constant 0 : index
    %c0_1 = arith.constant 0 : index
    %3 = vector.load %arg2[%c0, %c0_1] : memref<128x128xbf16, #tpu.memory_space<vmem>>, vector<128x128xbf16>
    %c0_2 = arith.constant 0 : index
    %c0_3 = arith.constant 0 : index
    %4 = vector.load %arg3[%c0_2, %c0_3] : memref<128x2048xbf16, #tpu.memory_space<vmem>>, vector<128x2048xbf16>
    %cst = arith.constant dense<0.000000e+00> : vector<128x2048xf32>
    %5 = tpu.matmul %3, %4, %cst {dimension_numbers = #tpu.dot_dimension_numbers<[1], [0], [0], [1], [0, 0, 1, 1], [], []>} : vector<128x128xbf16>, vector<128x2048xbf16>, vector<128x2048xf32> -> vector<128x2048xf32>
    %6 = arith.index_cast %arg1 : i32 to index
    %c0_4 = arith.constant 0 : index
    %c0_5 = arith.constant 0 : index
    %7 = vector.load %arg4[%6, %c0_4, %c0_5] : memref<2x1x2048xf32, #tpu.memory_space<vmem>>, vector<1x1x2048xf32>
    %8 = vector.shape_cast %7 : vector<1x1x2048xf32> to vector<1x2048xf32>
    %9 = vector.broadcast %8 : vector<1x2048xf32> to vector<128x2048xf32>
    %10 = arith.addf %5, %9 : vector<128x2048xf32>
    %11 = arith.index_cast %arg1 : i32 to index
    %c0_6 = arith.constant 0 : index
    %c0_7 = arith.constant 0 : index
    %12 = vector.load %arg6[%11, %c0_6, %c0_7] : memref<2x128x2048xf32, #tpu.memory_space<vmem>>, vector<1x128x2048xf32>
    %13 = vector.shape_cast %12 : vector<1x128x2048xf32> to vector<128x2048xf32>
    %14 = vector.shape_cast %10 : vector<128x2048xf32> to vector<1x128x2048xf32>
    tpu.vector_store %arg6[%11, %c0_6, %c0_7], %14 {strides = array<i32>} : memref<2x128x2048xf32, #tpu.memory_space<vmem>>, vector<1x128x2048xf32>,
    %c0_8 = arith.constant 0 : index
    %c0_9 = arith.constant 0 : index
    %15 = vector.load %arg7[%c0_8, %c0_9] : memref<128x1xf32, #tpu.memory_space<vmem>>, vector<128x1xf32>
    %cst_10 = arith.constant dense<0xFF800000> : vector<128xf32>
    %16 = vector.multi_reduction <maximumf>, %10, %cst_10 [1] : vector<128x2048xf32> to vector<128xf32>
    %17 = vector.shape_cast %16 : vector<128xf32> to vector<128x1xf32>
    %18 = arith.maximumf %15, %17 : vector<128x1xf32>
    %c0_11 = arith.constant 0 : index
    %c0_12 = arith.constant 0 : index
    %19 = vector.load %arg8[%c0_11, %c0_12] : memref<128x1xf32, #tpu.memory_space<vmem>>, vector<128x1xf32>
    %20 = arith.subf %15, %18 : vector<128x1xf32>
    %21 = math.exp %20 : vector<128x1xf32>
    %22 = arith.mulf %19, %21 : vector<128x1xf32>
    %23 = vector.broadcast %18 : vector<128x1xf32> to vector<128x2048xf32>
    %24 = arith.subf %10, %23 : vector<128x2048xf32>
    %25 = math.exp %24 : vector<128x2048xf32>
    %cst_13 = arith.constant dense<0.000000e+00> : vector<128xf32>
    %26 = vector.multi_reduction <add>, %25, %cst_13 [1] : vector<128x2048xf32> to vector<128xf32>
    %27 = vector.shape_cast %26 : vector<128xf32> to vector<128x1xf32>
    %28 = arith.addf %22, %27 : vector<128x1xf32>
    %c0_14 = arith.constant 0 : index
    %c0_15 = arith.constant 0 : index
    %29 = vector.load %arg8[%c0_14, %c0_15] : memref<128x1xf32, #tpu.memory_space<vmem>>, vector<128x1xf32>
    tpu.vector_store %arg8[%c0_14, %c0_15], %28 {strides = array<i32>} : memref<128x1xf32, #tpu.memory_space<vmem>>, vector<128x1xf32>,
    %c0_16 = arith.constant 0 : index
    %c0_17 = arith.constant 0 : index
    %30 = vector.load %arg7[%c0_16, %c0_17] : memref<128x1xf32, #tpu.memory_space<vmem>>, vector<128x1xf32>
    tpu.vector_store %arg7[%c0_16, %c0_17], %18 {strides = array<i32>} : memref<128x1xf32, #tpu.memory_space<vmem>>, vector<128x1xf32>,
    %c1_i32 = arith.constant 1 : i32
    %31 = arith.cmpi eq, %arg1, %c1_i32 : i32
    %32 = arith.extui %31 : i1 to i32
    %c0_i32_18 = arith.constant 0 : i32
    %33 = arith.cmpi ne, %32, %c0_i32_18 : i32
    scf.if %33 {
      %c0_19 = arith.constant 0 : index
      %c0_20 = arith.constant 0 : index
      %34 = vector.load %arg7[%c0_19, %c0_20] : memref<128x1xf32, #tpu.memory_space<vmem>>, vector<128x1xf32>
      %c0_21 = arith.constant 0 : index
      %c0_22 = arith.constant 0 : index
      %35 = vector.load %arg8[%c0_21, %c0_22] : memref<128x1xf32, #tpu.memory_space<vmem>>, vector<128x1xf32>
      %36 = math.log %35 : vector<128x1xf32>
      %37 = arith.addf %34, %36 : vector<128x1xf32>
      %c0_23 = arith.constant 0 : index
      %c0_24 = arith.constant 0 : index
      %c0_25 = arith.constant 0 : index
      %38 = vector.load %arg6[%c0_23, %c0_24, %c0_25] : memref<2x128x2048xf32, #tpu.memory_space<vmem>>, vector<1x128x2048xf32>
      %39 = vector.shape_cast %38 : vector<1x128x2048xf32> to vector<128x2048xf32>
      %40 = vector.broadcast %37 : vector<128x1xf32> to vector<128x2048xf32>
      %41 = arith.subf %39, %40 : vector<128x2048xf32>
      %c0_26 = arith.constant 0 : index
      %c0_27 = arith.constant 0 : index
      %42 = vector.load %arg5[%c0_26, %c0_27] : memref<128x4096xf32, #tpu.memory_space<vmem>>, vector<128x2048xf32>
      tpu.vector_store %arg5[%c0_26, %c0_27], %41 {strides = array<i32>} : memref<128x4096xf32, #tpu.memory_space<vmem>>, vector<128x2048xf32>,
      %c1 = arith.constant 1 : index
      %c0_28 = arith.constant 0 : index
      %c0_29 = arith.constant 0 : index
      %43 = vector.load %arg6[%c1, %c0_28, %c0_29] : memref<2x128x2048xf32, #tpu.memory_space<vmem>>, vector<1x128x2048xf32>
      %44 = vector.shape_cast %43 : vector<1x128x2048xf32> to vector<128x2048xf32>
      %45 = vector.broadcast %37 : vector<128x1xf32> to vector<128x2048xf32>
      %46 = arith.subf %44, %45 : vector<128x2048xf32>
      %c0_30 = arith.constant 0 : index
      %c2048 = arith.constant 2048 : index
      %47 = vector.load %arg5[%c0_30, %c2048] : memref<128x4096xf32, #tpu.memory_space<vmem>>, vector<128x2048xf32>
      tpu.vector_store %arg5[%c0_30, %c2048], %46 {strides = array<i32>} : memref<128x4096xf32, #tpu.memory_space<vmem>>, vector<128x2048xf32>,
    } else {
    }
    return
  }
  func.func @transform_0(%arg0: i32, %arg1: i32) -> (i32, i32) {
    %c0_i32 = arith.constant 0 : i32
    %c0_i32_0 = arith.constant 0 : i32
    return %arg0, %c0_i32 : i32, i32
  }
  func.func @transform_1(%arg0: i32, %arg1: i32) -> (i32, i32) {
    %c0_i32 = arith.constant 0 : i32
    %c0_i32_0 = arith.constant 0 : i32
    return %c0_i32, %arg1 : i32, i32
  }
  func.func @transform_2(%arg0: i32, %arg1: i32) -> (i32, i32, i32) {
    %c0_i32 = arith.constant 0 : i32
    %c0_i32_0 = arith.constant 0 : i32
    %c0_i32_1 = arith.constant 0 : i32
    %c0_i32_2 = arith.constant 0 : i32
    return %c0_i32, %c0_i32_0, %c0_i32_1 : i32, i32, i32
  }
  func.func @transform_3(%arg0: i32, %arg1: i32) -> (i32, i32) {
    %c0_i32 = arith.constant 0 : i32
    %c0_i32_0 = arith.constant 0 : i32
    return %arg0, %c0_i32 : i32, i32
  }
}

</mosaic_0001>

<llo_original>
// kernel: skipgram_forward.1
$region0: #{skipgram_forward.1}
  #allocation0 [shape = 'u32[]', space=smem, size = 0x4, offset = 0x4, fixed_abs, tag = 'smem constant byte address 0x4 - core index']
  #allocation1 [shape = 'u32[72,128]{1,0:T(1,128)}', space=vmem, size = 0x9000, scoped, tag = 'internal scratch']
  #allocation2 [shape = 'f32[2,128,2048]{2,1,0:T(8,128)}', space=vmem, size = 0x200000, scoped, tag = 'scratch operand']
  #allocation3 [shape = 'f32[128,1]{1,0:T(8,128)}', space=vmem, size = 0x10000, scoped, tag = 'scratch operand']
  #allocation4 [shape = 'f32[128,1]{1,0:T(8,128)}', space=vmem, size = 0x10000, scoped, tag = 'scratch operand']
  %s0 = inlined_call_operand.vmem [shape: bf16[256,128], index: 0, kind: input, shape index: {}]
  %s1 = inlined_call_operand.vmem [shape: bf16[128,4096], index: 1, kind: input, shape index: {}]
  %s2 = inlined_call_operand.vmem [shape: f32[2,1,2048], index: 2, kind: input, shape index: {}]
  %s3 = inlined_call_operand.hbm [shape: f32[256,4096], index: 3, kind: output, shape index: {}]
  %s4 = sld [smem:[#allocation0]]
  $region76: #{skipgram_forward.1} parent=0
    _
  %s6 = ssub.s32 1, %s4
  %s7 = scalar_select 0, %s6, %s4
  $region1: #{skipgram_forward.1} parent=0
    #allocation5 [shape = 'u8[1048576]{0}', space=vmem, size = 0x100000, scoped, tag = 'input window, operand 1']
    #allocation6 [shape = 'u8[4194304]{0}', space=vmem, size = 0x400000, scoped, tag = 'output window, operand 0']
    #allocation7 [shape = 's32[2]{0}', space=sflag, size = 0x8, scoped, tag = 'scoped memory for skipgram_forward.1']
    %8 = vsyncpa [#allocation7], 0
    %s9 = scalar_lea.sflag [#allocation7], 1
    %10 = vsyncpa %s9, 0
    loop: start=0, step=1, limit=6
    $region2: #{skipgram_forward.1} parent=1 // loop_pre_header
      _
    $region3: #{skipgram_forward.1} parent=1 // loop_header
      %s12 = sphi 0, %s16
      %p13 = scmp.ge.s32.totalorder %s12, 6
      %s19 = sphi 0, %s31
      %s20 = sphi 0, %s27
      %s21 = sphi 0, %s19
      %s22 = sphi 0, %s20
      %s23 = sphi 0, %s21
      %s24 = sphi 0, %s22
      %s34 = sphi 0, %s36
      %s37 = sphi 0, %s34
      %s38 = sphi 0, %s37
      %s54 = sphi 0, %s38
      %s60 = sphi 0, %s62
      %s63 = sphi 0, %s60
      %s64 = sphi 0, %s63
      %s80 = sphi 0, %s64
      %s84 = sphi 0, %s84
      %s86 = sphi 0, %s84
      %s87 = sphi 0, %s86
      %s101 = sphi 0, %s87
      %s107 = sphi 0, %s109
      %s110 = sphi 0, %s107
      %s111 = sphi 0, %s110
      %s127 = sphi 0, %s111
    $region4: #{skipgram_forward.1} parent=1 // loop_header_branch
      %15 = sbr.rel (%p13) target = $region8
    $region5: #{skipgram_forward.1} parent=1 // loop_body
      %s17 = ssub.s32 %s12, 1
      %s18 = ssub.s32 %s12, 2
      %s25 = sadd.s32 1, %s20
      %p26 = scmp.ge.s32.totalorder %s25, 2
      %s27 = scalar_select %p26, 0, %s25
      %s28 = sadd.s32 1, %s19
      %s29 = scalar_select %p26, %s28, %s19
      %p30 = scmp.ge.s32.totalorder %s29, 2
      %s31 = scalar_select %p30, 0, %s29
      %s32 = ssub.s32 %s19, %s31
      %p33 = scmp.eq.s32.totalorder %s32, 0
      %s35 = sadd.s32 %s34, 1
      %s36 = scalar_select %p33, %s34, %s35
      %p39 = pneg %p33
      %p40 = scmp.eq.s32.totalorder %s12, 3
      %p41 = por %p39, %p40
      %p42 = scmp.ne.s32.totalorder %s34, %s37
      %p43 = scmp.eq.s32.totalorder %s12, 0
      %p44 = por %p42, %p43
      %p45 = scmp.ne.s32.totalorder %s34, %s37
      %p46 = scmp.eq.s32.totalorder %s17, 3
      %p47 = por %p45, %p46
      %p48 = scmp.ne.s32.totalorder %s37, %s38
      %p49 = scmp.eq.s32.totalorder %s17, 0
      %p50 = por %p48, %p49
      %p51 = scmp.ne.s32.totalorder %s37, %s38
      %p52 = scmp.eq.s32.totalorder %s18, 3
      %p53 = por %p51, %p52
      %p55 = scmp.ne.s32.totalorder %s38, %s54
      %p56 = scmp.eq.s32.totalorder %s18, 0
      %p57 = por %p55, %p56
      %s58 = ssub.s32 %s20, %s27
      %p59 = scmp.eq.s32.totalorder %s58, 0
      %s61 = sadd.s32 %s60, 1
      %s62 = scalar_select %p59, %s60, %s61
      %p65 = pneg %p59
      %p66 = scmp.eq.s32.totalorder %s12, 3
      %p67 = por %p65, %p66
      %p68 = scmp.ne.s32.totalorder %s60, %s63
      %p69 = scmp.eq.s32.totalorder %s12, 0
      %p70 = por %p68, %p69
      %p71 = scmp.ne.s32.totalorder %s60, %s63
      %p72 = scmp.eq.s32.totalorder %s17, 3
      %p73 = por %p71, %p72
      %p74 = scmp.ne.s32.totalorder %s63, %s64
      %p75 = scmp.eq.s32.totalorder %s17, 0
      %p76 = por %p74, %p75
      %p77 = scmp.ne.s32.totalorder %s63, %s64
      %p78 = scmp.eq.s32.totalorder %s18, 3
      %p79 = por %p77, %p78
      %p81 = scmp.ne.s32.totalorder %s64, %s80
      %p82 = scmp.eq.s32.totalorder %s18, 0
      %p83 = por %p81, %p82
      %s85 = sadd.s32 %s84, 1
      %p88 = scmp.eq.s32.totalorder %s12, 3
      %p89 = scmp.ne.s32.totalorder %s84, %s86
      %p90 = scmp.eq.s32.totalorder %s12, 0
      %p91 = por %p89, %p90
      %p92 = scmp.ne.s32.totalorder %s84, %s86
      %p93 = scmp.eq.s32.totalorder %s17, 3
      %p94 = por %p92, %p93
      %p95 = scmp.ne.s32.totalorder %s86, %s87
      %p96 = scmp.eq.s32.totalorder %s17, 0
      %p97 = por %p95, %p96
      %p98 = scmp.ne.s32.totalorder %s86, %s87
      %p99 = scmp.eq.s32.totalorder %s18, 3
      %p100 = por %p98, %p99
      %p102 = scmp.ne.s32.totalorder %s87, %s101
      %p103 = scmp.eq.s32.totalorder %s18, 0
      %p104 = por %p102, %p103
      %s105 = ssub.s32 %s19, %s31
      %p106 = scmp.eq.s32.totalorder %s105, 0
      %s108 = sadd.s32 %s107, 1
      %s109 = scalar_select %p106, %s107, %s108
      %p112 = pneg %p106
      %p113 = scmp.eq.s32.totalorder %s12, 3
      %p114 = por %p112, %p113
      %p115 = scmp.ne.s32.totalorder %s107, %s110
      %p116 = scmp.eq.s32.totalorder %s12, 0
      %p117 = por %p115, %p116
      %p118 = scmp.ne.s32.totalorder %s107, %s110
      %p119 = scmp.eq.s32.totalorder %s17, 3
      %p120 = por %p118, %p119
      %p121 = scmp.ne.s32.totalorder %s110, %s111
      %p122 = scmp.eq.s32.totalorder %s17, 0
      %p123 = por %p121, %p122
      %p124 = scmp.ne.s32.totalorder %s110, %s111
      %p125 = scmp.eq.s32.totalorder %s18, 3
      %p126 = por %p124, %p125
      %p128 = scmp.ne.s32.totalorder %s111, %s127
      %p129 = scmp.eq.s32.totalorder %s18, 0
      %p130 = por %p128, %p129
      %p131 = scmp.le.s32.totalorder 1, %s12
      %p132 = scmp.lt.s32.totalorder %s12, 5
      %p133 = pnand %p131, %p132
      %p134 = pneg %p133
      // Predicated region
      $region9: #{skipgram_forward.1} parent=5 // pred_check
        _
      $region10: #{skipgram_forward.1} parent=5 // pred_check_branch
        %136 = sbr.rel (%p133) target = $region12
      $region11: #{skipgram_forward.1} parent=5 // pred_region
        %s137 = ssub.s32 %s12, 1
        // Predicated region
        $region13: #{skipgram_forward.1} parent=11 // pred_check
          %p138 = pneg %p97
        $region14: #{skipgram_forward.1} parent=11 // pred_check_branch
          %140 = sbr.rel (%p138) target = $region16
        $region15: #{skipgram_forward.1} parent=11 // pred_region
          _
        $region16: #{skipgram_forward.1} parent=11 // pred_fallthru
          _
      $region12: #{skipgram_forward.1} parent=5 // pred_fallthru
        _
      %p141 = scmp.lt.s32.totalorder %s12, 4
      // Predicated region
      $region17: #{skipgram_forward.1} parent=5 // pred_check
        %p142 = pneg %p141
      $region18: #{skipgram_forward.1} parent=5 // pred_check_branch
        %144 = sbr.rel (%p142) target = $region20
      $region19: #{skipgram_forward.1} parent=5 // pred_region
        // Predicated region
        $region21: #{skipgram_forward.1} parent=19 // pred_check
          %p145 = pneg %p44
        $region22: #{skipgram_forward.1} parent=19 // pred_check_branch
          %147 = sbr.rel (%p145) target = $region24
        $region23: #{skipgram_forward.1} parent=19 // pred_region
          %s148 = smul.u32 16, %s19
          %p149 = scmp.lt.s32.totalorder %s148, 31
          %s150 = scalar_select %p149, %s148, 31
          %s151 = smul.addr %s150, 4
          %s152 = scalar_lea.vmem %s0, %s151
          %s153 = smul.u32 16, %s19
        $region24: #{skipgram_forward.1} parent=19 // pred_fallthru
          _
        // Predicated region
        $region25: #{skipgram_forward.1} parent=19 // pred_check
          %p154 = pneg %p70
        $region26: #{skipgram_forward.1} parent=19 // pred_check_branch
          %156 = sbr.rel (%p154) target = $region28
        $region27: #{skipgram_forward.1} parent=19 // pred_region
          %s157 = sand.u32 %s60, 1
          %s158 = sand.u32 %s60, 1
          %s159 = smul.addr %s158, 1024
          %s160 = scalar_lea.vmem [#allocation5], %s159
          %s161 = smul.u32 16, %s20
          %s162 = smul.addr %s161, 4
          %s163 = scalar_lea.vmem %s1, %s162
          // Predicated region
          $region29: #{skipgram_forward.1} parent=27 // pred_check
            _
          $region30: #{skipgram_forward.1} parent=27 // pred_check_branch
            %165 = sbr.rel (0) target = $region32
          $region31: #{skipgram_forward.1} parent=27 // pred_region
            // Predicated region
            $region33: #{skipgram_forward.1} parent=31 // pred_check
              _
            $region34: #{skipgram_forward.1} parent=31 // pred_check_branch
              %167 = sbr.rel (0) target = $region36
            $region35: #{skipgram_forward.1} parent=31 // pred_region
              loop: start=0, step=1, limit=1
              $region37: #{skipgram_forward.1} parent=35 // loop_pre_header
                _
              $region38: #{skipgram_forward.1} parent=35 // loop_header
                %s169 = sphi 0, %s173
                %p170 = scmp.ge.s32.totalorder %s169, 1
                %s174 = sphi %s163, %s163
                %s175 = sphi %s160, %s160
              $region39: #{skipgram_forward.1} parent=35 // loop_header_branch
                %172 = sbr.rel (%p170) target = $region43
              $region40: #{skipgram_forward.1} parent=35 // loop_body
                %v176 = vld [vmem:[%s174] sm:$0xff]
                %177 = vst [vmem:[%s175] sm:$0xff] %v176
                %v178 = vld [vmem:[%s174 + $0x8] sm:$0xff]
                %179 = vst [vmem:[%s175 + $0x8] sm:$0xff] %v178
                %v180 = vld [vmem:[%s174 + $0x10] sm:$0xff]
                %181 = vst [vmem:[%s175 + $0x10] sm:$0xff] %v180
                %v182 = vld [vmem:[%s174 + $0x18] sm:$0xff]
                %183 = vst [vmem:[%s175 + $0x18] sm:$0xff] %v182
                %v184 = vld [vmem:[%s174 + $0x20] sm:$0xff]
                %185 = vst [vmem:[%s175 + $0x20] sm:$0xff] %v184
                %v186 = vld [vmem:[%s174 + $0x28] sm:$0xff]
                %187 = vst [vmem:[%s175 + $0x28] sm:$0xff] %v186
                %v188 = vld [vmem:[%s174 + $0x30] sm:$0xff]
                %189 = vst [vmem:[%s175 + $0x30] sm:$0xff] %v188
                %v190 = vld [vmem:[%s174 + $0x38] sm:$0xff]
                %191 = vst [vmem:[%s175 + $0x38] sm:$0xff] %v190
                %v192 = vld [vmem:[%s174 + $0x80] sm:$0xff]
                %193 = vst [vmem:[%s175 + $0x40] sm:$0xff] %v192
                %v194 = vld [vmem:[%s174 + $0x88] sm:$0xff]
                %195 = vst [vmem:[%s175 + $0x48] sm:$0xff] %v194
                %v196 = vld [vmem:[%s174 + $0x90] sm:$0xff]
                %197 = vst [vmem:[%s175 + $0x50] sm:$0xff] %v196
                %v198 = vld [vmem:[%s174 + $0x98] sm:$0xff]
                %199 = vst [vmem:[%s175 + $0x58] sm:$0xff] %v198
                %v200 = vld [vmem:[%s174 + $0xa0] sm:$0xff]
                %201 = vst [vmem:[%s175 + $0x60] sm:$0xff] %v200
                %v202 = vld [vmem:[%s174 + $0xa8] sm:$0xff]
                %203 = vst [vmem:[%s175 + $0x68] sm:$0xff] %v202
                %v204 = vld [vmem:[%s174 + $0xb0] sm:$0xff]
                %205 = vst [vmem:[%s175 + $0x70] sm:$0xff] %v204
                %v206 = vld [vmem:[%s174 + $0xb8] sm:$0xff]
                %207 = vst [vmem:[%s175 + $0x78] sm:$0xff] %v206
                %v208 = vld [vmem:[%s174 + $0x100] sm:$0xff]
                %209 = vst [vmem:[%s175 + $0x80] sm:$0xff] %v208
                %v210 = vld [vmem:[%s174 + $0x108] sm:$0xff]
                %211 = vst [vmem:[%s175 + $0x88] sm:$0xff] %v210
                %v212 = vld [vmem:[%s174 + $0x110] sm:$0xff]
                %213 = vst [vmem:[%s175 + $0x90] sm:$0xff] %v212
                %v214 = vld [vmem:[%s174 + $0x118] sm:$0xff]
                %215 = vst [vmem:[%s175 + $0x98] sm:$0xff] %v214
                %v216 = vld [vmem:[%s174 + $0x120] sm:$0xff]
                %217 = vst [vmem:[%s175 + $0xa0] sm:$0xff] %v216
                %v218 = vld [vmem:[%s174 + $0x128] sm:$0xff]
                %219 = vst [vmem:[%s175 + $0xa8] sm:$0xff] %v218
                %v220 = vld [vmem:[%s174 + $0x130] sm:$0xff]
                %221 = vst [vmem:[%s175 + $0xb0] sm:$0xff] %v220
                %v222 = vld [vmem:[%s174 + $0x138] sm:$0xff]
                %223 = vst [vmem:[%s175 + $0xb8] sm:$0xff] %v222
                %v224 = vld [vmem:[%s174 + $0x180] sm:$0xff]
                %225 = vst [vmem:[%s175 + $0xc0] sm:$0xff] %v224
                %v226 = vld [vmem:[%s174 + $0x188] sm:$0xff]
                %227 = vst [vmem:[%s175 + $0xc8] sm:$0xff] %v226
                %v228 = vld [vmem:[%s174 + $0x190] sm:$0xff]
                %229 = vst [vmem:[%s175 + $0xd0] sm:$0xff] %v228
                %v230 = vld [vmem:[%s174 + $0x198] sm:$0xff]
                %231 = vst [vmem:[%s175 + $0xd8] sm:$0xff] %v230
                %v232 = vld [vmem:[%s174 + $0x1a0] sm:$0xff]
                %233 = vst [vmem:[%s175 + $0xe0] sm:$0xff] %v232
                %v234 = vld [vmem:[%s174 + $0x1a8] sm:$0xff]
                %235 = vst [vmem:[%s175 + $0xe8] sm:$0xff] %v234
                %v236 = vld [vmem:[%s174 + $0x1b0] sm:$0xff]
                %237 = vst [vmem:[%s175 + $0xf0] sm:$0xff] %v236
                %v238 = vld [vmem:[%s174 + $0x1b8] sm:$0xff]
                %239 = vst [vmem:[%s175 + $0xf8] sm:$0xff] %v238
                %v240 = vld [vmem:[%s174 + $0x200] sm:$0xff]
                %241 = vst [vmem:[%s175 + $0x100] sm:$0xff] %v240
                %v242 = vld [vmem:[%s174 + $0x208] sm:$0xff]
                %243 = vst [vmem:[%s175 + $0x108] sm:$0xff] %v242
                %v244 = vld [vmem:[%s174 + $0x210] sm:$0xff]
                %245 = vst [vmem:[%s175 + $0x110] sm:$0xff] %v244
                %v246 = vld [vmem:[%s174 + $0x218] sm:$0xff]
                %247 = vst [vmem:[%s175 + $0x118] sm:$0xff] %v246
                %v248 = vld [vmem:[%s174 + $0x220] sm:$0xff]
                %249 = vst [vmem:[%s175 + $0x120] sm:$0xff] %v248
                %v250 = vld [vmem:[%s174 + $0x228] sm:$0xff]
                %251 = vst [vmem:[%s175 + $0x128] sm:$0xff] %v250
                %v252 = vld [vmem:[%s174 + $0x230] sm:$0xff]
                %253 = vst [vmem:[%s175 + $0x130] sm:$0xff] %v252
                %v254 = vld [vmem:[%s174 + $0x238] sm:$0xff]
                %255 = vst [vmem:[%s175 + $0x138] sm:$0xff] %v254
                %v256 = vld [vmem:[%s174 + $0x280] sm:$0xff]
                %257 = vst [vmem:[%s175 + $0x140] sm:$0xff] %v256
                %v258 = vld [vmem:[%s174 + $0x288] sm:$0xff]
                %259 = vst [vmem:[%s175 + $0x148] sm:$0xff] %v258
                %v260 = vld [vmem:[%s174 + $0x290] sm:$0xff]
                %261 = vst [vmem:[%s175 + $0x150] sm:$0xff] %v260
                %v262 = vld [vmem:[%s174 + $0x298] sm:$0xff]
                %263 = vst [vmem:[%s175 + $0x158] sm:$0xff] %v262
                %v264 = vld [vmem:[%s174 + $0x2a0] sm:$0xff]
                %265 = vst [vmem:[%s175 + $0x160] sm:$0xff] %v264
                %v266 = vld [vmem:[%s174 + $0x2a8] sm:$0xff]
                %267 = vst [vmem:[%s175 + $0x168] sm:$0xff] %v266
                %v268 = vld [vmem:[%s174 + $0x2b0] sm:$0xff]
                %269 = vst [vmem:[%s175 + $0x170] sm:$0xff] %v268
                %v270 = vld [vmem:[%s174 + $0x2b8] sm:$0xff]
                %271 = vst [vmem:[%s175 + $0x178] sm:$0xff] %v270
                %v272 = vld [vmem:[%s174 + $0x300] sm:$0xff]
                %273 = vst [vmem:[%s175 + $0x180] sm:$0xff] %v272
                %v274 = vld [vmem:[%s174 + $0x308] sm:$0xff]
                %275 = vst [vmem:[%s175 + $0x188] sm:$0xff] %v274
                %v276 = vld [vmem:[%s174 + $0x310] sm:$0xff]
                %277 = vst [vmem:[%s175 + $0x190] sm:$0xff] %v276
                %v278 = vld [vmem:[%s174 + $0x318] sm:$0xff]
                %279 = vst [vmem:[%s175 + $0x198] sm:$0xff] %v278
                %v280 = vld [vmem:[%s174 + $0x320] sm:$0xff]
                %281 = vst [vmem:[%s175 + $0x1a0] sm:$0xff] %v280
                %v282 = vld [vmem:[%s174 + $0x328] sm:$0xff]
                %283 = vst [vmem:[%s175 + $0x1a8] sm:$0xff] %v282
                %v284 = vld [vmem:[%s174 + $0x330] sm:$0xff]
                %285 = vst [vmem:[%s175 + $0x1b0] sm:$0xff] %v284
                %v286 = vld [vmem:[%s174 + $0x338] sm:$0xff]
                %287 = vst [vmem:[%s175 + $0x1b8] sm:$0xff] %v286
                %v288 = vld [vmem:[%s174 + $0x380] sm:$0xff]
                %289 = vst [vmem:[%s175 + $0x1c0] sm:$0xff] %v288
                %v290 = vld [vmem:[%s174 + $0x388] sm:$0xff]
                %291 = vst [vmem:[%s175 + $0x1c8] sm:$0xff] %v290
                %v292 = vld [vmem:[%s174 + $0x390] sm:$0xff]
                %293 = vst [vmem:[%s175 + $0x1d0] sm:$0xff] %v292
                %v294 = vld [vmem:[%s174 + $0x398] sm:$0xff]
                %295 = vst [vmem:[%s175 + $0x1d8] sm:$0xff] %v294
                %v296 = vld [vmem:[%s174 + $0x3a0] sm:$0xff]
                %297 = vst [vmem:[%s175 + $0x1e0] sm:$0xff] %v296
                %v298 = vld [vmem:[%s174 + $0x3a8] sm:$0xff]
                %299 = vst [vmem:[%s175 + $0x1e8] sm:$0xff] %v298
                %v300 = vld [vmem:[%s174 + $0x3b0] sm:$0xff]
                %301 = vst [vmem:[%s175 + $0x1f0] sm:$0xff] %v300
                %v302 = vld [vmem:[%s174 + $0x3b8] sm:$0xff]
                %303 = vst [vmem:[%s175 + $0x1f8] sm:$0xff] %v302
                %v304 = vld [vmem:[%s174 + $0x400] sm:$0xff]
                %305 = vst [vmem:[%s175 + $0x200] sm:$0xff] %v304
                %v306 = vld [vmem:[%s174 + $0x408] sm:$0xff]
                %307 = vst [vmem:[%s175 + $0x208] sm:$0xff] %v306
                %v308 = vld [vmem:[%s174 + $0x410] sm:$0xff]
                %309 = vst [vmem:[%s175 + $0x210] sm:$0xff] %v308
                %v310 = vld [vmem:[%s174 + $0x418] sm:$0xff]
                %311 = vst [vmem:[%s175 + $0x218] sm:$0xff] %v310
                %v312 = vld [vmem:[%s174 + $0x420] sm:$0xff]
                %313 = vst [vmem:[%s175 + $0x220] sm:$0xff] %v312
                %v314 = vld [vmem:[%s174 + $0x428] sm:$0xff]
                %315 = vst [vmem:[%s175 + $0x228] sm:$0xff] %v314
                %v316 = vld [vmem:[%s174 + $0x430] sm:$0xff]
                %317 = vst [vmem:[%s175 + $0x230] sm:$0xff] %v316
                %v318 = vld [vmem:[%s174 + $0x438] sm:$0xff]
                %319 = vst [vmem:[%s175 + $0x238] sm:$0xff] %v318
                %v320 = vld [vmem:[%s174 + $0x480] sm:$0xff]
                %321 = vst [vmem:[%s175 + $0x240] sm:$0xff] %v320
                %v322 = vld [vmem:[%s174 + $0x488] sm:$0xff]
                %323 = vst [vmem:[%s175 + $0x248] sm:$0xff] %v322
                %v324 = vld [vmem:[%s174 + $0x490] sm:$0xff]
                %325 = vst [vmem:[%s175 + $0x250] sm:$0xff] %v324
                %v326 = vld [vmem:[%s174 + $0x498] sm:$0xff]
                %327 = vst [vmem:[%s175 + $0x258] sm:$0xff] %v326
                %v328 = vld [vmem:[%s174 + $0x4a0] sm:$0xff]
                %329 = vst [vmem:[%s175 + $0x260] sm:$0xff] %v328
                %v330 = vld [vmem:[%s174 + $0x4a8] sm:$0xff]
                %331 = vst [vmem:[%s175 + $0x268] sm:$0xff] %v330
                %v332 = vld [vmem:[%s174 + $0x4b0] sm:$0xff]
                %333 = vst [vmem:[%s175 + $0x270] sm:$0xff] %v332
                %v334 = vld [vmem:[%s174 + $0x4b8] sm:$0xff]
                %335 = vst [vmem:[%s175 + $0x278] sm:$0xff] %v334
                %v336 = vld [vmem:[%s174 + $0x500] sm:$0xff]
                %337 = vst [vmem:[%s175 + $0x280] sm:$0xff] %v336
                %v338 = vld [vmem:[%s174 + $0x508] sm:$0xff]
                %339 = vst [vmem:[%s175 + $0x288] sm:$0xff] %v338
                %v340 = vld [vmem:[%s174 + $0x510] sm:$0xff]
                %341 = vst [vmem:[%s175 + $0x290] sm:$0xff] %v340
                %v342 = vld [vmem:[%s174 + $0x518] sm:$0xff]
                %343 = vst [vmem:[%s175 + $0x298] sm:$0xff] %v342
                %v344 = vld [vmem:[%s174 + $0x520] sm:$0xff]
                %345 = vst [vmem:[%s175 + $0x2a0] sm:$0xff] %v344
                %v346 = vld [vmem:[%s174 + $0x528] sm:$0xff]
                %347 = vst [vmem:[%s175 + $0x2a8] sm:$0xff] %v346
                %v348 = vld [vmem:[%s174 + $0x530] sm:$0xff]
                %349 = vst [vmem:[%s175 + $0x2b0] sm:$0xff] %v348
                %v350 = vld [vmem:[%s174 + $0x538] sm:$0xff]
                %351 = vst [vmem:[%s175 + $0x2b8] sm:$0xff] %v350
                %v352 = vld [vmem:[%s174 + $0x580] sm:$0xff]
                %353 = vst [vmem:[%s175 + $0x2c0] sm:$0xff] %v352
                %v354 = vld [vmem:[%s174 + $0x588] sm:$0xff]
                %355 = vst [vmem:[%s175 + $0x2c8] sm:$0xff] %v354
                %v356 = vld [vmem:[%s174 + $0x590] sm:$0xff]
                %357 = vst [vmem:[%s175 + $0x2d0] sm:$0xff] %v356
                %v358 = vld [vmem:[%s174 + $0x598] sm:$0xff]
                %359 = vst [vmem:[%s175 + $0x2d8] sm:$0xff] %v358
                %v360 = vld [vmem:[%s174 + $0x5a0] sm:$0xff]
                %361 = vst [vmem:[%s175 + $0x2e0] sm:$0xff] %v360
                %v362 = vld [vmem:[%s174 + $0x5a8] sm:$0xff]
                %363 = vst [vmem:[%s175 + $0x2e8] sm:$0xff] %v362
                %v364 = vld [vmem:[%s174 + $0x5b0] sm:$0xff]
                %365 = vst [vmem:[%s175 + $0x2f0] sm:$0xff] %v364
                %v366 = vld [vmem:[%s174 + $0x5b8] sm:$0xff]
                %367 = vst [vmem:[%s175 + $0x2f8] sm:$0xff] %v366
                %v368 = vld [vmem:[%s174 + $0x600] sm:$0xff]
                %369 = vst [vmem:[%s175 + $0x300] sm:$0xff] %v368
                %v370 = vld [vmem:[%s174 + $0x608] sm:$0xff]
                %371 = vst [vmem:[%s175 + $0x308] sm:$0xff] %v370
                %v372 = vld [vmem:[%s174 + $0x610] sm:$0xff]
                %373 = vst [vmem:[%s175 + $0x310] sm:$0xff] %v372
                %v374 = vld [vmem:[%s174 + $0x618] sm:$0xff]
                %375 = vst [vmem:[%s175 + $0x318] sm:$0xff] %v374
                %v376 = vld [vmem:[%s174 + $0x620] sm:$0xff]
                %377 = vst [vmem:[%s175 + $0x320] sm:$0xff] %v376
                %v378 = vld [vmem:[%s174 + $0x628] sm:$0xff]
                %379 = vst [vmem:[%s175 + $0x328] sm:$0xff] %v378
                %v380 = vld [vmem:[%s174 + $0x630] sm:$0xff]
                %381 = vst [vmem:[%s175 + $0x330] sm:$0xff] %v380
                %v382 = vld [vmem:[%s174 + $0x638] sm:$0xff]
                %383 = vst [vmem:[%s175 + $0x338] sm:$0xff] %v382
                %v384 = vld [vmem:[%s174 + $0x680] sm:$0xff]
                %385 = vst [vmem:[%s175 + $0x340] sm:$0xff] %v384
                %v386 = vld [vmem:[%s174 + $0x688] sm:$0xff]
                %387 = vst [vmem:[%s175 + $0x348] sm:$0xff] %v386
                %v388 = vld [vmem:[%s174 + $0x690] sm:$0xff]
                %389 = vst [vmem:[%s175 + $0x350] sm:$0xff] %v388
                %v390 = vld [vmem:[%s174 + $0x698] sm:$0xff]
                %391 = vst [vmem:[%s175 + $0x358] sm:$0xff] %v390
                %v392 = vld [vmem:[%s174 + $0x6a0] sm:$0xff]
                %393 = vst [vmem:[%s175 + $0x360] sm:$0xff] %v392
                %v394 = vld [vmem:[%s174 + $0x6a8] sm:$0xff]
                %395 = vst [vmem:[%s175 + $0x368] sm:$0xff] %v394
                %v396 = vld [vmem:[%s174 + $0x6b0] sm:$0xff]
                %397 = vst [vmem:[%s175 + $0x370] sm:$0xff] %v396
                %v398 = vld [vmem:[%s174 + $0x6b8] sm:$0xff]
                %399 = vst [vmem:[%s175 + $0x378] sm:$0xff] %v398
                %v400 = vld [vmem:[%s174 + $0x700] sm:$0xff]
                %401 = vst [vmem:[%s175 + $0x380] sm:$0xff] %v400
                %v402 = vld [vmem:[%s174 + $0x708] sm:$0xff]
                %403 = vst [vmem:[%s175 + $0x388] sm:$0xff] %v402
                %v404 = vld [vmem:[%s174 + $0x710] sm:$0xff]
                %405 = vst [vmem:[%s175 + $0x390] sm:$0xff] %v404
                %v406 = vld [vmem:[%s174 + $0x718] sm:$0xff]
                %407 = vst [vmem:[%s175 + $0x398] sm:$0xff] %v406
                %v408 = vld [vmem:[%s174 + $0x720] sm:$0xff]
                %409 = vst [vmem:[%s175 + $0x3a0] sm:$0xff] %v408
                %v410 = vld [vmem:[%s174 + $0x728] sm:$0xff]
                %411 = vst [vmem:[%s175 + $0x3a8] sm:$0xff] %v410
                %v412 = vld [vmem:[%s174 + $0x730] sm:$0xff]
                %413 = vst [vmem:[%s175 + $0x3b0] sm:$0xff] %v412
                %v414 = vld [vmem:[%s174 + $0x738] sm:$0xff]
                %415 = vst [vmem:[%s175 + $0x3b8] sm:$0xff] %v414
                %v416 = vld [vmem:[%s174 + $0x780] sm:$0xff]
                %417 = vst [vmem:[%s175 + $0x3c0] sm:$0xff] %v416
                %v418 = vld [vmem:[%s174 + $0x788] sm:$0xff]
                %419 = vst [vmem:[%s175 + $0x3c8] sm:$0xff] %v418
                %v420 = vld [vmem:[%s174 + $0x790] sm:$0xff]
                %421 = vst [vmem:[%s175 + $0x3d0] sm:$0xff] %v420
                %v422 = vld [vmem:[%s174 + $0x798] sm:$0xff]
                %423 = vst [vmem:[%s175 + $0x3d8] sm:$0xff] %v422
                %v424 = vld [vmem:[%s174 + $0x7a0] sm:$0xff]
                %425 = vst [vmem:[%s175 + $0x3e0] sm:$0xff] %v424
                %v426 = vld [vmem:[%s174 + $0x7a8] sm:$0xff]
                %427 = vst [vmem:[%s175 + $0x3e8] sm:$0xff] %v426
                %v428 = vld [vmem:[%s174 + $0x7b0] sm:$0xff]
                %429 = vst [vmem:[%s175 + $0x3f0] sm:$0xff] %v428
                %v430 = vld [vmem:[%s174 + $0x7b8] sm:$0xff]
                %431 = vst [vmem:[%s175 + $0x3f8] sm:$0xff] %v430
              $region41: #{skipgram_forward.1} parent=35 // loop_footer
                %s173 = sadd.s32 1, %s169
              $region42: #{skipgram_forward.1} parent=35 // loop_footer_branch
                %168 = sbr.rel target = $region38
              $region43: #{skipgram_forward.1} parent=35 // loop_exit
                _
            $region36: #{skipgram_forward.1} parent=31 // pred_fallthru
              _
            // Predicated region
            $region44: #{skipgram_forward.1} parent=31 // pred_check
              _
            $region45: #{skipgram_forward.1} parent=31 // pred_check_branch
              %433 = sbr.rel target = $region47
            $region46: #{skipgram_forward.1} parent=31 // pred_region
              _
            $region47: #{skipgram_forward.1} parent=31 // pred_fallthru
              _
          $region32: #{skipgram_forward.1} parent=27 // pred_fallthru
            _
          %434 = vnop
        $region28: #{skipgram_forward.1} parent=19 // pred_fallthru
          _
      $region20: #{skipgram_forward.1} parent=5 // pred_fallthru
        _
      %p435 = scmp.le.s32.totalorder 1, %s12
      %p436 = scmp.lt.s32.totalorder %s12, 5
      %p437 = pnand %p435, %p436
      %p438 = pneg %p437
      // Predicated region
      $region48: #{skipgram_forward.1} parent=5 // pred_check
        _
      $region49: #{skipgram_forward.1} parent=5 // pred_check_branch
        %440 = sbr.rel (%p437) target = $region51
      $region50: #{skipgram_forward.1} parent=5 // pred_region
        %s441 = ssub.s32 %s12, 1
        %s442 = sand.u32 %s63, 1
        %s443 = sand.u32 %s63, 1
        %s444 = smul.addr %s443, 1024
        %s445 = scalar_lea.vmem [#allocation5], %s444
        // Predicated region
        $region52: #{skipgram_forward.1} parent=50 // pred_check
          %p446 = pneg %p76
        $region53: #{skipgram_forward.1} parent=50 // pred_check_branch
          %448 = sbr.rel (%p446) target = $region55
        $region54: #{skipgram_forward.1} parent=50 // pred_region
          _
        $region55: #{skipgram_forward.1} parent=50 // pred_fallthru
          _
        %s449 = smul.u32 16, %s21
        %p450 = scmp.lt.s32.totalorder %s449, 31
        %s451 = scalar_select %p450, %s449, 31
        %s452 = smul.addr %s451, 4
        %s453 = scalar_lea.vmem %s0, %s452
        %p454 = pneg %p50
        %p455 = pneg %p47
        %s456 = sand.u32 %s63, 1
        %s457 = sand.u32 %s63, 1
        %s458 = smul.addr %s457, 1024
        %s459 = scalar_lea.vmem [#allocation5], %s458
        %p460 = pneg %p76
        %p461 = pneg %p73
        %p462 = pneg %p97
        %p463 = pneg %p94
        %p464 = pneg %p123
        %p465 = pneg %p120
        %s466 = sand.u32 %s110, 1
        %s467 = scalar_lea.sflag [#allocation7], %s466
        %s468 = sand.u32 %s110, 1
        %s469 = smul.addr %s468, 4096
        %s470 = scalar_lea.vmem [#allocation6], %s469
        %s471 = smul.u32 16, %s21
        %p472 = scmp.lt.s32.totalorder %s471, 31
        %s473 = scalar_select %p472, %s471, 31
        %s474 = smul.addr %s473, 4
        %s475 = scalar_lea.vmem %s0, %s474
        %s476 = smul.u32 16, %s21
        %s477 = smul.u32 16, %s22
        %s478 = smul.u32 16, %s21
        %p479 = scmp.eq.s32.totalorder %s22, 0
        // Predicated region
        $region56: #{skipgram_forward.1} parent=50 // pred_check
          %p480 = pneg %p479
        $region57: #{skipgram_forward.1} parent=50 // pred_check_branch
          %482 = sbr.rel (%p480) target = $region59
        $region58: #{skipgram_forward.1} parent=50 // pred_region
          %vm483 = vcmask 7168
          %484 = vst.msk [vmem:[#allocation3] sm:$0xff] %vm483, -inf
          %485 = vst.msk [vmem:[#allocation3 + $0x8] sm:$0xff] %vm483, -inf
          %486 = vst.msk [vmem:[#allocation3 + $0x10] sm:$0xff] %vm483, -inf
          %487 = vst.msk [vmem:[#allocation3 + $0x18] sm:$0xff] %vm483, -inf
          %488 = vst.msk [vmem:[#allocation3 + $0x20] sm:$0xff] %vm483, -inf
          %489 = vst.msk [vmem:[#allocation3 + $0x28] sm:$0xff] %vm483, -inf
          %490 = vst.msk [vmem:[#allocation3 + $0x30] sm:$0xff] %vm483, -inf
          %491 = vst.msk [vmem:[#allocation3 + $0x38] sm:$0xff] %vm483, -inf
          %492 = vst.msk [vmem:[#allocation3 + $0x40] sm:$0xff] %vm483, -inf
          %493 = vst.msk [vmem:[#allocation3 + $0x48] sm:$0xff] %vm483, -inf
          %494 = vst.msk [vmem:[#allocation3 + $0x50] sm:$0xff] %vm483, -inf
          %495 = vst.msk [vmem:[#allocation3 + $0x58] sm:$0xff] %vm483, -inf
          %496 = vst.msk [vmem:[#allocation3 + $0x60] sm:$0xff] %vm483, -inf
          %497 = vst.msk [vmem:[#allocation3 + $0x68] sm:$0xff] %vm483, -inf
          %498 = vst.msk [vmem:[#allocation3 + $0x70] sm:$0xff] %vm483, -inf
          %499 = vst.msk [vmem:[#allocation3 + $0x78] sm:$0xff] %vm483, -inf
          %500 = vst.msk [vmem:[#allocation4] sm:$0xff] %vm483, 0.0
          %501 = vst.msk [vmem:[#allocation4 + $0x8] sm:$0xff] %vm483, 0.0
          %502 = vst.msk [vmem:[#allocation4 + $0x10] sm:$0xff] %vm483, 0.0
          %503 = vst.msk [vmem:[#allocation4 + $0x18] sm:$0xff] %vm483, 0.0
          %504 = vst.msk [vmem:[#allocation4 + $0x20] sm:$0xff] %vm483, 0.0
          %505 = vst.msk [vmem:[#allocation4 + $0x28] sm:$0xff] %vm483, 0.0
          %506 = vst.msk [vmem:[#allocation4 + $0x30] sm:$0xff] %vm483, 0.0
          %507 = vst.msk [vmem:[#allocation4 + $0x38] sm:$0xff] %vm483, 0.0
          %508 = vst.msk [vmem:[#allocation4 + $0x40] sm:$0xff] %vm483, 0.0
          %509 = vst.msk [vmem:[#allocation4 + $0x48] sm:$0xff] %vm483, 0.0
          %510 = vst.msk [vmem:[#allocation4 + $0x50] sm:$0xff] %vm483, 0.0
          %511 = vst.msk [vmem:[#allocation4 + $0x58] sm:$0xff] %vm483, 0.0
          %512 = vst.msk [vmem:[#allocation4 + $0x60] sm:$0xff] %vm483, 0.0
          %513 = vst.msk [vmem:[#allocation4 + $0x68] sm:$0xff] %vm483, 0.0
          %514 = vst.msk [vmem:[#allocation4 + $0x70] sm:$0xff] %vm483, 0.0
          %515 = vst.msk [vmem:[#allocation4 + $0x78] sm:$0xff] %vm483, 0.0
        $region59: #{skipgram_forward.1} parent=50 // pred_fallthru
          _
        %v516 = vld [vmem:[%s475] sm:$0xf]
        %v517 = vld [vmem:[%s475 + $0x4] sm:$0xf]
        %v518 = vld [vmem:[%s475 + $0x8] sm:$0xf]
        %v519 = vld [vmem:[%s475 + $0xc] sm:$0xf]
        %v520 = vld [vmem:[%s475 + $0x10] sm:$0xf]
        %v521 = vld [vmem:[%s475 + $0x14] sm:$0xf]
        %v522 = vld [vmem:[%s475 + $0x18] sm:$0xf]
        %v523 = vld [vmem:[%s475 + $0x1c] sm:$0xf]
        %v524 = vld [vmem:[%s475 + $0x20] sm:$0xf]
        %v525 = vld [vmem:[%s475 + $0x24] sm:$0xf]
        %v526 = vld [vmem:[%s475 + $0x28] sm:$0xf]
        %v527 = vld [vmem:[%s475 + $0x2c] sm:$0xf]
        %v528 = vld [vmem:[%s475 + $0x30] sm:$0xf]
        %v529 = vld [vmem:[%s475 + $0x34] sm:$0xf]
        %v530 = vld [vmem:[%s475 + $0x38] sm:$0xf]
        %v531 = vld [vmem:[%s475 + $0x3c] sm:$0xf]
        %v532 = vld [vmem:[%s445] sm:$0xff]
        %v533 = vld [vmem:[%s445 + $0x8] sm:$0xff]
        %v534 = vld [vmem:[%s445 + $0x10] sm:$0xff]
        %v535 = vld [vmem:[%s445 + $0x18] sm:$0xff]
        %v536 = vld [vmem:[%s445 + $0x20] sm:$0xff]
        %v537 = vld [vmem:[%s445 + $0x28] sm:$0xff]
        %v538 = vld [vmem:[%s445 + $0x30] sm:$0xff]
        %v539 = vld [vmem:[%s445 + $0x38] sm:$0xff]
        %v540 = vld [vmem:[%s445 + $0x40] sm:$0xff]
        %v541 = vld [vmem:[%s445 + $0x48] sm:$0xff]
        %v542 = vld [vmem:[%s445 + $0x50] sm:$0xff]
        %v543 = vld [vmem:[%s445 + $0x58] sm:$0xff]
        %v544 = vld [vmem:[%s445 + $0x60] sm:$0xff]
        %v545 = vld [vmem:[%s445 + $0x68] sm:$0xff]
        %v546 = vld [vmem:[%s445 + $0x70] sm:$0xff]
        %v547 = vld [vmem:[%s445 + $0x78] sm:$0xff]
        %v548 = vld [vmem:[%s445 + $0x80] sm:$0xff]
        %v549 = vld [vmem:[%s445 + $0x88] sm:$0xff]
        %v550 = vld [vmem:[%s445 + $0x90] sm:$0xff]
        %v551 = vld [vmem:[%s445 + $0x98] sm:$0xff]
        %v552 = vld [vmem:[%s445 + $0xa0] sm:$0xff]
        %v553 = vld [vmem:[%s445 + $0xa8] sm:$0xff]
        %v554 = vld [vmem:[%s445 + $0xb0] sm:$0xff]
        %v555 = vld [vmem:[%s445 + $0xb8] sm:$0xff]
        %v556 = vld [vmem:[%s445 + $0xc0] sm:$0xff]
        %v557 = vld [vmem:[%s445 + $0xc8] sm:$0xff]
        %v558 = vld [vmem:[%s445 + $0xd0] sm:$0xff]
        %v559 = vld [vmem:[%s445 + $0xd8] sm:$0xff]
        %v560 = vld [vmem:[%s445 + $0xe0] sm:$0xff]
        %v561 = vld [vmem:[%s445 + $0xe8] sm:$0xff]
        %v562 = vld [vmem:[%s445 + $0xf0] sm:$0xff]
        %v563 = vld [vmem:[%s445 + $0xf8] sm:$0xff]
        %v564 = vld [vmem:[%s445 + $0x100] sm:$0xff]
        %v565 = vld [vmem:[%s445 + $0x108] sm:$0xff]
        %v566 = vld [vmem:[%s445 + $0x110] sm:$0xff]
        %v567 = vld [vmem:[%s445 + $0x118] sm:$0xff]
        %v568 = vld [vmem:[%s445 + $0x120] sm:$0xff]
        %v569 = vld [vmem:[%s445 + $0x128] sm:$0xff]
        %v570 = vld [vmem:[%s445 + $0x130] sm:$0xff]
        %v571 = vld [vmem:[%s445 + $0x138] sm:$0xff]
        %v572 = vld [vmem:[%s445 + $0x140] sm:$0xff]
        %v573 = vld [vmem:[%s445 + $0x148] sm:$0xff]
        %v574 = vld [vmem:[%s445 + $0x150] sm:$0xff]
        %v575 = vld [vmem:[%s445 + $0x158] sm:$0xff]
        %v576 = vld [vmem:[%s445 + $0x160] sm:$0xff]
        %v577 = vld [vmem:[%s445 + $0x168] sm:$0xff]
        %v578 = vld [vmem:[%s445 + $0x170] sm:$0xff]
        %v579 = vld [vmem:[%s445 + $0x178] sm:$0xff]
        %v580 = vld [vmem:[%s445 + $0x180] sm:$0xff]
        %v581 = vld [vmem:[%s445 + $0x188] sm:$0xff]
        %v582 = vld [vmem:[%s445 + $0x190] sm:$0xff]
        %v583 = vld [vmem:[%s445 + $0x198] sm:$0xff]
        %v584 = vld [vmem:[%s445 + $0x1a0] sm:$0xff]
        %v585 = vld [vmem:[%s445 + $0x1a8] sm:$0xff]
        %v586 = vld [vmem:[%s445 + $0x1b0] sm:$0xff]
        %v587 = vld [vmem:[%s445 + $0x1b8] sm:$0xff]
        %v588 = vld [vmem:[%s445 + $0x1c0] sm:$0xff]
        %v589 = vld [vmem:[%s445 + $0x1c8] sm:$0xff]
        %v590 = vld [vmem:[%s445 + $0x1d0] sm:$0xff]
        %v591 = vld [vmem:[%s445 + $0x1d8] sm:$0xff]
        %v592 = vld [vmem:[%s445 + $0x1e0] sm:$0xff]
        %v593 = vld [vmem:[%s445 + $0x1e8] sm:$0xff]
        %v594 = vld [vmem:[%s445 + $0x1f0] sm:$0xff]
        %v595 = vld [vmem:[%s445 + $0x1f8] sm:$0xff]
        %v596 = vld [vmem:[%s445 + $0x200] sm:$0xff]
        %v597 = vld [vmem:[%s445 + $0x208] sm:$0xff]
        %v598 = vld [vmem:[%s445 + $0x210] sm:$0xff]
        %v599 = vld [vmem:[%s445 + $0x218] sm:$0xff]
        %v600 = vld [vmem:[%s445 + $0x220] sm:$0xff]
        %v601 = vld [vmem:[%s445 + $0x228] sm:$0xff]
        %v602 = vld [vmem:[%s445 + $0x230] sm:$0xff]
        %v603 = vld [vmem:[%s445 + $0x238] sm:$0xff]
        %v604 = vld [vmem:[%s445 + $0x240] sm:$0xff]
        %v605 = vld [vmem:[%s445 + $0x248] sm:$0xff]
        %v606 = vld [vmem:[%s445 + $0x250] sm:$0xff]
        %v607 = vld [vmem:[%s445 + $0x258] sm:$0xff]
        %v608 = vld [vmem:[%s445 + $0x260] sm:$0xff]
        %v609 = vld [vmem:[%s445 + $0x268] sm:$0xff]
        %v610 = vld [vmem:[%s445 + $0x270] sm:$0xff]
        %v611 = vld [vmem:[%s445 + $0x278] sm:$0xff]
        %v612 = vld [vmem:[%s445 + $0x280] sm:$0xff]
        %v613 = vld [vmem:[%s445 + $0x288] sm:$0xff]
        %v614 = vld [vmem:[%s445 + $0x290] sm:$0xff]
        %v615 = vld [vmem:[%s445 + $0x298] sm:$0xff]
        %v616 = vld [vmem:[%s445 + $0x2a0] sm:$0xff]
        %v617 = vld [vmem:[%s445 + $0x2a8] sm:$0xff]
        %v618 = vld [vmem:[%s445 + $0x2b0] sm:$0xff]
        %v619 = vld [vmem:[%s445 + $0x2b8] sm:$0xff]
        %v620 = vld [vmem:[%s445 + $0x2c0] sm:$0xff]
        %v621 = vld [vmem:[%s445 + $0x2c8] sm:$0xff]
        %v622 = vld [vmem:[%s445 + $0x2d0] sm:$0xff]
        %v623 = vld [vmem:[%s445 + $0x2d8] sm:$0xff]
        %v624 = vld [vmem:[%s445 + $0x2e0] sm:$0xff]
        %v625 = vld [vmem:[%s445 + $0x2e8] sm:$0xff]
        %v626 = vld [vmem:[%s445 + $0x2f0] sm:$0xff]
        %v627 = vld [vmem:[%s445 + $0x2f8] sm:$0xff]
        %v628 = vld [vmem:[%s445 + $0x300] sm:$0xff]
        %v629 = vld [vmem:[%s445 + $0x308] sm:$0xff]
        %v630 = vld [vmem:[%s445 + $0x310] sm:$0xff]
        %v631 = vld [vmem:[%s445 + $0x318] sm:$0xff]
        %v632 = vld [vmem:[%s445 + $0x320] sm:$0xff]
        %v633 = vld [vmem:[%s445 + $0x328] sm:$0xff]
        %v634 = vld [vmem:[%s445 + $0x330] sm:$0xff]
        %v635 = vld [vmem:[%s445 + $0x338] sm:$0xff]
        %v636 = vld [vmem:[%s445 + $0x340] sm:$0xff]
        %v637 = vld [vmem:[%s445 + $0x348] sm:$0xff]
        %v638 = vld [vmem:[%s445 + $0x350] sm:$0xff]
        %v639 = vld [vmem:[%s445 + $0x358] sm:$0xff]
        %v640 = vld [vmem:[%s445 + $0x360] sm:$0xff]
        %v641 = vld [vmem:[%s445 + $0x368] sm:$0xff]
        %v642 = vld [vmem:[%s445 + $0x370] sm:$0xff]
        %v643 = vld [vmem:[%s445 + $0x378] sm:$0xff]
        %v644 = vld [vmem:[%s445 + $0x380] sm:$0xff]
        %v645 = vld [vmem:[%s445 + $0x388] sm:$0xff]
        %v646 = vld [vmem:[%s445 + $0x390] sm:$0xff]
        %v647 = vld [vmem:[%s445 + $0x398] sm:$0xff]
        %v648 = vld [vmem:[%s445 + $0x3a0] sm:$0xff]
        %v649 = vld [vmem:[%s445 + $0x3a8] sm:$0xff]
        %v650 = vld [vmem:[%s445 + $0x3b0] sm:$0xff]
        %v651 = vld [vmem:[%s445 + $0x3b8] sm:$0xff]
        %v652 = vld [vmem:[%s445 + $0x3c0] sm:$0xff]
        %v653 = vld [vmem:[%s445 + $0x3c8] sm:$0xff]
        %v654 = vld [vmem:[%s445 + $0x3d0] sm:$0xff]
        %v655 = vld [vmem:[%s445 + $0x3d8] sm:$0xff]
        %v656 = vld [vmem:[%s445 + $0x3e0] sm:$0xff]
        %v657 = vld [vmem:[%s445 + $0x3e8] sm:$0xff]
        %v658 = vld [vmem:[%s445 + $0x3f0] sm:$0xff]
        %v659 = vld [vmem:[%s445 + $0x3f8] sm:$0xff]
        %s660 = smul.u32 %s22, 16
        %s661 = scalar_lea.vmem %s2, %s660
        %v662 = vld [vmem:[%s661] sm:$0xff]
        %v663 = vld [vmem:[%s661 + $0x8] sm:$0xff]
        %v666 = vperm.slane %v662, 0
        %v667 = vperm.slane %v662, 1
        %v668 = vperm.slane %v662, 2
        %v669 = vperm.slane %v662, 3
        %v670 = vperm.slane %v662, 4
        %v671 = vperm.slane %v662, 5
        %v672 = vperm.slane %v662, 6
        %v673 = vperm.slane %v662, 7
        %v674 = vperm.slane %v663, 0
        %v675 = vperm.slane %v663, 1
        %v676 = vperm.slane %v663, 2
        %v677 = vperm.slane %v663, 3
        %v678 = vperm.slane %v663, 4
        %v679 = vperm.slane %v663, 5
        %v680 = vperm.slane %v663, 6
        %v681 = vperm.slane %v663, 7
        %v714 = vunpack.c.l.b16 %v516
        %v715 = vunpack.c.l.b16 %v517
        %v716 = vunpack.c.l.b16 %v518
        %v717 = vunpack.c.l.b16 %v519
        %v718 = vunpack.c.l.b16 %v520
        %v719 = vunpack.c.l.b16 %v521
        %v720 = vunpack.c.l.b16 %v522
        %v721 = vunpack.c.l.b16 %v523
        %v722 = vunpack.c.l.b16 %v524
        %v723 = vunpack.c.l.b16 %v525
        %v724 = vunpack.c.l.b16 %v526
        %v725 = vunpack.c.l.b16 %v527
        %v726 = vunpack.c.l.b16 %v528
        %v727 = vunpack.c.l.b16 %v529
        %v728 = vunpack.c.l.b16 %v530
        %v729 = vunpack.c.l.b16 %v531
        %v730 = vpack.c.b16 %v715, %v714
        %v731 = vpack.c.b16 %v717, %v716
        %v732 = vpack.c.b16 %v719, %v718
        %v733 = vpack.c.b16 %v721, %v720
        %v734 = vpack.c.b16 %v723, %v722
        %v735 = vpack.c.b16 %v725, %v724
        %v736 = vpack.c.b16 %v727, %v726
        %v737 = vpack.c.b16 %v729, %v728
        %v874 = vunpack.c.l.b16 %v532
        %v875 = vunpack.c.h.b16 %v532
        %v876 = vunpack.c.l.b16 %v533
        %v877 = vunpack.c.h.b16 %v533
        %v878 = vunpack.c.l.b16 %v534
        %v879 = vunpack.c.h.b16 %v534
        %v880 = vunpack.c.l.b16 %v535
        %v881 = vunpack.c.h.b16 %v535
        %v882 = vunpack.c.l.b16 %v536
        %v883 = vunpack.c.h.b16 %v536
        %v884 = vunpack.c.l.b16 %v537
        %v885 = vunpack.c.h.b16 %v537
        %v886 = vunpack.c.l.b16 %v538
        %v887 = vunpack.c.h.b16 %v538
        %v888 = vunpack.c.l.b16 %v539
        %v889 = vunpack.c.h.b16 %v539
        %v890 = vunpack.c.l.b16 %v540
        %v891 = vunpack.c.h.b16 %v540
        %v892 = vunpack.c.l.b16 %v541
        %v893 = vunpack.c.h.b16 %v541
        %v894 = vunpack.c.l.b16 %v542
        %v895 = vunpack.c.h.b16 %v542
        %v896 = vunpack.c.l.b16 %v543
        %v897 = vunpack.c.h.b16 %v543
        %v898 = vunpack.c.l.b16 %v544
        %v899 = vunpack.c.h.b16 %v544
        %v900 = vunpack.c.l.b16 %v545
        %v901 = vunpack.c.h.b16 %v545
        %v902 = vunpack.c.l.b16 %v546
        %v903 = vunpack.c.h.b16 %v546
        %v904 = vunpack.c.l.b16 %v547
        %v905 = vunpack.c.h.b16 %v547
        %v906 = vunpack.c.l.b16 %v548
        %v907 = vunpack.c.h.b16 %v548
        %v908 = vunpack.c.l.b16 %v549
        %v909 = vunpack.c.h.b16 %v549
        %v910 = vunpack.c.l.b16 %v550
        %v911 = vunpack.c.h.b16 %v550
        %v912 = vunpack.c.l.b16 %v551
        %v913 = vunpack.c.h.b16 %v551
        %v914 = vunpack.c.l.b16 %v552
        %v915 = vunpack.c.h.b16 %v552
        %v916 = vunpack.c.l.b16 %v553
        %v917 = vunpack.c.h.b16 %v553
        %v918 = vunpack.c.l.b16 %v554
        %v919 = vunpack.c.h.b16 %v554
        %v920 = vunpack.c.l.b16 %v555
        %v921 = vunpack.c.h.b16 %v555
        %v922 = vunpack.c.l.b16 %v556
        %v923 = vunpack.c.h.b16 %v556
        %v924 = vunpack.c.l.b16 %v557
        %v925 = vunpack.c.h.b16 %v557
        %v926 = vunpack.c.l.b16 %v558
        %v927 = vunpack.c.h.b16 %v558
        %v928 = vunpack.c.l.b16 %v559
        %v929 = vunpack.c.h.b16 %v559
        %v930 = vunpack.c.l.b16 %v560
        %v931 = vunpack.c.h.b16 %v560
        %v932 = vunpack.c.l.b16 %v561
        %v933 = vunpack.c.h.b16 %v561
        %v934 = vunpack.c.l.b16 %v562
        %v935 = vunpack.c.h.b16 %v562
        %v936 = vunpack.c.l.b16 %v563
        %v937 = vunpack.c.h.b16 %v563
        %v938 = vunpack.c.l.b16 %v564
        %v939 = vunpack.c.h.b16 %v564
        %v940 = vunpack.c.l.b16 %v565
        %v941 = vunpack.c.h.b16 %v565
        %v942 = vunpack.c.l.b16 %v566
        %v943 = vunpack.c.h.b16 %v566
        %v944 = vunpack.c.l.b16 %v567
        %v945 = vunpack.c.h.b16 %v567
        %v946 = vunpack.c.l.b16 %v568
        %v947 = vunpack.c.h.b16 %v568
        %v948 = vunpack.c.l.b16 %v569
        %v949 = vunpack.c.h.b16 %v569
        %v950 = vunpack.c.l.b16 %v570
        %v951 = vunpack.c.h.b16 %v570
        %v952 = vunpack.c.l.b16 %v571
        %v953 = vunpack.c.h.b16 %v571
        %v954 = vunpack.c.l.b16 %v572
        %v955 = vunpack.c.h.b16 %v572
        %v956 = vunpack.c.l.b16 %v573
        %v957 = vunpack.c.h.b16 %v573
        %v958 = vunpack.c.l.b16 %v574
        %v959 = vunpack.c.h.b16 %v574
        %v960 = vunpack.c.l.b16 %v575
        %v961 = vunpack.c.h.b16 %v575
        %v962 = vunpack.c.l.b16 %v576
        %v963 = vunpack.c.h.b16 %v576
        %v964 = vunpack.c.l.b16 %v577
        %v965 = vunpack.c.h.b16 %v577
        %v966 = vunpack.c.l.b16 %v578
        %v967 = vunpack.c.h.b16 %v578
        %v968 = vunpack.c.l.b16 %v579
        %v969 = vunpack.c.h.b16 %v579
        %v970 = vunpack.c.l.b16 %v580
        %v971 = vunpack.c.h.b16 %v580
        %v972 = vunpack.c.l.b16 %v581
        %v973 = vunpack.c.h.b16 %v581
        %v974 = vunpack.c.l.b16 %v582
        %v975 = vunpack.c.h.b16 %v582
        %v976 = vunpack.c.l.b16 %v583
        %v977 = vunpack.c.h.b16 %v583
        %v978 = vunpack.c.l.b16 %v584
        %v979 = vunpack.c.h.b16 %v584
        %v980 = vunpack.c.l.b16 %v585
        %v981 = vunpack.c.h.b16 %v585
        %v982 = vunpack.c.l.b16 %v586
        %v983 = vunpack.c.h.b16 %v586
        %v984 = vunpack.c.l.b16 %v587
        %v985 = vunpack.c.h.b16 %v587
        %v986 = vunpack.c.l.b16 %v588
        %v987 = vunpack.c.h.b16 %v588
        %v988 = vunpack.c.l.b16 %v589
        %v989 = vunpack.c.h.b16 %v589
        %v990 = vunpack.c.l.b16 %v590
        %v991 = vunpack.c.h.b16 %v590
        %v992 = vunpack.c.l.b16 %v591
        %v993 = vunpack.c.h.b16 %v591
        %v994 = vunpack.c.l.b16 %v592
        %v995 = vunpack.c.h.b16 %v592
        %v996 = vunpack.c.l.b16 %v593
        %v997 = vunpack.c.h.b16 %v593
        %v998 = vunpack.c.l.b16 %v594
        %v999 = vunpack.c.h.b16 %v594
        %v1000 = vunpack.c.l.b16 %v595
        %v1001 = vunpack.c.h.b16 %v595
        %v1002 = vunpack.c.l.b16 %v596
        %v1003 = vunpack.c.h.b16 %v596
        %v1004 = vunpack.c.l.b16 %v597
        %v1005 = vunpack.c.h.b16 %v597
        %v1006 = vunpack.c.l.b16 %v598
        %v1007 = vunpack.c.h.b16 %v598
        %v1008 = vunpack.c.l.b16 %v599
        %v1009 = vunpack.c.h.b16 %v599
        %v1010 = vunpack.c.l.b16 %v600
        %v1011 = vunpack.c.h.b16 %v600
        %v1012 = vunpack.c.l.b16 %v601
        %v1013 = vunpack.c.h.b16 %v601
        %v1014 = vunpack.c.l.b16 %v602
        %v1015 = vunpack.c.h.b16 %v602
        %v1016 = vunpack.c.l.b16 %v603
        %v1017 = vunpack.c.h.b16 %v603
        %v1018 = vunpack.c.l.b16 %v604
        %v1019 = vunpack.c.h.b16 %v604
        %v1020 = vunpack.c.l.b16 %v605
        %v1021 = vunpack.c.h.b16 %v605
        %v1022 = vunpack.c.l.b16 %v606
        %v1023 = vunpack.c.h.b16 %v606
        %v1024 = vunpack.c.l.b16 %v607
        %v1025 = vunpack.c.h.b16 %v607
        %v1026 = vunpack.c.l.b16 %v608
        %v1027 = vunpack.c.h.b16 %v608
        %v1028 = vunpack.c.l.b16 %v609
        %v1029 = vunpack.c.h.b16 %v609
        %v1030 = vunpack.c.l.b16 %v610
        %v1031 = vunpack.c.h.b16 %v610
        %v1032 = vunpack.c.l.b16 %v611
        %v1033 = vunpack.c.h.b16 %v611
        %v1034 = vunpack.c.l.b16 %v612
        %v1035 = vunpack.c.h.b16 %v612
        %v1036 = vunpack.c.l.b16 %v613
        %v1037 = vunpack.c.h.b16 %v613
        %v1038 = vunpack.c.l.b16 %v614
        %v1039 = vunpack.c.h.b16 %v614
        %v1040 = vunpack.c.l.b16 %v615
        %v1041 = vunpack.c.h.b16 %v615
        %v1042 = vunpack.c.l.b16 %v616
        %v1043 = vunpack.c.h.b16 %v616
        %v1044 = vunpack.c.l.b16 %v617
        %v1045 = vunpack.c.h.b16 %v617
        %v1046 = vunpack.c.l.b16 %v618
        %v1047 = vunpack.c.h.b16 %v618
        %v1048 = vunpack.c.l.b16 %v619
        %v1049 = vunpack.c.h.b16 %v619
        %v1050 = vunpack.c.l.b16 %v620
        %v1051 = vunpack.c.h.b16 %v620
        %v1052 = vunpack.c.l.b16 %v621
        %v1053 = vunpack.c.h.b16 %v621
        %v1054 = vunpack.c.l.b16 %v622
        %v1055 = vunpack.c.h.b16 %v622
        %v1056 = vunpack.c.l.b16 %v623
        %v1057 = vunpack.c.h.b16 %v623
        %v1058 = vunpack.c.l.b16 %v624
        %v1059 = vunpack.c.h.b16 %v624
        %v1060 = vunpack.c.l.b16 %v625
        %v1061 = vunpack.c.h.b16 %v625
        %v1062 = vunpack.c.l.b16 %v626
        %v1063 = vunpack.c.h.b16 %v626
        %v1064 = vunpack.c.l.b16 %v627
        %v1065 = vunpack.c.h.b16 %v627
        %v1066 = vunpack.c.l.b16 %v628
        %v1067 = vunpack.c.h.b16 %v628
        %v1068 = vunpack.c.l.b16 %v629
        %v1069 = vunpack.c.h.b16 %v629
        %v1070 = vunpack.c.l.b16 %v630
        %v1071 = vunpack.c.h.b16 %v630
        %v1072 = vunpack.c.l.b16 %v631
        %v1073 = vunpack.c.h.b16 %v631
        %v1074 = vunpack.c.l.b16 %v632
        %v1075 = vunpack.c.h.b16 %v632
        %v1076 = vunpack.c.l.b16 %v633
        %v1077 = vunpack.c.h.b16 %v633
        %v1078 = vunpack.c.l.b16 %v634
        %v1079 = vunpack.c.h.b16 %v634
        %v1080 = vunpack.c.l.b16 %v635
        %v1081 = vunpack.c.h.b16 %v635
        %v1082 = vunpack.c.l.b16 %v636
        %v1083 = vunpack.c.h.b16 %v636
        %v1084 = vunpack.c.l.b16 %v637
        %v1085 = vunpack.c.h.b16 %v637
        %v1086 = vunpack.c.l.b16 %v638
        %v1087 = vunpack.c.h.b16 %v638
        %v1088 = vunpack.c.l.b16 %v639
        %v1089 = vunpack.c.h.b16 %v639
        %v1090 = vunpack.c.l.b16 %v640
        %v1091 = vunpack.c.h.b16 %v640
        %v1092 = vunpack.c.l.b16 %v641
        %v1093 = vunpack.c.h.b16 %v641
        %v1094 = vunpack.c.l.b16 %v642
        %v1095 = vunpack.c.h.b16 %v642
        %v1096 = vunpack.c.l.b16 %v643
        %v1097 = vunpack.c.h.b16 %v643
        %v1098 = vunpack.c.l.b16 %v644
        %v1099 = vunpack.c.h.b16 %v644
        %v1100 = vunpack.c.l.b16 %v645
        %v1101 = vunpack.c.h.b16 %v645
        %v1102 = vunpack.c.l.b16 %v646
        %v1103 = vunpack.c.h.b16 %v646
        %v1104 = vunpack.c.l.b16 %v647
        %v1105 = vunpack.c.h.b16 %v647
        %v1106 = vunpack.c.l.b16 %v648
        %v1107 = vunpack.c.h.b16 %v648
        %v1108 = vunpack.c.l.b16 %v649
        %v1109 = vunpack.c.h.b16 %v649
        %v1110 = vunpack.c.l.b16 %v650
        %v1111 = vunpack.c.h.b16 %v650
        %v1112 = vunpack.c.l.b16 %v651
        %v1113 = vunpack.c.h.b16 %v651
        %v1114 = vunpack.c.l.b16 %v652
        %v1115 = vunpack.c.h.b16 %v652
        %v1116 = vunpack.c.l.b16 %v653
        %v1117 = vunpack.c.h.b16 %v653
        %v1118 = vunpack.c.l.b16 %v654
        %v1119 = vunpack.c.h.b16 %v654
        %v1120 = vunpack.c.l.b16 %v655
        %v1121 = vunpack.c.h.b16 %v655
        %v1122 = vunpack.c.l.b16 %v656
        %v1123 = vunpack.c.h.b16 %v656
        %v1124 = vunpack.c.l.b16 %v657
        %v1125 = vunpack.c.h.b16 %v657
        %v1126 = vunpack.c.l.b16 %v658
        %v1127 = vunpack.c.h.b16 %v658
        %v1128 = vunpack.c.l.b16 %v659
        %v1129 = vunpack.c.h.b16 %v659
        %v1130 = vpack.c.b16 %v890, %v874
        %v1131 = vpack.c.b16 %v891, %v875
        %v1132 = vpack.c.b16 %v892, %v876
        %v1133 = vpack.c.b16 %v893, %v877
        %v1134 = vpack.c.b16 %v894, %v878
        %v1135 = vpack.c.b16 %v895, %v879
        %v1136 = vpack.c.b16 %v896, %v880
        %v1137 = vpack.c.b16 %v897, %v881
        %v1138 = vpack.c.b16 %v898, %v882
        %v1139 = vpack.c.b16 %v899, %v883
        %v1140 = vpack.c.b16 %v900, %v884
        %v1141 = vpack.c.b16 %v901, %v885
        %v1142 = vpack.c.b16 %v902, %v886
        %v1143 = vpack.c.b16 %v903, %v887
        %v1144 = vpack.c.b16 %v904, %v888
        %v1145 = vpack.c.b16 %v905, %v889
        %v1146 = vpack.c.b16 %v922, %v906
        %v1147 = vpack.c.b16 %v923, %v907
        %v1148 = vpack.c.b16 %v924, %v908
        %v1149 = vpack.c.b16 %v925, %v909
        %v1150 = vpack.c.b16 %v926, %v910
        %v1151 = vpack.c.b16 %v927, %v911
        %v1152 = vpack.c.b16 %v928, %v912
        %v1153 = vpack.c.b16 %v929, %v913
        %v1154 = vpack.c.b16 %v930, %v914
        %v1155 = vpack.c.b16 %v931, %v915
        %v1156 = vpack.c.b16 %v932, %v916
        %v1157 = vpack.c.b16 %v933, %v917
        %v1158 = vpack.c.b16 %v934, %v918
        %v1159 = vpack.c.b16 %v935, %v919
        %v1160 = vpack.c.b16 %v936, %v920
        %v1161 = vpack.c.b16 %v937, %v921
        %v1162 = vpack.c.b16 %v954, %v938
        %v1163 = vpack.c.b16 %v955, %v939
        %v1164 = vpack.c.b16 %v956, %v940
        %v1165 = vpack.c.b16 %v957, %v941
        %v1166 = vpack.c.b16 %v958, %v942
        %v1167 = vpack.c.b16 %v959, %v943
        %v1168 = vpack.c.b16 %v960, %v944
        %v1169 = vpack.c.b16 %v961, %v945
        %v1170 = vpack.c.b16 %v962, %v946
        %v1171 = vpack.c.b16 %v963, %v947
        %v1172 = vpack.c.b16 %v964, %v948
        %v1173 = vpack.c.b16 %v965, %v949
        %v1174 = vpack.c.b16 %v966, %v950
        %v1175 = vpack.c.b16 %v967, %v951
        %v1176 = vpack.c.b16 %v968, %v952
        %v1177 = vpack.c.b16 %v969, %v953
        %v1178 = vpack.c.b16 %v986, %v970
        %v1179 = vpack.c.b16 %v987, %v971
        %v1180 = vpack.c.b16 %v988, %v972
        %v1181 = vpack.c.b16 %v989, %v973
        %v1182 = vpack.c.b16 %v990, %v974
        %v1183 = vpack.c.b16 %v991, %v975
        %v1184 = vpack.c.b16 %v992, %v976
        %v1185 = vpack.c.b16 %v993, %v977
        %v1186 = vpack.c.b16 %v994, %v978
        %v1187 = vpack.c.b16 %v995, %v979
        %v1188 = vpack.c.b16 %v996, %v980
        %v1189 = vpack.c.b16 %v997, %v981
        %v1190 = vpack.c.b16 %v998, %v982
        %v1191 = vpack.c.b16 %v999, %v983
        %v1192 = vpack.c.b16 %v1000, %v984
        %v1193 = vpack.c.b16 %v1001, %v985
        %v1194 = vpack.c.b16 %v1018, %v1002
        %v1195 = vpack.c.b16 %v1019, %v1003
        %v1196 = vpack.c.b16 %v1020, %v1004
        %v1197 = vpack.c.b16 %v1021, %v1005
        %v1198 = vpack.c.b16 %v1022, %v1006
        %v1199 = vpack.c.b16 %v1023, %v1007
        %v1200 = vpack.c.b16 %v1024, %v1008
        %v1201 = vpack.c.b16 %v1025, %v1009
        %v1202 = vpack.c.b16 %v1026, %v1010
        %v1203 = vpack.c.b16 %v1027, %v1011
        %v1204 = vpack.c.b16 %v1028, %v1012
        %v1205 = vpack.c.b16 %v1029, %v1013
        %v1206 = vpack.c.b16 %v1030, %v1014
        %v1207 = vpack.c.b16 %v1031, %v1015
        %v1208 = vpack.c.b16 %v1032, %v1016
        %v1209 = vpack.c.b16 %v1033, %v1017
        %v1210 = vpack.c.b16 %v1050, %v1034
        %v1211 = vpack.c.b16 %v1051, %v1035
        %v1212 = vpack.c.b16 %v1052, %v1036
        %v1213 = vpack.c.b16 %v1053, %v1037
        %v1214 = vpack.c.b16 %v1054, %v1038
        %v1215 = vpack.c.b16 %v1055, %v1039
        %v1216 = vpack.c.b16 %v1056, %v1040
        %v1217 = vpack.c.b16 %v1057, %v1041
        %v1218 = vpack.c.b16 %v1058, %v1042
        %v1219 = vpack.c.b16 %v1059, %v1043
        %v1220 = vpack.c.b16 %v1060, %v1044
        %v1221 = vpack.c.b16 %v1061, %v1045
        %v1222 = vpack.c.b16 %v1062, %v1046
        %v1223 = vpack.c.b16 %v1063, %v1047
        %v1224 = vpack.c.b16 %v1064, %v1048
        %v1225 = vpack.c.b16 %v1065, %v1049
        %v1226 = vpack.c.b16 %v1082, %v1066
        %v1227 = vpack.c.b16 %v1083, %v1067
        %v1228 = vpack.c.b16 %v1084, %v1068
        %v1229 = vpack.c.b16 %v1085, %v1069
        %v1230 = vpack.c.b16 %v1086, %v1070
        %v1231 = vpack.c.b16 %v1087, %v1071
        %v1232 = vpack.c.b16 %v1088, %v1072
        %v1233 = vpack.c.b16 %v1089, %v1073
        %v1234 = vpack.c.b16 %v1090, %v1074
        %v1235 = vpack.c.b16 %v1091, %v1075
        %v1236 = vpack.c.b16 %v1092, %v1076
        %v1237 = vpack.c.b16 %v1093, %v1077
        %v1238 = vpack.c.b16 %v1094, %v1078
        %v1239 = vpack.c.b16 %v1095, %v1079
        %v1240 = vpack.c.b16 %v1096, %v1080
        %v1241 = vpack.c.b16 %v1097, %v1081
        %v1242 = vpack.c.b16 %v1114, %v1098
        %v1243 = vpack.c.b16 %v1115, %v1099
        %v1244 = vpack.c.b16 %v1116, %v1100
        %v1245 = vpack.c.b16 %v1117, %v1101
        %v1246 = vpack.c.b16 %v1118, %v1102
        %v1247 = vpack.c.b16 %v1119, %v1103
        %v1248 = vpack.c.b16 %v1120, %v1104
        %v1249 = vpack.c.b16 %v1121, %v1105
        %v1250 = vpack.c.b16 %v1122, %v1106
        %v1251 = vpack.c.b16 %v1123, %v1107
        %v1252 = vpack.c.b16 %v1124, %v1108
        %v1253 = vpack.c.b16 %v1125, %v1109
        %v1254 = vpack.c.b16 %v1126, %v1110
        %v1255 = vpack.c.b16 %v1127, %v1111
        %v1256 = vpack.c.b16 %v1128, %v1112
        %v1257 = vpack.c.b16 %v1129, %v1113
        %1386 = vmatpush.bf16.msra.mxu0 %v1242
        %1387 = vmatpush.bf16.msra.mxu0 %v1226
        %1388 = vmatpush.bf16.msra.mxu0 %v1210
        %1389 = vmatpush.bf16.msra.mxu0 %v1194
        %1390 = vmatpush.bf16.msra.mxu0 %v1178
        %1391 = vmatpush.bf16.msra.mxu0 %v1162
        %1392 = vmatpush.bf16.msra.mxu0 %v1146
        %1393 = vmatpush.bf16.msra.mxu0 %v1130
        %1394 = vmatmul.bf16.gmra.mxu0 %v730
        %v1395 = vpop.f32.mrf.mxu0
        %v1396 = vadd.f32 %v666, %v1395
        %v1397 = vpop.f32.mrf.mxu0
        %v1398 = vadd.f32 %v666, %v1397
        %1399 = vmatmul.bf16.gmra.mxu0 %v731
        %v1400 = vpop.f32.mrf.mxu0
        %v1401 = vadd.f32 %v666, %v1400
        %v1402 = vpop.f32.mrf.mxu0
        %v1403 = vadd.f32 %v666, %v1402
        %1404 = vmatmul.bf16.gmra.mxu0 %v732
        %v1405 = vpop.f32.mrf.mxu0
        %v1406 = vadd.f32 %v666, %v1405
        %v1407 = vpop.f32.mrf.mxu0
        %v1408 = vadd.f32 %v666, %v1407
        %1409 = vmatmul.bf16.gmra.mxu0 %v733
        %v1410 = vpop.f32.mrf.mxu0
        %v1411 = vadd.f32 %v666, %v1410
        %v1412 = vpop.f32.mrf.mxu0
        %v1413 = vadd.f32 %v666, %v1412
        %1414 = vmatmul.bf16.gmra.mxu0 %v734
        %v1415 = vpop.f32.mrf.mxu0
        %v1416 = vadd.f32 %v666, %v1415
        %v1417 = vpop.f32.mrf.mxu0
        %v1418 = vadd.f32 %v666, %v1417
        %1419 = vmatmul.bf16.gmra.mxu0 %v735
        %v1420 = vpop.f32.mrf.mxu0
        %v1421 = vadd.f32 %v666, %v1420
        %v1422 = vpop.f32.mrf.mxu0
        %v1423 = vadd.f32 %v666, %v1422
        %1424 = vmatmul.bf16.gmra.mxu0 %v736
        %v1425 = vpop.f32.mrf.mxu0
        %v1426 = vadd.f32 %v666, %v1425
        %v1427 = vpop.f32.mrf.mxu0
        %v1428 = vadd.f32 %v666, %v1427
        %1429 = vmatmul.bf16.gmra.mxu0 %v737
        %v1430 = vpop.f32.mrf.mxu0
        %v1431 = vadd.f32 %v666, %v1430
        %v1432 = vpop.f32.mrf.mxu0
        %v1433 = vadd.f32 %v666, %v1432
        %1434 = vdwg.mxu0
        %1435 = vmatpush.bf16.msra.mxu0 %v1243
        %1436 = vmatpush.bf16.msra.mxu0 %v1227
        %1437 = vmatpush.bf16.msra.mxu0 %v1211
        %1438 = vmatpush.bf16.msra.mxu0 %v1195
        %1439 = vmatpush.bf16.msra.mxu0 %v1179
        %1440 = vmatpush.bf16.msra.mxu0 %v1163
        %1441 = vmatpush.bf16.msra.mxu0 %v1147
        %1442 = vmatpush.bf16.msra.mxu0 %v1131
        %1443 = vmatmul.bf16.gmra.mxu0 %v730
        %v1444 = vpop.f32.mrf.mxu0
        %v1445 = vadd.f32 %v667, %v1444
        %v1446 = vpop.f32.mrf.mxu0
        %v1447 = vadd.f32 %v667, %v1446
        %1448 = vmatmul.bf16.gmra.mxu0 %v731
        %v1449 = vpop.f32.mrf.mxu0
        %v1450 = vadd.f32 %v667, %v1449
        %v1451 = vpop.f32.mrf.mxu0
        %v1452 = vadd.f32 %v667, %v1451
        %1453 = vmatmul.bf16.gmra.mxu0 %v732
        %v1454 = vpop.f32.mrf.mxu0
        %v1455 = vadd.f32 %v667, %v1454
        %v1456 = vpop.f32.mrf.mxu0
        %v1457 = vadd.f32 %v667, %v1456
        %1458 = vmatmul.bf16.gmra.mxu0 %v733
        %v1459 = vpop.f32.mrf.mxu0
        %v1460 = vadd.f32 %v667, %v1459
        %v1461 = vpop.f32.mrf.mxu0
        %v1462 = vadd.f32 %v667, %v1461
        %1463 = vmatmul.bf16.gmra.mxu0 %v734
        %v1464 = vpop.f32.mrf.mxu0
        %v1465 = vadd.f32 %v667, %v1464
        %v1466 = vpop.f32.mrf.mxu0
        %v1467 = vadd.f32 %v667, %v1466
        %1468 = vmatmul.bf16.gmra.mxu0 %v735
        %v1469 = vpop.f32.mrf.mxu0
        %v1470 = vadd.f32 %v667, %v1469
        %v1471 = vpop.f32.mrf.mxu0
        %v1472 = vadd.f32 %v667, %v1471
        %1473 = vmatmul.bf16.gmra.mxu0 %v736
        %v1474 = vpop.f32.mrf.mxu0
        %v1475 = vadd.f32 %v667, %v1474
        %v1476 = vpop.f32.mrf.mxu0
        %v1477 = vadd.f32 %v667, %v1476
        %1478 = vmatmul.bf16.gmra.mxu0 %v737
        %v1479 = vpop.f32.mrf.mxu0
        %v1480 = vadd.f32 %v667, %v1479
        %v1481 = vpop.f32.mrf.mxu0
        %v1482 = vadd.f32 %v667, %v1481
        %1483 = vdwg.mxu0
        %1484 = vmatpush.bf16.msra.mxu0 %v1244
        %1485 = vmatpush.bf16.msra.mxu0 %v1228
        %1486 = vmatpush.bf16.msra.mxu0 %v1212
        %1487 = vmatpush.bf16.msra.mxu0 %v1196
        %1488 = vmatpush.bf16.msra.mxu0 %v1180
        %1489 = vmatpush.bf16.msra.mxu0 %v1164
        %1490 = vmatpush.bf16.msra.mxu0 %v1148
        %1491 = vmatpush.bf16.msra.mxu0 %v1132
        %1492 = vmatmul.bf16.gmra.mxu0 %v730
        %v1493 = vpop.f32.mrf.mxu0
        %v1494 = vadd.f32 %v668, %v1493
        %v1495 = vpop.f32.mrf.mxu0
        %v1496 = vadd.f32 %v668, %v1495
        %1497 = vmatmul.bf16.gmra.mxu0 %v731
        %v1498 = vpop.f32.mrf.mxu0
        %v1499 = vadd.f32 %v668, %v1498
        %v1500 = vpop.f32.mrf.mxu0
        %v1501 = vadd.f32 %v668, %v1500
        %1502 = vmatmul.bf16.gmra.mxu0 %v732
        %v1503 = vpop.f32.mrf.mxu0
        %v1504 = vadd.f32 %v668, %v1503
        %v1505 = vpop.f32.mrf.mxu0
        %v1506 = vadd.f32 %v668, %v1505
        %1507 = vmatmul.bf16.gmra.mxu0 %v733
        %v1508 = vpop.f32.mrf.mxu0
        %v1509 = vadd.f32 %v668, %v1508
        %v1510 = vpop.f32.mrf.mxu0
        %v1511 = vadd.f32 %v668, %v1510
        %1512 = vmatmul.bf16.gmra.mxu0 %v734
        %v1513 = vpop.f32.mrf.mxu0
        %v1514 = vadd.f32 %v668, %v1513
        %v1515 = vpop.f32.mrf.mxu0
        %v1516 = vadd.f32 %v668, %v1515
        %1517 = vmatmul.bf16.gmra.mxu0 %v735
        %v1518 = vpop.f32.mrf.mxu0
        %v1519 = vadd.f32 %v668, %v1518
        %v1520 = vpop.f32.mrf.mxu0
        %v1521 = vadd.f32 %v668, %v1520
        %1522 = vmatmul.bf16.gmra.mxu0 %v736
        %v1523 = vpop.f32.mrf.mxu0
        %v1524 = vadd.f32 %v668, %v1523
        %v1525 = vpop.f32.mrf.mxu0
        %v1526 = vadd.f32 %v668, %v1525
        %1527 = vmatmul.bf16.gmra.mxu0 %v737
        %v1528 = vpop.f32.mrf.mxu0
        %v1529 = vadd.f32 %v668, %v1528
        %v1530 = vpop.f32.mrf.mxu0
        %v1531 = vadd.f32 %v668, %v1530
        %1532 = vdwg.mxu0
        %1533 = vmatpush.bf16.msra.mxu0 %v1245
        %1534 = vmatpush.bf16.msra.mxu0 %v1229
        %1535 = vmatpush.bf16.msra.mxu0 %v1213
        %1536 = vmatpush.bf16.msra.mxu0 %v1197
        %1537 = vmatpush.bf16.msra.mxu0 %v1181
        %1538 = vmatpush.bf16.msra.mxu0 %v1165
        %1539 = vmatpush.bf16.msra.mxu0 %v1149
        %1540 = vmatpush.bf16.msra.mxu0 %v1133
        %1541 = vmatmul.bf16.gmra.mxu0 %v730
        %v1542 = vpop.f32.mrf.mxu0
        %v1543 = vadd.f32 %v669, %v1542
        %v1544 = vpop.f32.mrf.mxu0
        %v1545 = vadd.f32 %v669, %v1544
        %1546 = vmatmul.bf16.gmra.mxu0 %v731
        %v1547 = vpop.f32.mrf.mxu0
        %v1548 = vadd.f32 %v669, %v1547
        %v1549 = vpop.f32.mrf.mxu0
        %v1550 = vadd.f32 %v669, %v1549
        %1551 = vmatmul.bf16.gmra.mxu0 %v732
        %v1552 = vpop.f32.mrf.mxu0
        %v1553 = vadd.f32 %v669, %v1552
        %v1554 = vpop.f32.mrf.mxu0
        %v1555 = vadd.f32 %v669, %v1554
        %1556 = vmatmul.bf16.gmra.mxu0 %v733
        %v1557 = vpop.f32.mrf.mxu0
        %v1558 = vadd.f32 %v669, %v1557
        %v1559 = vpop.f32.mrf.mxu0
        %v1560 = vadd.f32 %v669, %v1559
        %1561 = vmatmul.bf16.gmra.mxu0 %v734
        %v1562 = vpop.f32.mrf.mxu0
        %v1563 = vadd.f32 %v669, %v1562
        %v1564 = vpop.f32.mrf.mxu0
        %v1565 = vadd.f32 %v669, %v1564
        %1566 = vmatmul.bf16.gmra.mxu0 %v735
        %v1567 = vpop.f32.mrf.mxu0
        %v1568 = vadd.f32 %v669, %v1567
        %v1569 = vpop.f32.mrf.mxu0
        %v1570 = vadd.f32 %v669, %v1569
        %1571 = vmatmul.bf16.gmra.mxu0 %v736
        %v1572 = vpop.f32.mrf.mxu0
        %v1573 = vadd.f32 %v669, %v1572
        %v1574 = vpop.f32.mrf.mxu0
        %v1575 = vadd.f32 %v669, %v1574
        %1576 = vmatmul.bf16.gmra.mxu0 %v737
        %v1577 = vpop.f32.mrf.mxu0
        %v1578 = vadd.f32 %v669, %v1577
        %v1579 = vpop.f32.mrf.mxu0
        %v1580 = vadd.f32 %v669, %v1579
        %1581 = vdwg.mxu0
        %1582 = vmatpush.bf16.msra.mxu0 %v1246
        %1583 = vmatpush.bf16.msra.mxu0 %v1230
        %1584 = vmatpush.bf16.msra.mxu0 %v1214
        %1585 = vmatpush.bf16.msra.mxu0 %v1198
        %1586 = vmatpush.bf16.msra.mxu0 %v1182
        %1587 = vmatpush.bf16.msra.mxu0 %v1166
        %1588 = vmatpush.bf16.msra.mxu0 %v1150
        %1589 = vmatpush.bf16.msra.mxu0 %v1134
        %1590 = vmatmul.bf16.gmra.mxu0 %v730
        %v1591 = vpop.f32.mrf.mxu0
        %v1592 = vadd.f32 %v670, %v1591
        %v1593 = vpop.f32.mrf.mxu0
        %v1594 = vadd.f32 %v670, %v1593
        %1595 = vmatmul.bf16.gmra.mxu0 %v731
        %v1596 = vpop.f32.mrf.mxu0
        %v1597 = vadd.f32 %v670, %v1596
        %v1598 = vpop.f32.mrf.mxu0
        %v1599 = vadd.f32 %v670, %v1598
        %1600 = vmatmul.bf16.gmra.mxu0 %v732
        %v1601 = vpop.f32.mrf.mxu0
        %v1602 = vadd.f32 %v670, %v1601
        %v1603 = vpop.f32.mrf.mxu0
        %v1604 = vadd.f32 %v670, %v1603
        %1605 = vmatmul.bf16.gmra.mxu0 %v733
        %v1606 = vpop.f32.mrf.mxu0
        %v1607 = vadd.f32 %v670, %v1606
        %v1608 = vpop.f32.mrf.mxu0
        %v1609 = vadd.f32 %v670, %v1608
        %1610 = vmatmul.bf16.gmra.mxu0 %v734
        %v1611 = vpop.f32.mrf.mxu0
        %v1612 = vadd.f32 %v670, %v1611
        %v1613 = vpop.f32.mrf.mxu0
        %v1614 = vadd.f32 %v670, %v1613
        %1615 = vmatmul.bf16.gmra.mxu0 %v735
        %v1616 = vpop.f32.mrf.mxu0
        %v1617 = vadd.f32 %v670, %v1616
        %v1618 = vpop.f32.mrf.mxu0
        %v1619 = vadd.f32 %v670, %v1618
        %1620 = vmatmul.bf16.gmra.mxu0 %v736
        %v1621 = vpop.f32.mrf.mxu0
        %v1622 = vadd.f32 %v670, %v1621
        %v1623 = vpop.f32.mrf.mxu0
        %v1624 = vadd.f32 %v670, %v1623
        %1625 = vmatmul.bf16.gmra.mxu0 %v737
        %v1626 = vpop.f32.mrf.mxu0
        %v1627 = vadd.f32 %v670, %v1626
        %v1628 = vpop.f32.mrf.mxu0
        %v1629 = vadd.f32 %v670, %v1628
        %1630 = vdwg.mxu0
        %1631 = vmatpush.bf16.msra.mxu0 %v1247
        %1632 = vmatpush.bf16.msra.mxu0 %v1231
        %1633 = vmatpush.bf16.msra.mxu0 %v1215
        %1634 = vmatpush.bf16.msra.mxu0 %v1199
        %1635 = vmatpush.bf16.msra.mxu0 %v1183
        %1636 = vmatpush.bf16.msra.mxu0 %v1167
        %1637 = vmatpush.bf16.msra.mxu0 %v1151
        %1638 = vmatpush.bf16.msra.mxu0 %v1135
        %1639 = vmatmul.bf16.gmra.mxu0 %v730
        %v1640 = vpop.f32.mrf.mxu0
        %v1641 = vadd.f32 %v671, %v1640
        %v1642 = vpop.f32.mrf.mxu0
        %v1643 = vadd.f32 %v671, %v1642
        %1644 = vmatmul.bf16.gmra.mxu0 %v731
        %v1645 = vpop.f32.mrf.mxu0
        %v1646 = vadd.f32 %v671, %v1645
        %v1647 = vpop.f32.mrf.mxu0
        %v1648 = vadd.f32 %v671, %v1647
        %1649 = vmatmul.bf16.gmra.mxu0 %v732
        %v1650 = vpop.f32.mrf.mxu0
        %v1651 = vadd.f32 %v671, %v1650
        %v1652 = vpop.f32.mrf.mxu0
        %v1653 = vadd.f32 %v671, %v1652
        %1654 = vmatmul.bf16.gmra.mxu0 %v733
        %v1655 = vpop.f32.mrf.mxu0
        %v1656 = vadd.f32 %v671, %v1655
        %v1657 = vpop.f32.mrf.mxu0
        %v1658 = vadd.f32 %v671, %v1657
        %1659 = vmatmul.bf16.gmra.mxu0 %v734
        %v1660 = vpop.f32.mrf.mxu0
        %v1661 = vadd.f32 %v671, %v1660
        %v1662 = vpop.f32.mrf.mxu0
        %v1663 = vadd.f32 %v671, %v1662
        %1664 = vmatmul.bf16.gmra.mxu0 %v735
        %v1665 = vpop.f32.mrf.mxu0
        %v1666 = vadd.f32 %v671, %v1665
        %v1667 = vpop.f32.mrf.mxu0
        %v1668 = vadd.f32 %v671, %v1667
        %1669 = vmatmul.bf16.gmra.mxu0 %v736
        %v1670 = vpop.f32.mrf.mxu0
        %v1671 = vadd.f32 %v671, %v1670
        %v1672 = vpop.f32.mrf.mxu0
        %v1673 = vadd.f32 %v671, %v1672
        %1674 = vmatmul.bf16.gmra.mxu0 %v737
        %v1675 = vpop.f32.mrf.mxu0
        %v1676 = vadd.f32 %v671, %v1675
        %v1677 = vpop.f32.mrf.mxu0
        %v1678 = vadd.f32 %v671, %v1677
        %1679 = vdwg.mxu0
        %1680 = vmatpush.bf16.msra.mxu0 %v1248
        %1681 = vmatpush.bf16.msra.mxu0 %v1232
        %1682 = vmatpush.bf16.msra.mxu0 %v1216
        %1683 = vmatpush.bf16.msra.mxu0 %v1200
        %1684 = vmatpush.bf16.msra.mxu0 %v1184
        %1685 = vmatpush.bf16.msra.mxu0 %v1168
        %1686 = vmatpush.bf16.msra.mxu0 %v1152
        %1687 = vmatpush.bf16.msra.mxu0 %v1136
        %1688 = vmatmul.bf16.gmra.mxu0 %v730
        %v1689 = vpop.f32.mrf.mxu0
        %v1690 = vadd.f32 %v672, %v1689
        %v1691 = vpop.f32.mrf.mxu0
        %v1692 = vadd.f32 %v672, %v1691
        %1693 = vmatmul.bf16.gmra.mxu0 %v731
        %v1694 = vpop.f32.mrf.mxu0
        %v1695 = vadd.f32 %v672, %v1694
        %v1696 = vpop.f32.mrf.mxu0
        %v1697 = vadd.f32 %v672, %v1696
        %1698 = vmatmul.bf16.gmra.mxu0 %v732
        %v1699 = vpop.f32.mrf.mxu0
        %v1700 = vadd.f32 %v672, %v1699
        %v1701 = vpop.f32.mrf.mxu0
        %v1702 = vadd.f32 %v672, %v1701
        %1703 = vmatmul.bf16.gmra.mxu0 %v733
        %v1704 = vpop.f32.mrf.mxu0
        %v1705 = vadd.f32 %v672, %v1704
        %v1706 = vpop.f32.mrf.mxu0
        %v1707 = vadd.f32 %v672, %v1706
        %1708 = vmatmul.bf16.gmra.mxu0 %v734
        %v1709 = vpop.f32.mrf.mxu0
        %v1710 = vadd.f32 %v672, %v1709
        %v1711 = vpop.f32.mrf.mxu0
        %v1712 = vadd.f32 %v672, %v1711
        %1713 = vmatmul.bf16.gmra.mxu0 %v735
        %v1714 = vpop.f32.mrf.mxu0
        %v1715 = vadd.f32 %v672, %v1714
        %v1716 = vpop.f32.mrf.mxu0
        %v1717 = vadd.f32 %v672, %v1716
        %1718 = vmatmul.bf16.gmra.mxu0 %v736
        %v1719 = vpop.f32.mrf.mxu0
        %v1720 = vadd.f32 %v672, %v1719
        %v1721 = vpop.f32.mrf.mxu0
        %v1722 = vadd.f32 %v672, %v1721
        %1723 = vmatmul.bf16.gmra.mxu0 %v737
        %v1724 = vpop.f32.mrf.mxu0
        %v1725 = vadd.f32 %v672, %v1724
        %v1726 = vpop.f32.mrf.mxu0
        %v1727 = vadd.f32 %v672, %v1726
        %1728 = vdwg.mxu0
        %1729 = vmatpush.bf16.msra.mxu0 %v1249
        %1730 = vmatpush.bf16.msra.mxu0 %v1233
        %1731 = vmatpush.bf16.msra.mxu0 %v1217
        %1732 = vmatpush.bf16.msra.mxu0 %v1201
        %1733 = vmatpush.bf16.msra.mxu0 %v1185
        %1734 = vmatpush.bf16.msra.mxu0 %v1169
        %1735 = vmatpush.bf16.msra.mxu0 %v1153
        %1736 = vmatpush.bf16.msra.mxu0 %v1137
        %1737 = vmatmul.bf16.gmra.mxu0 %v730
        %v1738 = vpop.f32.mrf.mxu0
        %v1739 = vadd.f32 %v673, %v1738
        %v1740 = vpop.f32.mrf.mxu0
        %v1741 = vadd.f32 %v673, %v1740
        %1742 = vmatmul.bf16.gmra.mxu0 %v731
        %v1743 = vpop.f32.mrf.mxu0
        %v1744 = vadd.f32 %v673, %v1743
        %v1745 = vpop.f32.mrf.mxu0
        %v1746 = vadd.f32 %v673, %v1745
        %1747 = vmatmul.bf16.gmra.mxu0 %v732
        %v1748 = vpop.f32.mrf.mxu0
        %v1749 = vadd.f32 %v673, %v1748
        %v1750 = vpop.f32.mrf.mxu0
        %v1751 = vadd.f32 %v673, %v1750
        %1752 = vmatmul.bf16.gmra.mxu0 %v733
        %v1753 = vpop.f32.mrf.mxu0
        %v1754 = vadd.f32 %v673, %v1753
        %v1755 = vpop.f32.mrf.mxu0
        %v1756 = vadd.f32 %v673, %v1755
        %1757 = vmatmul.bf16.gmra.mxu0 %v734
        %v1758 = vpop.f32.mrf.mxu0
        %v1759 = vadd.f32 %v673, %v1758
        %v1760 = vpop.f32.mrf.mxu0
        %v1761 = vadd.f32 %v673, %v1760
        %1762 = vmatmul.bf16.gmra.mxu0 %v735
        %v1763 = vpop.f32.mrf.mxu0
        %v1764 = vadd.f32 %v673, %v1763
        %v1765 = vpop.f32.mrf.mxu0
        %v1766 = vadd.f32 %v673, %v1765
        %1767 = vmatmul.bf16.gmra.mxu0 %v736
        %v1768 = vpop.f32.mrf.mxu0
        %v1769 = vadd.f32 %v673, %v1768
        %v1770 = vpop.f32.mrf.mxu0
        %v1771 = vadd.f32 %v673, %v1770
        %1772 = vmatmul.bf16.gmra.mxu0 %v737
        %v1773 = vpop.f32.mrf.mxu0
        %v1774 = vadd.f32 %v673, %v1773
        %v1775 = vpop.f32.mrf.mxu0
        %v1776 = vadd.f32 %v673, %v1775
        %1777 = vdwg.mxu0
        %1778 = vmatpush.bf16.msra.mxu0 %v1250
        %1779 = vmatpush.bf16.msra.mxu0 %v1234
        %1780 = vmatpush.bf16.msra.mxu0 %v1218
        %1781 = vmatpush.bf16.msra.mxu0 %v1202
        %1782 = vmatpush.bf16.msra.mxu0 %v1186
        %1783 = vmatpush.bf16.msra.mxu0 %v1170
        %1784 = vmatpush.bf16.msra.mxu0 %v1154
        %1785 = vmatpush.bf16.msra.mxu0 %v1138
        %1786 = vmatmul.bf16.gmra.mxu0 %v730
        %v1787 = vpop.f32.mrf.mxu0
        %v1788 = vadd.f32 %v674, %v1787
        %v1789 = vpop.f32.mrf.mxu0
        %v1790 = vadd.f32 %v674, %v1789
        %1791 = vmatmul.bf16.gmra.mxu0 %v731
        %v1792 = vpop.f32.mrf.mxu0
        %v1793 = vadd.f32 %v674, %v1792
        %v1794 = vpop.f32.mrf.mxu0
        %v1795 = vadd.f32 %v674, %v1794
        %1796 = vmatmul.bf16.gmra.mxu0 %v732
        %v1797 = vpop.f32.mrf.mxu0
        %v1798 = vadd.f32 %v674, %v1797
        %v1799 = vpop.f32.mrf.mxu0
        %v1800 = vadd.f32 %v674, %v1799
        %1801 = vmatmul.bf16.gmra.mxu0 %v733
        %v1802 = vpop.f32.mrf.mxu0
        %v1803 = vadd.f32 %v674, %v1802
        %v1804 = vpop.f32.mrf.mxu0
        %v1805 = vadd.f32 %v674, %v1804
        %1806 = vmatmul.bf16.gmra.mxu0 %v734
        %v1807 = vpop.f32.mrf.mxu0
        %v1808 = vadd.f32 %v674, %v1807
        %v1809 = vpop.f32.mrf.mxu0
        %v1810 = vadd.f32 %v674, %v1809
        %1811 = vmatmul.bf16.gmra.mxu0 %v735
        %v1812 = vpop.f32.mrf.mxu0
        %v1813 = vadd.f32 %v674, %v1812
        %v1814 = vpop.f32.mrf.mxu0
        %v1815 = vadd.f32 %v674, %v1814
        %1816 = vmatmul.bf16.gmra.mxu0 %v736
        %v1817 = vpop.f32.mrf.mxu0
        %v1818 = vadd.f32 %v674, %v1817
        %v1819 = vpop.f32.mrf.mxu0
        %v1820 = vadd.f32 %v674, %v1819
        %1821 = vmatmul.bf16.gmra.mxu0 %v737
        %v1822 = vpop.f32.mrf.mxu0
        %v1823 = vadd.f32 %v674, %v1822
        %v1824 = vpop.f32.mrf.mxu0
        %v1825 = vadd.f32 %v674, %v1824
        %1826 = vdwg.mxu0
        %1827 = vmatpush.bf16.msra.mxu0 %v1251
        %1828 = vmatpush.bf16.msra.mxu0 %v1235
        %1829 = vmatpush.bf16.msra.mxu0 %v1219
        %1830 = vmatpush.bf16.msra.mxu0 %v1203
        %1831 = vmatpush.bf16.msra.mxu0 %v1187
        %1832 = vmatpush.bf16.msra.mxu0 %v1171
        %1833 = vmatpush.bf16.msra.mxu0 %v1155
        %1834 = vmatpush.bf16.msra.mxu0 %v1139
        %1835 = vmatmul.bf16.gmra.mxu0 %v730
        %v1836 = vpop.f32.mrf.mxu0
        %v1837 = vadd.f32 %v675, %v1836
        %v1838 = vpop.f32.mrf.mxu0
        %v1839 = vadd.f32 %v675, %v1838
        %1840 = vmatmul.bf16.gmra.mxu0 %v731
        %v1841 = vpop.f32.mrf.mxu0
        %v1842 = vadd.f32 %v675, %v1841
        %v1843 = vpop.f32.mrf.mxu0
        %v1844 = vadd.f32 %v675, %v1843
        %1845 = vmatmul.bf16.gmra.mxu0 %v732
        %v1846 = vpop.f32.mrf.mxu0
        %v1847 = vadd.f32 %v675, %v1846
        %v1848 = vpop.f32.mrf.mxu0
        %v1849 = vadd.f32 %v675, %v1848
        %1850 = vmatmul.bf16.gmra.mxu0 %v733
        %v1851 = vpop.f32.mrf.mxu0
        %v1852 = vadd.f32 %v675, %v1851
        %v1853 = vpop.f32.mrf.mxu0
        %v1854 = vadd.f32 %v675, %v1853
        %1855 = vmatmul.bf16.gmra.mxu0 %v734
        %v1856 = vpop.f32.mrf.mxu0
        %v1857 = vadd.f32 %v675, %v1856
        %v1858 = vpop.f32.mrf.mxu0
        %v1859 = vadd.f32 %v675, %v1858
        %1860 = vmatmul.bf16.gmra.mxu0 %v735
        %v1861 = vpop.f32.mrf.mxu0
        %v1862 = vadd.f32 %v675, %v1861
        %v1863 = vpop.f32.mrf.mxu0
        %v1864 = vadd.f32 %v675, %v1863
        %1865 = vmatmul.bf16.gmra.mxu0 %v736
        %v1866 = vpop.f32.mrf.mxu0
        %v1867 = vadd.f32 %v675, %v1866
        %v1868 = vpop.f32.mrf.mxu0
        %v1869 = vadd.f32 %v675, %v1868
        %1870 = vmatmul.bf16.gmra.mxu0 %v737
        %v1871 = vpop.f32.mrf.mxu0
        %v1872 = vadd.f32 %v675, %v1871
        %v1873 = vpop.f32.mrf.mxu0
        %v1874 = vadd.f32 %v675, %v1873
        %1875 = vdwg.mxu0
        %1876 = vmatpush.bf16.msra.mxu0 %v1252
        %1877 = vmatpush.bf16.msra.mxu0 %v1236
        %1878 = vmatpush.bf16.msra.mxu0 %v1220
        %1879 = vmatpush.bf16.msra.mxu0 %v1204
        %1880 = vmatpush.bf16.msra.mxu0 %v1188
        %1881 = vmatpush.bf16.msra.mxu0 %v1172
        %1882 = vmatpush.bf16.msra.mxu0 %v1156
        %1883 = vmatpush.bf16.msra.mxu0 %v1140
        %1884 = vmatmul.bf16.gmra.mxu0 %v730
        %v1885 = vpop.f32.mrf.mxu0
        %v1886 = vadd.f32 %v676, %v1885
        %v1887 = vpop.f32.mrf.mxu0
        %v1888 = vadd.f32 %v676, %v1887
        %1889 = vmatmul.bf16.gmra.mxu0 %v731
        %v1890 = vpop.f32.mrf.mxu0
        %v1891 = vadd.f32 %v676, %v1890
        %v1892 = vpop.f32.mrf.mxu0
        %v1893 = vadd.f32 %v676, %v1892
        %1894 = vmatmul.bf16.gmra.mxu0 %v732
        %v1895 = vpop.f32.mrf.mxu0
        %v1896 = vadd.f32 %v676, %v1895
        %v1897 = vpop.f32.mrf.mxu0
        %v1898 = vadd.f32 %v676, %v1897
        %1899 = vmatmul.bf16.gmra.mxu0 %v733
        %v1900 = vpop.f32.mrf.mxu0
        %v1901 = vadd.f32 %v676, %v1900
        %v1902 = vpop.f32.mrf.mxu0
        %v1903 = vadd.f32 %v676, %v1902
        %1904 = vmatmul.bf16.gmra.mxu0 %v734
        %v1905 = vpop.f32.mrf.mxu0
        %v1906 = vadd.f32 %v676, %v1905
        %v1907 = vpop.f32.mrf.mxu0
        %v1908 = vadd.f32 %v676, %v1907
        %1909 = vmatmul.bf16.gmra.mxu0 %v735
        %v1910 = vpop.f32.mrf.mxu0
        %v1911 = vadd.f32 %v676, %v1910
        %v1912 = vpop.f32.mrf.mxu0
        %v1913 = vadd.f32 %v676, %v1912
        %1914 = vmatmul.bf16.gmra.mxu0 %v736
        %v1915 = vpop.f32.mrf.mxu0
        %v1916 = vadd.f32 %v676, %v1915
        %v1917 = vpop.f32.mrf.mxu0
        %v1918 = vadd.f32 %v676, %v1917
        %1919 = vmatmul.bf16.gmra.mxu0 %v737
        %v1920 = vpop.f32.mrf.mxu0
        %v1921 = vadd.f32 %v676, %v1920
        %v1922 = vpop.f32.mrf.mxu0
        %v1923 = vadd.f32 %v676, %v1922
        %1924 = vdwg.mxu0
        %1925 = vmatpush.bf16.msra.mxu0 %v1253
        %1926 = vmatpush.bf16.msra.mxu0 %v1237
        %1927 = vmatpush.bf16.msra.mxu0 %v1221
        %1928 = vmatpush.bf16.msra.mxu0 %v1205
        %1929 = vmatpush.bf16.msra.mxu0 %v1189
        %1930 = vmatpush.bf16.msra.mxu0 %v1173
        %1931 = vmatpush.bf16.msra.mxu0 %v1157
        %1932 = vmatpush.bf16.msra.mxu0 %v1141
        %1933 = vmatmul.bf16.gmra.mxu0 %v730
        %v1934 = vpop.f32.mrf.mxu0
        %v1935 = vadd.f32 %v677, %v1934
        %v1936 = vpop.f32.mrf.mxu0
        %v1937 = vadd.f32 %v677, %v1936
        %1938 = vmatmul.bf16.gmra.mxu0 %v731
        %v1939 = vpop.f32.mrf.mxu0
        %v1940 = vadd.f32 %v677, %v1939
        %v1941 = vpop.f32.mrf.mxu0
        %v1942 = vadd.f32 %v677, %v1941
        %1943 = vmatmul.bf16.gmra.mxu0 %v732
        %v1944 = vpop.f32.mrf.mxu0
        %v1945 = vadd.f32 %v677, %v1944
        %v1946 = vpop.f32.mrf.mxu0
        %v1947 = vadd.f32 %v677, %v1946
        %1948 = vmatmul.bf16.gmra.mxu0 %v733
        %v1949 = vpop.f32.mrf.mxu0
        %v1950 = vadd.f32 %v677, %v1949
        %v1951 = vpop.f32.mrf.mxu0
        %v1952 = vadd.f32 %v677, %v1951
        %1953 = vmatmul.bf16.gmra.mxu0 %v734
        %v1954 = vpop.f32.mrf.mxu0
        %v1955 = vadd.f32 %v677, %v1954
        %v1956 = vpop.f32.mrf.mxu0
        %v1957 = vadd.f32 %v677, %v1956
        %1958 = vmatmul.bf16.gmra.mxu0 %v735
        %v1959 = vpop.f32.mrf.mxu0
        %v1960 = vadd.f32 %v677, %v1959
        %v1961 = vpop.f32.mrf.mxu0
        %v1962 = vadd.f32 %v677, %v1961
        %1963 = vmatmul.bf16.gmra.mxu0 %v736
        %v1964 = vpop.f32.mrf.mxu0
        %v1965 = vadd.f32 %v677, %v1964
        %v1966 = vpop.f32.mrf.mxu0
        %v1967 = vadd.f32 %v677, %v1966
        %1968 = vmatmul.bf16.gmra.mxu0 %v737
        %v1969 = vpop.f32.mrf.mxu0
        %v1970 = vadd.f32 %v677, %v1969
        %v1971 = vpop.f32.mrf.mxu0
        %v1972 = vadd.f32 %v677, %v1971
        %1973 = vdwg.mxu0
        %1974 = vmatpush.bf16.msra.mxu0 %v1254
        %1975 = vmatpush.bf16.msra.mxu0 %v1238
        %1976 = vmatpush.bf16.msra.mxu0 %v1222
        %1977 = vmatpush.bf16.msra.mxu0 %v1206
        %1978 = vmatpush.bf16.msra.mxu0 %v1190
        %1979 = vmatpush.bf16.msra.mxu0 %v1174
        %1980 = vmatpush.bf16.msra.mxu0 %v1158
        %1981 = vmatpush.bf16.msra.mxu0 %v1142
        %1982 = vmatmul.bf16.gmra.mxu0 %v730
        %v1983 = vpop.f32.mrf.mxu0
        %v1984 = vadd.f32 %v678, %v1983
        %v1985 = vpop.f32.mrf.mxu0
        %v1986 = vadd.f32 %v678, %v1985
        %1987 = vmatmul.bf16.gmra.mxu0 %v731
        %v1988 = vpop.f32.mrf.mxu0
        %v1989 = vadd.f32 %v678, %v1988
        %v1990 = vpop.f32.mrf.mxu0
        %v1991 = vadd.f32 %v678, %v1990
        %1992 = vmatmul.bf16.gmra.mxu0 %v732
        %v1993 = vpop.f32.mrf.mxu0
        %v1994 = vadd.f32 %v678, %v1993
        %v1995 = vpop.f32.mrf.mxu0
        %v1996 = vadd.f32 %v678, %v1995
        %1997 = vmatmul.bf16.gmra.mxu0 %v733
        %v1998 = vpop.f32.mrf.mxu0
        %v1999 = vadd.f32 %v678, %v1998
        %v2000 = vpop.f32.mrf.mxu0
        %v2001 = vadd.f32 %v678, %v2000
        %2002 = vmatmul.bf16.gmra.mxu0 %v734
        %v2003 = vpop.f32.mrf.mxu0
        %v2004 = vadd.f32 %v678, %v2003
        %v2005 = vpop.f32.mrf.mxu0
        %v2006 = vadd.f32 %v678, %v2005
        %2007 = vmatmul.bf16.gmra.mxu0 %v735
        %v2008 = vpop.f32.mrf.mxu0
        %v2009 = vadd.f32 %v678, %v2008
        %v2010 = vpop.f32.mrf.mxu0
        %v2011 = vadd.f32 %v678, %v2010
        %2012 = vmatmul.bf16.gmra.mxu0 %v736
        %v2013 = vpop.f32.mrf.mxu0
        %v2014 = vadd.f32 %v678, %v2013
        %v2015 = vpop.f32.mrf.mxu0
        %v2016 = vadd.f32 %v678, %v2015
        %2017 = vmatmul.bf16.gmra.mxu0 %v737
        %v2018 = vpop.f32.mrf.mxu0
        %v2019 = vadd.f32 %v678, %v2018
        %v2020 = vpop.f32.mrf.mxu0
        %v2021 = vadd.f32 %v678, %v2020
        %2022 = vdwg.mxu0
        %2023 = vmatpush.bf16.msra.mxu0 %v1255
        %2024 = vmatpush.bf16.msra.mxu0 %v1239
        %2025 = vmatpush.bf16.msra.mxu0 %v1223
        %2026 = vmatpush.bf16.msra.mxu0 %v1207
        %2027 = vmatpush.bf16.msra.mxu0 %v1191
        %2028 = vmatpush.bf16.msra.mxu0 %v1175
        %2029 = vmatpush.bf16.msra.mxu0 %v1159
        %2030 = vmatpush.bf16.msra.mxu0 %v1143
        %2031 = vmatmul.bf16.gmra.mxu0 %v730
        %v2032 = vpop.f32.mrf.mxu0
        %v2033 = vadd.f32 %v679, %v2032
        %v2034 = vpop.f32.mrf.mxu0
        %v2035 = vadd.f32 %v679, %v2034
        %2036 = vmatmul.bf16.gmra.mxu0 %v731
        %v2037 = vpop.f32.mrf.mxu0
        %v2038 = vadd.f32 %v679, %v2037
        %v2039 = vpop.f32.mrf.mxu0
        %v2040 = vadd.f32 %v679, %v2039
        %2041 = vmatmul.bf16.gmra.mxu0 %v732
        %v2042 = vpop.f32.mrf.mxu0
        %v2043 = vadd.f32 %v679, %v2042
        %v2044 = vpop.f32.mrf.mxu0
        %v2045 = vadd.f32 %v679, %v2044
        %2046 = vmatmul.bf16.gmra.mxu0 %v733
        %v2047 = vpop.f32.mrf.mxu0
        %v2048 = vadd.f32 %v679, %v2047
        %v2049 = vpop.f32.mrf.mxu0
        %v2050 = vadd.f32 %v679, %v2049
        %2051 = vmatmul.bf16.gmra.mxu0 %v734
        %v2052 = vpop.f32.mrf.mxu0
        %v2053 = vadd.f32 %v679, %v2052
        %v2054 = vpop.f32.mrf.mxu0
        %v2055 = vadd.f32 %v679, %v2054
        %2056 = vmatmul.bf16.gmra.mxu0 %v735
        %v2057 = vpop.f32.mrf.mxu0
        %v2058 = vadd.f32 %v679, %v2057
        %v2059 = vpop.f32.mrf.mxu0
        %v2060 = vadd.f32 %v679, %v2059
        %2061 = vmatmul.bf16.gmra.mxu0 %v736
        %v2062 = vpop.f32.mrf.mxu0
        %v2063 = vadd.f32 %v679, %v2062
        %v2064 = vpop.f32.mrf.mxu0
        %v2065 = vadd.f32 %v679, %v2064
        %2066 = vmatmul.bf16.gmra.mxu0 %v737
        %v2067 = vpop.f32.mrf.mxu0
        %v2068 = vadd.f32 %v679, %v2067
        %v2069 = vpop.f32.mrf.mxu0
        %v2070 = vadd.f32 %v679, %v2069
        %2071 = vdwg.mxu0
        %2072 = vmatpush.bf16.msra.mxu0 %v1256
        %2073 = vmatpush.bf16.msra.mxu0 %v1240
        %2074 = vmatpush.bf16.msra.mxu0 %v1224
        %2075 = vmatpush.bf16.msra.mxu0 %v1208
        %2076 = vmatpush.bf16.msra.mxu0 %v1192
        %2077 = vmatpush.bf16.msra.mxu0 %v1176
        %2078 = vmatpush.bf16.msra.mxu0 %v1160
        %2079 = vmatpush.bf16.msra.mxu0 %v1144
        %2080 = vmatmul.bf16.gmra.mxu0 %v730
        %v2081 = vpop.f32.mrf.mxu0
        %v2082 = vadd.f32 %v680, %v2081
        %v2083 = vpop.f32.mrf.mxu0
        %v2084 = vadd.f32 %v680, %v2083
        %2085 = vmatmul.bf16.gmra.mxu0 %v731
        %v2086 = vpop.f32.mrf.mxu0
        %v2087 = vadd.f32 %v680, %v2086
        %v2088 = vpop.f32.mrf.mxu0
        %v2089 = vadd.f32 %v680, %v2088
        %2090 = vmatmul.bf16.gmra.mxu0 %v732
        %v2091 = vpop.f32.mrf.mxu0
        %v2092 = vadd.f32 %v680, %v2091
        %v2093 = vpop.f32.mrf.mxu0
        %v2094 = vadd.f32 %v680, %v2093
        %2095 = vmatmul.bf16.gmra.mxu0 %v733
        %v2096 = vpop.f32.mrf.mxu0
        %v2097 = vadd.f32 %v680, %v2096
        %v2098 = vpop.f32.mrf.mxu0
        %v2099 = vadd.f32 %v680, %v2098
        %2100 = vmatmul.bf16.gmra.mxu0 %v734
        %v2101 = vpop.f32.mrf.mxu0
        %v2102 = vadd.f32 %v680, %v2101
        %v2103 = vpop.f32.mrf.mxu0
        %v2104 = vadd.f32 %v680, %v2103
        %2105 = vmatmul.bf16.gmra.mxu0 %v735
        %v2106 = vpop.f32.mrf.mxu0
        %v2107 = vadd.f32 %v680, %v2106
        %v2108 = vpop.f32.mrf.mxu0
        %v2109 = vadd.f32 %v680, %v2108
        %2110 = vmatmul.bf16.gmra.mxu0 %v736
        %v2111 = vpop.f32.mrf.mxu0
        %v2112 = vadd.f32 %v680, %v2111
        %v2113 = vpop.f32.mrf.mxu0
        %v2114 = vadd.f32 %v680, %v2113
        %2115 = vmatmul.bf16.gmra.mxu0 %v737
        %v2116 = vpop.f32.mrf.mxu0
        %v2117 = vadd.f32 %v680, %v2116
        %v2118 = vpop.f32.mrf.mxu0
        %v2119 = vadd.f32 %v680, %v2118
        %2120 = vdwg.mxu0
        %2121 = vmatpush.bf16.msra.mxu0 %v1257
        %2122 = vmatpush.bf16.msra.mxu0 %v1241
        %2123 = vmatpush.bf16.msra.mxu0 %v1225
        %2124 = vmatpush.bf16.msra.mxu0 %v1209
        %2125 = vmatpush.bf16.msra.mxu0 %v1193
        %2126 = vmatpush.bf16.msra.mxu0 %v1177
        %2127 = vmatpush.bf16.msra.mxu0 %v1161
        %2128 = vmatpush.bf16.msra.mxu0 %v1145
        %2129 = vmatmul.bf16.gmra.mxu0 %v730
        %v2130 = vpop.f32.mrf.mxu0
        %v2131 = vadd.f32 %v681, %v2130
        %v2132 = vpop.f32.mrf.mxu0
        %v2133 = vadd.f32 %v681, %v2132
        %2134 = vmatmul.bf16.gmra.mxu0 %v731
        %v2135 = vpop.f32.mrf.mxu0
        %v2136 = vadd.f32 %v681, %v2135
        %v2137 = vpop.f32.mrf.mxu0
        %v2138 = vadd.f32 %v681, %v2137
        %2139 = vmatmul.bf16.gmra.mxu0 %v732
        %v2140 = vpop.f32.mrf.mxu0
        %v2141 = vadd.f32 %v681, %v2140
        %v2142 = vpop.f32.mrf.mxu0
        %v2143 = vadd.f32 %v681, %v2142
        %2144 = vmatmul.bf16.gmra.mxu0 %v733
        %v2145 = vpop.f32.mrf.mxu0
        %v2146 = vadd.f32 %v681, %v2145
        %v2147 = vpop.f32.mrf.mxu0
        %v2148 = vadd.f32 %v681, %v2147
        %2149 = vmatmul.bf16.gmra.mxu0 %v734
        %v2150 = vpop.f32.mrf.mxu0
        %v2151 = vadd.f32 %v681, %v2150
        %v2152 = vpop.f32.mrf.mxu0
        %v2153 = vadd.f32 %v681, %v2152
        %2154 = vmatmul.bf16.gmra.mxu0 %v735
        %v2155 = vpop.f32.mrf.mxu0
        %v2156 = vadd.f32 %v681, %v2155
        %v2157 = vpop.f32.mrf.mxu0
        %v2158 = vadd.f32 %v681, %v2157
        %2159 = vmatmul.bf16.gmra.mxu0 %v736
        %v2160 = vpop.f32.mrf.mxu0
        %v2161 = vadd.f32 %v681, %v2160
        %v2162 = vpop.f32.mrf.mxu0
        %v2163 = vadd.f32 %v681, %v2162
        %2164 = vmatmul.bf16.gmra.mxu0 %v737
        %v2165 = vpop.f32.mrf.mxu0
        %v2166 = vadd.f32 %v681, %v2165
        %v2167 = vpop.f32.mrf.mxu0
        %v2168 = vadd.f32 %v681, %v2167
        %2169 = vdwg.mxu0
        %s2170 = smul.u32 %s22, 256
        %s2171 = smul.addr %s2170, 8
        %s2172 = scalar_lea.vmem [#allocation2], %s2171
        %2173 = vst [vmem:[%s2172] sm:$0xff] %v1396
        %2174 = vst [vmem:[%s2172 + $0x8] sm:$0xff] %v1445
        %2175 = vst [vmem:[%s2172 + $0x10] sm:$0xff] %v1494
        %2176 = vst [vmem:[%s2172 + $0x18] sm:$0xff] %v1543
        %2177 = vst [vmem:[%s2172 + $0x20] sm:$0xff] %v1592
        %2178 = vst [vmem:[%s2172 + $0x28] sm:$0xff] %v1641
        %2179 = vst [vmem:[%s2172 + $0x30] sm:$0xff] %v1690
        %2180 = vst [vmem:[%s2172 + $0x38] sm:$0xff] %v1739
        %2181 = vst [vmem:[%s2172 + $0x40] sm:$0xff] %v1788
        %2182 = vst [vmem:[%s2172 + $0x48] sm:$0xff] %v1837
        %2183 = vst [vmem:[%s2172 + $0x50] sm:$0xff] %v1886
        %2184 = vst [vmem:[%s2172 + $0x58] sm:$0xff] %v1935
        %2185 = vst [vmem:[%s2172 + $0x60] sm:$0xff] %v1984
        %2186 = vst [vmem:[%s2172 + $0x68] sm:$0xff] %v2033
        %2187 = vst [vmem:[%s2172 + $0x70] sm:$0xff] %v2082
        %2188 = vst [vmem:[%s2172 + $0x78] sm:$0xff] %v2131
        %2189 = vst [vmem:[%s2172 + $0x80] sm:$0xff] %v1398
        %2190 = vst [vmem:[%s2172 + $0x88] sm:$0xff] %v1447
        %2191 = vst [vmem:[%s2172 + $0x90] sm:$0xff] %v1496
        %2192 = vst [vmem:[%s2172 + $0x98] sm:$0xff] %v1545
        %2193 = vst [vmem:[%s2172 + $0xa0] sm:$0xff] %v1594
        %2194 = vst [vmem:[%s2172 + $0xa8] sm:$0xff] %v1643
        %2195 = vst [vmem:[%s2172 + $0xb0] sm:$0xff] %v1692
        %2196 = vst [vmem:[%s2172 + $0xb8] sm:$0xff] %v1741
        %2197 = vst [vmem:[%s2172 + $0xc0] sm:$0xff] %v1790
        %2198 = vst [vmem:[%s2172 + $0xc8] sm:$0xff] %v1839
        %2199 = vst [vmem:[%s2172 + $0xd0] sm:$0xff] %v1888
        %2200 = vst [vmem:[%s2172 + $0xd8] sm:$0xff] %v1937
        %2201 = vst [vmem:[%s2172 + $0xe0] sm:$0xff] %v1986
        %2202 = vst [vmem:[%s2172 + $0xe8] sm:$0xff] %v2035
        %2203 = vst [vmem:[%s2172 + $0xf0] sm:$0xff] %v2084
        %2204 = vst [vmem:[%s2172 + $0xf8] sm:$0xff] %v2133
        %2205 = vst [vmem:[%s2172 + $0x100] sm:$0xff] %v1401
        %2206 = vst [vmem:[%s2172 + $0x108] sm:$0xff] %v1450
        %2207 = vst [vmem:[%s2172 + $0x110] sm:$0xff] %v1499
        %2208 = vst [vmem:[%s2172 + $0x118] sm:$0xff] %v1548
        %2209 = vst [vmem:[%s2172 + $0x120] sm:$0xff] %v1597
        %2210 = vst [vmem:[%s2172 + $0x128] sm:$0xff] %v1646
        %2211 = vst [vmem:[%s2172 + $0x130] sm:$0xff] %v1695
        %2212 = vst [vmem:[%s2172 + $0x138] sm:$0xff] %v1744
        %2213 = vst [vmem:[%s2172 + $0x140] sm:$0xff] %v1793
        %2214 = vst [vmem:[%s2172 + $0x148] sm:$0xff] %v1842
        %2215 = vst [vmem:[%s2172 + $0x150] sm:$0xff] %v1891
        %2216 = vst [vmem:[%s2172 + $0x158] sm:$0xff] %v1940
        %2217 = vst [vmem:[%s2172 + $0x160] sm:$0xff] %v1989
        %2218 = vst [vmem:[%s2172 + $0x168] sm:$0xff] %v2038
        %2219 = vst [vmem:[%s2172 + $0x170] sm:$0xff] %v2087
        %2220 = vst [vmem:[%s2172 + $0x178] sm:$0xff] %v2136
        %2221 = vst [vmem:[%s2172 + $0x180] sm:$0xff] %v1403
        %2222 = vst [vmem:[%s2172 + $0x188] sm:$0xff] %v1452
        %2223 = vst [vmem:[%s2172 + $0x190] sm:$0xff] %v1501
        %2224 = vst [vmem:[%s2172 + $0x198] sm:$0xff] %v1550
        %2225 = vst [vmem:[%s2172 + $0x1a0] sm:$0xff] %v1599
        %2226 = vst [vmem:[%s2172 + $0x1a8] sm:$0xff] %v1648
        %2227 = vst [vmem:[%s2172 + $0x1b0] sm:$0xff] %v1697
        %2228 = vst [vmem:[%s2172 + $0x1b8] sm:$0xff] %v1746
        %2229 = vst [vmem:[%s2172 + $0x1c0] sm:$0xff] %v1795
        %2230 = vst [vmem:[%s2172 + $0x1c8] sm:$0xff] %v1844
        %2231 = vst [vmem:[%s2172 + $0x1d0] sm:$0xff] %v1893
        %2232 = vst [vmem:[%s2172 + $0x1d8] sm:$0xff] %v1942
        %2233 = vst [vmem:[%s2172 + $0x1e0] sm:$0xff] %v1991
        %2234 = vst [vmem:[%s2172 + $0x1e8] sm:$0xff] %v2040
        %2235 = vst [vmem:[%s2172 + $0x1f0] sm:$0xff] %v2089
        %2236 = vst [vmem:[%s2172 + $0x1f8] sm:$0xff] %v2138
        %2237 = vst [vmem:[%s2172 + $0x200] sm:$0xff] %v1406
        %2238 = vst [vmem:[%s2172 + $0x208] sm:$0xff] %v1455
        %2239 = vst [vmem:[%s2172 + $0x210] sm:$0xff] %v1504
        %2240 = vst [vmem:[%s2172 + $0x218] sm:$0xff] %v1553
        %2241 = vst [vmem:[%s2172 + $0x220] sm:$0xff] %v1602
        %2242 = vst [vmem:[%s2172 + $0x228] sm:$0xff] %v1651
        %2243 = vst [vmem:[%s2172 + $0x230] sm:$0xff] %v1700
        %2244 = vst [vmem:[%s2172 + $0x238] sm:$0xff] %v1749
        %2245 = vst [vmem:[%s2172 + $0x240] sm:$0xff] %v1798
        %2246 = vst [vmem:[%s2172 + $0x248] sm:$0xff] %v1847
        %2247 = vst [vmem:[%s2172 + $0x250] sm:$0xff] %v1896
        %2248 = vst [vmem:[%s2172 + $0x258] sm:$0xff] %v1945
        %2249 = vst [vmem:[%s2172 + $0x260] sm:$0xff] %v1994
        %2250 = vst [vmem:[%s2172 + $0x268] sm:$0xff] %v2043
        %2251 = vst [vmem:[%s2172 + $0x270] sm:$0xff] %v2092
        %2252 = vst [vmem:[%s2172 + $0x278] sm:$0xff] %v2141
        %2253 = vst [vmem:[%s2172 + $0x280] sm:$0xff] %v1408
        %2254 = vst [vmem:[%s2172 + $0x288] sm:$0xff] %v1457
        %2255 = vst [vmem:[%s2172 + $0x290] sm:$0xff] %v1506
        %2256 = vst [vmem:[%s2172 + $0x298] sm:$0xff] %v1555
        %2257 = vst [vmem:[%s2172 + $0x2a0] sm:$0xff] %v1604
        %2258 = vst [vmem:[%s2172 + $0x2a8] sm:$0xff] %v1653
        %2259 = vst [vmem:[%s2172 + $0x2b0] sm:$0xff] %v1702
        %2260 = vst [vmem:[%s2172 + $0x2b8] sm:$0xff] %v1751
        %2261 = vst [vmem:[%s2172 + $0x2c0] sm:$0xff] %v1800
        %2262 = vst [vmem:[%s2172 + $0x2c8] sm:$0xff] %v1849
        %2263 = vst [vmem:[%s2172 + $0x2d0] sm:$0xff] %v1898
        %2264 = vst [vmem:[%s2172 + $0x2d8] sm:$0xff] %v1947
        %2265 = vst [vmem:[%s2172 + $0x2e0] sm:$0xff] %v1996
        %2266 = vst [vmem:[%s2172 + $0x2e8] sm:$0xff] %v2045
        %2267 = vst [vmem:[%s2172 + $0x2f0] sm:$0xff] %v2094
        %2268 = vst [vmem:[%s2172 + $0x2f8] sm:$0xff] %v2143
        %2269 = vst [vmem:[%s2172 + $0x300] sm:$0xff] %v1411
        %2270 = vst [vmem:[%s2172 + $0x308] sm:$0xff] %v1460
        %2271 = vst [vmem:[%s2172 + $0x310] sm:$0xff] %v1509
        %2272 = vst [vmem:[%s2172 + $0x318] sm:$0xff] %v1558
        %2273 = vst [vmem:[%s2172 + $0x320] sm:$0xff] %v1607
        %2274 = vst [vmem:[%s2172 + $0x328] sm:$0xff] %v1656
        %2275 = vst [vmem:[%s2172 + $0x330] sm:$0xff] %v1705
        %2276 = vst [vmem:[%s2172 + $0x338] sm:$0xff] %v1754
        %2277 = vst [vmem:[%s2172 + $0x340] sm:$0xff] %v1803
        %2278 = vst [vmem:[%s2172 + $0x348] sm:$0xff] %v1852
        %2279 = vst [vmem:[%s2172 + $0x350] sm:$0xff] %v1901
        %2280 = vst [vmem:[%s2172 + $0x358] sm:$0xff] %v1950
        %2281 = vst [vmem:[%s2172 + $0x360] sm:$0xff] %v1999
        %2282 = vst [vmem:[%s2172 + $0x368] sm:$0xff] %v2048
        %2283 = vst [vmem:[%s2172 + $0x370] sm:$0xff] %v2097
        %2284 = vst [vmem:[%s2172 + $0x378] sm:$0xff] %v2146
        %2285 = vst [vmem:[%s2172 + $0x380] sm:$0xff] %v1413
        %2286 = vst [vmem:[%s2172 + $0x388] sm:$0xff] %v1462
        %2287 = vst [vmem:[%s2172 + $0x390] sm:$0xff] %v1511
        %2288 = vst [vmem:[%s2172 + $0x398] sm:$0xff] %v1560
        %2289 = vst [vmem:[%s2172 + $0x3a0] sm:$0xff] %v1609
        %2290 = vst [vmem:[%s2172 + $0x3a8] sm:$0xff] %v1658
        %2291 = vst [vmem:[%s2172 + $0x3b0] sm:$0xff] %v1707
        %2292 = vst [vmem:[%s2172 + $0x3b8] sm:$0xff] %v1756
        %2293 = vst [vmem:[%s2172 + $0x3c0] sm:$0xff] %v1805
        %2294 = vst [vmem:[%s2172 + $0x3c8] sm:$0xff] %v1854
        %2295 = vst [vmem:[%s2172 + $0x3d0] sm:$0xff] %v1903
        %2296 = vst [vmem:[%s2172 + $0x3d8] sm:$0xff] %v1952
        %2297 = vst [vmem:[%s2172 + $0x3e0] sm:$0xff] %v2001
        %2298 = vst [vmem:[%s2172 + $0x3e8] sm:$0xff] %v2050
        %2299 = vst [vmem:[%s2172 + $0x3f0] sm:$0xff] %v2099
        %2300 = vst [vmem:[%s2172 + $0x3f8] sm:$0xff] %v2148
        %2301 = vst [vmem:[%s2172 + $0x400] sm:$0xff] %v1416
        %2302 = vst [vmem:[%s2172 + $0x408] sm:$0xff] %v1465
        %2303 = vst [vmem:[%s2172 + $0x410] sm:$0xff] %v1514
        %2304 = vst [vmem:[%s2172 + $0x418] sm:$0xff] %v1563
        %2305 = vst [vmem:[%s2172 + $0x420] sm:$0xff] %v1612
        %2306 = vst [vmem:[%s2172 + $0x428] sm:$0xff] %v1661
        %2307 = vst [vmem:[%s2172 + $0x430] sm:$0xff] %v1710
        %2308 = vst [vmem:[%s2172 + $0x438] sm:$0xff] %v1759
        %2309 = vst [vmem:[%s2172 + $0x440] sm:$0xff] %v1808
        %2310 = vst [vmem:[%s2172 + $0x448] sm:$0xff] %v1857
        %2311 = vst [vmem:[%s2172 + $0x450] sm:$0xff] %v1906
        %2312 = vst [vmem:[%s2172 + $0x458] sm:$0xff] %v1955
        %2313 = vst [vmem:[%s2172 + $0x460] sm:$0xff] %v2004
        %2314 = vst [vmem:[%s2172 + $0x468] sm:$0xff] %v2053
        %2315 = vst [vmem:[%s2172 + $0x470] sm:$0xff] %v2102
        %2316 = vst [vmem:[%s2172 + $0x478] sm:$0xff] %v2151
        %2317 = vst [vmem:[%s2172 + $0x480] sm:$0xff] %v1418
        %2318 = vst [vmem:[%s2172 + $0x488] sm:$0xff] %v1467
        %2319 = vst [vmem:[%s2172 + $0x490] sm:$0xff] %v1516
        %2320 = vst [vmem:[%s2172 + $0x498] sm:$0xff] %v1565
        %2321 = vst [vmem:[%s2172 + $0x4a0] sm:$0xff] %v1614
        %2322 = vst [vmem:[%s2172 + $0x4a8] sm:$0xff] %v1663
        %2323 = vst [vmem:[%s2172 + $0x4b0] sm:$0xff] %v1712
        %2324 = vst [vmem:[%s2172 + $0x4b8] sm:$0xff] %v1761
        %2325 = vst [vmem:[%s2172 + $0x4c0] sm:$0xff] %v1810
        %2326 = vst [vmem:[%s2172 + $0x4c8] sm:$0xff] %v1859
        %2327 = vst [vmem:[%s2172 + $0x4d0] sm:$0xff] %v1908
        %2328 = vst [vmem:[%s2172 + $0x4d8] sm:$0xff] %v1957
        %2329 = vst [vmem:[%s2172 + $0x4e0] sm:$0xff] %v2006
        %2330 = vst [vmem:[%s2172 + $0x4e8] sm:$0xff] %v2055
        %2331 = vst [vmem:[%s2172 + $0x4f0] sm:$0xff] %v2104
        %2332 = vst [vmem:[%s2172 + $0x4f8] sm:$0xff] %v2153
        %2333 = vst [vmem:[%s2172 + $0x500] sm:$0xff] %v1421
        %2334 = vst [vmem:[%s2172 + $0x508] sm:$0xff] %v1470
        %2335 = vst [vmem:[%s2172 + $0x510] sm:$0xff] %v1519
        %2336 = vst [vmem:[%s2172 + $0x518] sm:$0xff] %v1568
        %2337 = vst [vmem:[%s2172 + $0x520] sm:$0xff] %v1617
        %2338 = vst [vmem:[%s2172 + $0x528] sm:$0xff] %v1666
        %2339 = vst [vmem:[%s2172 + $0x530] sm:$0xff] %v1715
        %2340 = vst [vmem:[%s2172 + $0x538] sm:$0xff] %v1764
        %2341 = vst [vmem:[%s2172 + $0x540] sm:$0xff] %v1813
        %2342 = vst [vmem:[%s2172 + $0x548] sm:$0xff] %v1862
        %2343 = vst [vmem:[%s2172 + $0x550] sm:$0xff] %v1911
        %2344 = vst [vmem:[%s2172 + $0x558] sm:$0xff] %v1960
        %2345 = vst [vmem:[%s2172 + $0x560] sm:$0xff] %v2009
        %2346 = vst [vmem:[%s2172 + $0x568] sm:$0xff] %v2058
        %2347 = vst [vmem:[%s2172 + $0x570] sm:$0xff] %v2107
        %2348 = vst [vmem:[%s2172 + $0x578] sm:$0xff] %v2156
        %2349 = vst [vmem:[%s2172 + $0x580] sm:$0xff] %v1423
        %2350 = vst [vmem:[%s2172 + $0x588] sm:$0xff] %v1472
        %2351 = vst [vmem:[%s2172 + $0x590] sm:$0xff] %v1521
        %2352 = vst [vmem:[%s2172 + $0x598] sm:$0xff] %v1570
        %2353 = vst [vmem:[%s2172 + $0x5a0] sm:$0xff] %v1619
        %2354 = vst [vmem:[%s2172 + $0x5a8] sm:$0xff] %v1668
        %2355 = vst [vmem:[%s2172 + $0x5b0] sm:$0xff] %v1717
        %2356 = vst [vmem:[%s2172 + $0x5b8] sm:$0xff] %v1766
        %2357 = vst [vmem:[%s2172 + $0x5c0] sm:$0xff] %v1815
        %2358 = vst [vmem:[%s2172 + $0x5c8] sm:$0xff] %v1864
        %2359 = vst [vmem:[%s2172 + $0x5d0] sm:$0xff] %v1913
        %2360 = vst [vmem:[%s2172 + $0x5d8] sm:$0xff] %v1962
        %2361 = vst [vmem:[%s2172 + $0x5e0] sm:$0xff] %v2011
        %2362 = vst [vmem:[%s2172 + $0x5e8] sm:$0xff] %v2060
        %2363 = vst [vmem:[%s2172 + $0x5f0] sm:$0xff] %v2109
        %2364 = vst [vmem:[%s2172 + $0x5f8] sm:$0xff] %v2158
        %2365 = vst [vmem:[%s2172 + $0x600] sm:$0xff] %v1426
        %2366 = vst [vmem:[%s2172 + $0x608] sm:$0xff] %v1475
        %2367 = vst [vmem:[%s2172 + $0x610] sm:$0xff] %v1524
        %2368 = vst [vmem:[%s2172 + $0x618] sm:$0xff] %v1573
        %2369 = vst [vmem:[%s2172 + $0x620] sm:$0xff] %v1622
        %2370 = vst [vmem:[%s2172 + $0x628] sm:$0xff] %v1671
        %2371 = vst [vmem:[%s2172 + $0x630] sm:$0xff] %v1720
        %2372 = vst [vmem:[%s2172 + $0x638] sm:$0xff] %v1769
        %2373 = vst [vmem:[%s2172 + $0x640] sm:$0xff] %v1818
        %2374 = vst [vmem:[%s2172 + $0x648] sm:$0xff] %v1867
        %2375 = vst [vmem:[%s2172 + $0x650] sm:$0xff] %v1916
        %2376 = vst [vmem:[%s2172 + $0x658] sm:$0xff] %v1965
        %2377 = vst [vmem:[%s2172 + $0x660] sm:$0xff] %v2014
        %2378 = vst [vmem:[%s2172 + $0x668] sm:$0xff] %v2063
        %2379 = vst [vmem:[%s2172 + $0x670] sm:$0xff] %v2112
        %2380 = vst [vmem:[%s2172 + $0x678] sm:$0xff] %v2161
        %2381 = vst [vmem:[%s2172 + $0x680] sm:$0xff] %v1428
        %2382 = vst [vmem:[%s2172 + $0x688] sm:$0xff] %v1477
        %2383 = vst [vmem:[%s2172 + $0x690] sm:$0xff] %v1526
        %2384 = vst [vmem:[%s2172 + $0x698] sm:$0xff] %v1575
        %2385 = vst [vmem:[%s2172 + $0x6a0] sm:$0xff] %v1624
        %2386 = vst [vmem:[%s2172 + $0x6a8] sm:$0xff] %v1673
        %2387 = vst [vmem:[%s2172 + $0x6b0] sm:$0xff] %v1722
        %2388 = vst [vmem:[%s2172 + $0x6b8] sm:$0xff] %v1771
        %2389 = vst [vmem:[%s2172 + $0x6c0] sm:$0xff] %v1820
        %2390 = vst [vmem:[%s2172 + $0x6c8] sm:$0xff] %v1869
        %2391 = vst [vmem:[%s2172 + $0x6d0] sm:$0xff] %v1918
        %2392 = vst [vmem:[%s2172 + $0x6d8] sm:$0xff] %v1967
        %2393 = vst [vmem:[%s2172 + $0x6e0] sm:$0xff] %v2016
        %2394 = vst [vmem:[%s2172 + $0x6e8] sm:$0xff] %v2065
        %2395 = vst [vmem:[%s2172 + $0x6f0] sm:$0xff] %v2114
        %2396 = vst [vmem:[%s2172 + $0x6f8] sm:$0xff] %v2163
        %2397 = vst [vmem:[%s2172 + $0x700] sm:$0xff] %v1431
        %2398 = vst [vmem:[%s2172 + $0x708] sm:$0xff] %v1480
        %2399 = vst [vmem:[%s2172 + $0x710] sm:$0xff] %v1529
        %2400 = vst [vmem:[%s2172 + $0x718] sm:$0xff] %v1578
        %2401 = vst [vmem:[%s2172 + $0x720] sm:$0xff] %v1627
        %2402 = vst [vmem:[%s2172 + $0x728] sm:$0xff] %v1676
        %2403 = vst [vmem:[%s2172 + $0x730] sm:$0xff] %v1725
        %2404 = vst [vmem:[%s2172 + $0x738] sm:$0xff] %v1774
        %2405 = vst [vmem:[%s2172 + $0x740] sm:$0xff] %v1823
        %2406 = vst [vmem:[%s2172 + $0x748] sm:$0xff] %v1872
        %2407 = vst [vmem:[%s2172 + $0x750] sm:$0xff] %v1921
        %2408 = vst [vmem:[%s2172 + $0x758] sm:$0xff] %v1970
        %2409 = vst [vmem:[%s2172 + $0x760] sm:$0xff] %v2019
        %2410 = vst [vmem:[%s2172 + $0x768] sm:$0xff] %v2068
        %2411 = vst [vmem:[%s2172 + $0x770] sm:$0xff] %v2117
        %2412 = vst [vmem:[%s2172 + $0x778] sm:$0xff] %v2166
        %2413 = vst [vmem:[%s2172 + $0x780] sm:$0xff] %v1433
        %2414 = vst [vmem:[%s2172 + $0x788] sm:$0xff] %v1482
        %2415 = vst [vmem:[%s2172 + $0x790] sm:$0xff] %v1531
        %2416 = vst [vmem:[%s2172 + $0x798] sm:$0xff] %v1580
        %2417 = vst [vmem:[%s2172 + $0x7a0] sm:$0xff] %v1629
        %2418 = vst [vmem:[%s2172 + $0x7a8] sm:$0xff] %v1678
        %2419 = vst [vmem:[%s2172 + $0x7b0] sm:$0xff] %v1727
        %2420 = vst [vmem:[%s2172 + $0x7b8] sm:$0xff] %v1776
        %2421 = vst [vmem:[%s2172 + $0x7c0] sm:$0xff] %v1825
        %2422 = vst [vmem:[%s2172 + $0x7c8] sm:$0xff] %v1874
        %2423 = vst [vmem:[%s2172 + $0x7d0] sm:$0xff] %v1923
        %2424 = vst [vmem:[%s2172 + $0x7d8] sm:$0xff] %v1972
        %2425 = vst [vmem:[%s2172 + $0x7e0] sm:$0xff] %v2021
        %2426 = vst [vmem:[%s2172 + $0x7e8] sm:$0xff] %v2070
        %2427 = vst [vmem:[%s2172 + $0x7f0] sm:$0xff] %v2119
        %2428 = vst [vmem:[%s2172 + $0x7f8] sm:$0xff] %v2168
        %v2429 = vld [vmem:[#allocation3] sm:$0xff]
        %v2430 = vld [vmem:[#allocation3 + $0x8] sm:$0xff]
        %v2431 = vld [vmem:[#allocation3 + $0x10] sm:$0xff]
        %v2432 = vld [vmem:[#allocation3 + $0x18] sm:$0xff]
        %v2433 = vld [vmem:[#allocation3 + $0x20] sm:$0xff]
        %v2434 = vld [vmem:[#allocation3 + $0x28] sm:$0xff]
        %v2435 = vld [vmem:[#allocation3 + $0x30] sm:$0xff]
        %v2436 = vld [vmem:[#allocation3 + $0x38] sm:$0xff]
        %v2437 = vld [vmem:[#allocation3 + $0x40] sm:$0xff]
        %v2438 = vld [vmem:[#allocation3 + $0x48] sm:$0xff]
        %v2439 = vld [vmem:[#allocation3 + $0x50] sm:$0xff]
        %v2440 = vld [vmem:[#allocation3 + $0x58] sm:$0xff]
        %v2441 = vld [vmem:[#allocation3 + $0x60] sm:$0xff]
        %v2442 = vld [vmem:[#allocation3 + $0x68] sm:$0xff]
        %v2443 = vld [vmem:[#allocation3 + $0x70] sm:$0xff]
        %v2444 = vld [vmem:[#allocation3 + $0x78] sm:$0xff]
        %v2445 = vmax.f32 %v1396, %v1445
        %v2446 = vmax.f32 %v2445, %v1494
        %v2447 = vmax.f32 %v2446, %v1543
        %v2448 = vmax.f32 %v2447, %v1592
        %v2449 = vmax.f32 %v2448, %v1641
        %v2450 = vmax.f32 %v2449, %v1690
        %v2451 = vmax.f32 %v2450, %v1739
        %v2452 = vmax.f32 %v2451, %v1788
        %v2453 = vmax.f32 %v2452, %v1837
        %v2454 = vmax.f32 %v2453, %v1886
        %v2455 = vmax.f32 %v2454, %v1935
        %v2456 = vmax.f32 %v2455, %v1984
        %v2457 = vmax.f32 %v2456, %v2033
        %v2458 = vmax.f32 %v2457, %v2082
        %v2459 = vmax.f32 %v2458, %v2131
        %2460 = vmax.xlane.f32.xlu0 %v2459
        %v2461 = vpop.xlane.xlu0 %2460
        %v2462 = vmax.f32 %v1398, %v1447
        %v2463 = vmax.f32 %v2462, %v1496
        %v2464 = vmax.f32 %v2463, %v1545
        %v2465 = vmax.f32 %v2464, %v1594
        %v2466 = vmax.f32 %v2465, %v1643
        %v2467 = vmax.f32 %v2466, %v1692
        %v2468 = vmax.f32 %v2467, %v1741
        %v2469 = vmax.f32 %v2468, %v1790
        %v2470 = vmax.f32 %v2469, %v1839
        %v2471 = vmax.f32 %v2470, %v1888
        %v2472 = vmax.f32 %v2471, %v1937
        %v2473 = vmax.f32 %v2472, %v1986
        %v2474 = vmax.f32 %v2473, %v2035
        %v2475 = vmax.f32 %v2474, %v2084
        %v2476 = vmax.f32 %v2475, %v2133
        %2477 = vmax.xlane.f32.xlu0 %v2476
        %v2478 = vpop.xlane.xlu0 %2477
        %v2479 = vmax.f32 %v1401, %v1450
        %v2480 = vmax.f32 %v2479, %v1499
        %v2481 = vmax.f32 %v2480, %v1548
        %v2482 = vmax.f32 %v2481, %v1597
        %v2483 = vmax.f32 %v2482, %v1646
        %v2484 = vmax.f32 %v2483, %v1695
        %v2485 = vmax.f32 %v2484, %v1744
        %v2486 = vmax.f32 %v2485, %v1793
        %v2487 = vmax.f32 %v2486, %v1842
        %v2488 = vmax.f32 %v2487, %v1891
        %v2489 = vmax.f32 %v2488, %v1940
        %v2490 = vmax.f32 %v2489, %v1989
        %v2491 = vmax.f32 %v2490, %v2038
        %v2492 = vmax.f32 %v2491, %v2087
        %v2493 = vmax.f32 %v2492, %v2136
        %2494 = vmax.xlane.f32.xlu0 %v2493
        %v2495 = vpop.xlane.xlu0 %2494
        %v2496 = vmax.f32 %v1403, %v1452
        %v2497 = vmax.f32 %v2496, %v1501
        %v2498 = vmax.f32 %v2497, %v1550
        %v2499 = vmax.f32 %v2498, %v1599
        %v2500 = vmax.f32 %v2499, %v1648
        %v2501 = vmax.f32 %v2500, %v1697
        %v2502 = vmax.f32 %v2501, %v1746
        %v2503 = vmax.f32 %v2502, %v1795
        %v2504 = vmax.f32 %v2503, %v1844
        %v2505 = vmax.f32 %v2504, %v1893
        %v2506 = vmax.f32 %v2505, %v1942
        %v2507 = vmax.f32 %v2506, %v1991
        %v2508 = vmax.f32 %v2507, %v2040
        %v2509 = vmax.f32 %v2508, %v2089
        %v2510 = vmax.f32 %v2509, %v2138
        %2511 = vmax.xlane.f32.xlu0 %v2510
        %v2512 = vpop.xlane.xlu0 %2511
        %v2513 = vmax.f32 %v1406, %v1455
        %v2514 = vmax.f32 %v2513, %v1504
        %v2515 = vmax.f32 %v2514, %v1553
        %v2516 = vmax.f32 %v2515, %v1602
        %v2517 = vmax.f32 %v2516, %v1651
        %v2518 = vmax.f32 %v2517, %v1700
        %v2519 = vmax.f32 %v2518, %v1749
        %v2520 = vmax.f32 %v2519, %v1798
        %v2521 = vmax.f32 %v2520, %v1847
        %v2522 = vmax.f32 %v2521, %v1896
        %v2523 = vmax.f32 %v2522, %v1945
        %v2524 = vmax.f32 %v2523, %v1994
        %v2525 = vmax.f32 %v2524, %v2043
        %v2526 = vmax.f32 %v2525, %v2092
        %v2527 = vmax.f32 %v2526, %v2141
        %2528 = vmax.xlane.f32.xlu0 %v2527
        %v2529 = vpop.xlane.xlu0 %2528
        %v2530 = vmax.f32 %v1408, %v1457
        %v2531 = vmax.f32 %v2530, %v1506
        %v2532 = vmax.f32 %v2531, %v1555
        %v2533 = vmax.f32 %v2532, %v1604
        %v2534 = vmax.f32 %v2533, %v1653
        %v2535 = vmax.f32 %v2534, %v1702
        %v2536 = vmax.f32 %v2535, %v1751
        %v2537 = vmax.f32 %v2536, %v1800
        %v2538 = vmax.f32 %v2537, %v1849
        %v2539 = vmax.f32 %v2538, %v1898
        %v2540 = vmax.f32 %v2539, %v1947
        %v2541 = vmax.f32 %v2540, %v1996
        %v2542 = vmax.f32 %v2541, %v2045
        %v2543 = vmax.f32 %v2542, %v2094
        %v2544 = vmax.f32 %v2543, %v2143
        %2545 = vmax.xlane.f32.xlu0 %v2544
        %v2546 = vpop.xlane.xlu0 %2545
        %v2547 = vmax.f32 %v1411, %v1460
        %v2548 = vmax.f32 %v2547, %v1509
        %v2549 = vmax.f32 %v2548, %v1558
        %v2550 = vmax.f32 %v2549, %v1607
        %v2551 = vmax.f32 %v2550, %v1656
        %v2552 = vmax.f32 %v2551, %v1705
        %v2553 = vmax.f32 %v2552, %v1754
        %v2554 = vmax.f32 %v2553, %v1803
        %v2555 = vmax.f32 %v2554, %v1852
        %v2556 = vmax.f32 %v2555, %v1901
        %v2557 = vmax.f32 %v2556, %v1950
        %v2558 = vmax.f32 %v2557, %v1999
        %v2559 = vmax.f32 %v2558, %v2048
        %v2560 = vmax.f32 %v2559, %v2097
        %v2561 = vmax.f32 %v2560, %v2146
        %2562 = vmax.xlane.f32.xlu0 %v2561
        %v2563 = vpop.xlane.xlu0 %2562
        %v2564 = vmax.f32 %v1413, %v1462
        %v2565 = vmax.f32 %v2564, %v1511
        %v2566 = vmax.f32 %v2565, %v1560
        %v2567 = vmax.f32 %v2566, %v1609
        %v2568 = vmax.f32 %v2567, %v1658
        %v2569 = vmax.f32 %v2568, %v1707
        %v2570 = vmax.f32 %v2569, %v1756
        %v2571 = vmax.f32 %v2570, %v1805
        %v2572 = vmax.f32 %v2571, %v1854
        %v2573 = vmax.f32 %v2572, %v1903
        %v2574 = vmax.f32 %v2573, %v1952
        %v2575 = vmax.f32 %v2574, %v2001
        %v2576 = vmax.f32 %v2575, %v2050
        %v2577 = vmax.f32 %v2576, %v2099
        %v2578 = vmax.f32 %v2577, %v2148
        %2579 = vmax.xlane.f32.xlu0 %v2578
        %v2580 = vpop.xlane.xlu0 %2579
        %v2581 = vmax.f32 %v1416, %v1465
        %v2582 = vmax.f32 %v2581, %v1514
        %v2583 = vmax.f32 %v2582, %v1563
        %v2584 = vmax.f32 %v2583, %v1612
        %v2585 = vmax.f32 %v2584, %v1661
        %v2586 = vmax.f32 %v2585, %v1710
        %v2587 = vmax.f32 %v2586, %v1759
        %v2588 = vmax.f32 %v2587, %v1808
        %v2589 = vmax.f32 %v2588, %v1857
        %v2590 = vmax.f32 %v2589, %v1906
        %v2591 = vmax.f32 %v2590, %v1955
        %v2592 = vmax.f32 %v2591, %v2004
        %v2593 = vmax.f32 %v2592, %v2053
        %v2594 = vmax.f32 %v2593, %v2102
        %v2595 = vmax.f32 %v2594, %v2151
        %2596 = vmax.xlane.f32.xlu0 %v2595
        %v2597 = vpop.xlane.xlu0 %2596
        %v2598 = vmax.f32 %v1418, %v1467
        %v2599 = vmax.f32 %v2598, %v1516
        %v2600 = vmax.f32 %v2599, %v1565
        %v2601 = vmax.f32 %v2600, %v1614
        %v2602 = vmax.f32 %v2601, %v1663
        %v2603 = vmax.f32 %v2602, %v1712
        %v2604 = vmax.f32 %v2603, %v1761
        %v2605 = vmax.f32 %v2604, %v1810
        %v2606 = vmax.f32 %v2605, %v1859
        %v2607 = vmax.f32 %v2606, %v1908
        %v2608 = vmax.f32 %v2607, %v1957
        %v2609 = vmax.f32 %v2608, %v2006
        %v2610 = vmax.f32 %v2609, %v2055
        %v2611 = vmax.f32 %v2610, %v2104
        %v2612 = vmax.f32 %v2611, %v2153
        %2613 = vmax.xlane.f32.xlu0 %v2612
        %v2614 = vpop.xlane.xlu0 %2613
        %v2615 = vmax.f32 %v1421, %v1470
        %v2616 = vmax.f32 %v2615, %v1519
        %v2617 = vmax.f32 %v2616, %v1568
        %v2618 = vmax.f32 %v2617, %v1617
        %v2619 = vmax.f32 %v2618, %v1666
        %v2620 = vmax.f32 %v2619, %v1715
        %v2621 = vmax.f32 %v2620, %v1764
        %v2622 = vmax.f32 %v2621, %v1813
        %v2623 = vmax.f32 %v2622, %v1862
        %v2624 = vmax.f32 %v2623, %v1911
        %v2625 = vmax.f32 %v2624, %v1960
        %v2626 = vmax.f32 %v2625, %v2009
        %v2627 = vmax.f32 %v2626, %v2058
        %v2628 = vmax.f32 %v2627, %v2107
        %v2629 = vmax.f32 %v2628, %v2156
        %2630 = vmax.xlane.f32.xlu0 %v2629
        %v2631 = vpop.xlane.xlu0 %2630
        %v2632 = vmax.f32 %v1423, %v1472
        %v2633 = vmax.f32 %v2632, %v1521
        %v2634 = vmax.f32 %v2633, %v1570
        %v2635 = vmax.f32 %v2634, %v1619
        %v2636 = vmax.f32 %v2635, %v1668
        %v2637 = vmax.f32 %v2636, %v1717
        %v2638 = vmax.f32 %v2637, %v1766
        %v2639 = vmax.f32 %v2638, %v1815
        %v2640 = vmax.f32 %v2639, %v1864
        %v2641 = vmax.f32 %v2640, %v1913
        %v2642 = vmax.f32 %v2641, %v1962
        %v2643 = vmax.f32 %v2642, %v2011
        %v2644 = vmax.f32 %v2643, %v2060
        %v2645 = vmax.f32 %v2644, %v2109
        %v2646 = vmax.f32 %v2645, %v2158
        %2647 = vmax.xlane.f32.xlu0 %v2646
        %v2648 = vpop.xlane.xlu0 %2647
        %v2649 = vmax.f32 %v1426, %v1475
        %v2650 = vmax.f32 %v2649, %v1524
        %v2651 = vmax.f32 %v2650, %v1573
        %v2652 = vmax.f32 %v2651, %v1622
        %v2653 = vmax.f32 %v2652, %v1671
        %v2654 = vmax.f32 %v2653, %v1720
        %v2655 = vmax.f32 %v2654, %v1769
        %v2656 = vmax.f32 %v2655, %v1818
        %v2657 = vmax.f32 %v2656, %v1867
        %v2658 = vmax.f32 %v2657, %v1916
        %v2659 = vmax.f32 %v2658, %v1965
        %v2660 = vmax.f32 %v2659, %v2014
        %v2661 = vmax.f32 %v2660, %v2063
        %v2662 = vmax.f32 %v2661, %v2112
        %v2663 = vmax.f32 %v2662, %v2161
        %2664 = vmax.xlane.f32.xlu0 %v2663
        %v2665 = vpop.xlane.xlu0 %2664
        %v2666 = vmax.f32 %v1428, %v1477
        %v2667 = vmax.f32 %v2666, %v1526
        %v2668 = vmax.f32 %v2667, %v1575
        %v2669 = vmax.f32 %v2668, %v1624
        %v2670 = vmax.f32 %v2669, %v1673
        %v2671 = vmax.f32 %v2670, %v1722
        %v2672 = vmax.f32 %v2671, %v1771
        %v2673 = vmax.f32 %v2672, %v1820
        %v2674 = vmax.f32 %v2673, %v1869
        %v2675 = vmax.f32 %v2674, %v1918
        %v2676 = vmax.f32 %v2675, %v1967
        %v2677 = vmax.f32 %v2676, %v2016
        %v2678 = vmax.f32 %v2677, %v2065
        %v2679 = vmax.f32 %v2678, %v2114
        %v2680 = vmax.f32 %v2679, %v2163
        %2681 = vmax.xlane.f32.xlu0 %v2680
        %v2682 = vpop.xlane.xlu0 %2681
        %v2683 = vmax.f32 %v1431, %v1480
        %v2684 = vmax.f32 %v2683, %v1529
        %v2685 = vmax.f32 %v2684, %v1578
        %v2686 = vmax.f32 %v2685, %v1627
        %v2687 = vmax.f32 %v2686, %v1676
        %v2688 = vmax.f32 %v2687, %v1725
        %v2689 = vmax.f32 %v2688, %v1774
        %v2690 = vmax.f32 %v2689, %v1823
        %v2691 = vmax.f32 %v2690, %v1872
        %v2692 = vmax.f32 %v2691, %v1921
        %v2693 = vmax.f32 %v2692, %v1970
        %v2694 = vmax.f32 %v2693, %v2019
        %v2695 = vmax.f32 %v2694, %v2068
        %v2696 = vmax.f32 %v2695, %v2117
        %v2697 = vmax.f32 %v2696, %v2166
        %2698 = vmax.xlane.f32.xlu0 %v2697
        %v2699 = vpop.xlane.xlu0 %2698
        %v2700 = vmax.f32 %v1433, %v1482
        %v2701 = vmax.f32 %v2700, %v1531
        %v2702 = vmax.f32 %v2701, %v1580
        %v2703 = vmax.f32 %v2702, %v1629
        %v2704 = vmax.f32 %v2703, %v1678
        %v2705 = vmax.f32 %v2704, %v1727
        %v2706 = vmax.f32 %v2705, %v1776
        %v2707 = vmax.f32 %v2706, %v1825
        %v2708 = vmax.f32 %v2707, %v1874
        %v2709 = vmax.f32 %v2708, %v1923
        %v2710 = vmax.f32 %v2709, %v1972
        %v2711 = vmax.f32 %v2710, %v2021
        %v2712 = vmax.f32 %v2711, %v2070
        %v2713 = vmax.f32 %v2712, %v2119
        %v2714 = vmax.f32 %v2713, %v2168
        %2715 = vmax.xlane.f32.xlu0 %v2714
        %v2716 = vpop.xlane.xlu0 %2715
        %v2717 = vmax.f32 %v2429, %v2461
        %v2718 = vmax.f32 %v2430, %v2478
        %v2719 = vmax.f32 %v2431, %v2495
        %v2720 = vmax.f32 %v2432, %v2512
        %v2721 = vmax.f32 %v2433, %v2529
        %v2722 = vmax.f32 %v2434, %v2546
        %v2723 = vmax.f32 %v2435, %v2563
        %v2724 = vmax.f32 %v2436, %v2580
        %v2725 = vmax.f32 %v2437, %v2597
        %v2726 = vmax.f32 %v2438, %v2614
        %v2727 = vmax.f32 %v2439, %v2631
        %v2728 = vmax.f32 %v2440, %v2648
        %v2729 = vmax.f32 %v2441, %v2665
        %v2730 = vmax.f32 %v2442, %v2682
        %v2731 = vmax.f32 %v2443, %v2699
        %v2732 = vmax.f32 %v2444, %v2716
        %v2733 = vld [vmem:[#allocation4] sm:$0xff]
        %v2734 = vld [vmem:[#allocation4 + $0x8] sm:$0xff]
        %v2735 = vld [vmem:[#allocation4 + $0x10] sm:$0xff]
        %v2736 = vld [vmem:[#allocation4 + $0x18] sm:$0xff]
        %v2737 = vld [vmem:[#allocation4 + $0x20] sm:$0xff]
        %v2738 = vld [vmem:[#allocation4 + $0x28] sm:$0xff]
        %v2739 = vld [vmem:[#allocation4 + $0x30] sm:$0xff]
        %v2740 = vld [vmem:[#allocation4 + $0x38] sm:$0xff]
        %v2741 = vld [vmem:[#allocation4 + $0x40] sm:$0xff]
        %v2742 = vld [vmem:[#allocation4 + $0x48] sm:$0xff]
        %v2743 = vld [vmem:[#allocation4 + $0x50] sm:$0xff]
        %v2744 = vld [vmem:[#allocation4 + $0x58] sm:$0xff]
        %v2745 = vld [vmem:[#allocation4 + $0x60] sm:$0xff]
        %v2746 = vld [vmem:[#allocation4 + $0x68] sm:$0xff]
        %v2747 = vld [vmem:[#allocation4 + $0x70] sm:$0xff]
        %v2748 = vld [vmem:[#allocation4 + $0x78] sm:$0xff]
        %v2749 = vsub.f32 %v2429, %v2717
        %v2750 = vsub.f32 %v2430, %v2718
        %v2751 = vsub.f32 %v2431, %v2719
        %v2752 = vsub.f32 %v2432, %v2720
        %v2753 = vsub.f32 %v2433, %v2721
        %v2754 = vsub.f32 %v2434, %v2722
        %v2755 = vsub.f32 %v2435, %v2723
        %v2756 = vsub.f32 %v2436, %v2724
        %v2757 = vsub.f32 %v2437, %v2725
        %v2758 = vsub.f32 %v2438, %v2726
        %v2759 = vsub.f32 %v2439, %v2727
        %v2760 = vsub.f32 %v2440, %v2728
        %v2761 = vsub.f32 %v2441, %v2729
        %v2762 = vsub.f32 %v2442, %v2730
        %v2763 = vsub.f32 %v2443, %v2731
        %v2764 = vsub.f32 %v2444, %v2732
        %v2765 = vmul.f32 %v2749, 1.442695
        %v2766 = vpow.pop %v2765
        %v2767 = vmul.f32 %v2750, 1.442695
        %v2768 = vpow.pop %v2767
        %v2769 = vmul.f32 %v2751, 1.442695
        %v2770 = vpow.pop %v2769
        %v2771 = vmul.f32 %v2752, 1.442695
        %v2772 = vpow.pop %v2771
        %v2773 = vmul.f32 %v2753, 1.442695
        %v2774 = vpow.pop %v2773
        %v2775 = vmul.f32 %v2754, 1.442695
        %v2776 = vpow.pop %v2775
        %v2777 = vmul.f32 %v2755, 1.442695
        %v2778 = vpow.pop %v2777
        %v2779 = vmul.f32 %v2756, 1.442695
        %v2780 = vpow.pop %v2779
        %v2781 = vmul.f32 %v2757, 1.442695
        %v2782 = vpow.pop %v2781
        %v2783 = vmul.f32 %v2758, 1.442695
        %v2784 = vpow.pop %v2783
        %v2785 = vmul.f32 %v2759, 1.442695
        %v2786 = vpow.pop %v2785
        %v2787 = vmul.f32 %v2760, 1.442695
        %v2788 = vpow.pop %v2787
        %v2789 = vmul.f32 %v2761, 1.442695
        %v2790 = vpow.pop %v2789
        %v2791 = vmul.f32 %v2762, 1.442695
        %v2792 = vpow.pop %v2791
        %v2793 = vmul.f32 %v2763, 1.442695
        %v2794 = vpow.pop %v2793
        %v2795 = vmul.f32 %v2764, 1.442695
        %v2796 = vpow.pop %v2795
        %v2797 = vmul.f32 %v2733, %v2766
        %v2798 = vmul.f32 %v2734, %v2768
        %v2799 = vmul.f32 %v2735, %v2770
        %v2800 = vmul.f32 %v2736, %v2772
        %v2801 = vmul.f32 %v2737, %v2774
        %v2802 = vmul.f32 %v2738, %v2776
        %v2803 = vmul.f32 %v2739, %v2778
        %v2804 = vmul.f32 %v2740, %v2780
        %v2805 = vmul.f32 %v2741, %v2782
        %v2806 = vmul.f32 %v2742, %v2784
        %v2807 = vmul.f32 %v2743, %v2786
        %v2808 = vmul.f32 %v2744, %v2788
        %v2809 = vmul.f32 %v2745, %v2790
        %v2810 = vmul.f32 %v2746, %v2792
        %v2811 = vmul.f32 %v2747, %v2794
        %v2812 = vmul.f32 %v2748, %v2796
        %2814 = vset.pattern.permute.xlu0 0
        %2815 = vperm.xlu0 %2814, %v2717
        %v2816 = vpop.permute.xlu0 %2815
        %2819 = vset.pattern.permute.xlu0 0
        %2820 = vperm.xlu0 %2819, %v2718
        %v2821 = vpop.permute.xlu0 %2820
        %2824 = vset.pattern.permute.xlu0 0
        %2825 = vperm.xlu0 %2824, %v2719
        %v2826 = vpop.permute.xlu0 %2825
        %2829 = vset.pattern.permute.xlu0 0
        %2830 = vperm.xlu0 %2829, %v2720
        %v2831 = vpop.permute.xlu0 %2830
        %2834 = vset.pattern.permute.xlu0 0
        %2835 = vperm.xlu0 %2834, %v2721
        %v2836 = vpop.permute.xlu0 %2835
        %2839 = vset.pattern.permute.xlu0 0
        %2840 = vperm.xlu0 %2839, %v2722
        %v2841 = vpop.permute.xlu0 %2840
        %2844 = vset.pattern.permute.xlu0 0
        %2845 = vperm.xlu0 %2844, %v2723
        %v2846 = vpop.permute.xlu0 %2845
        %2849 = vset.pattern.permute.xlu0 0
        %2850 = vperm.xlu0 %2849, %v2724
        %v2851 = vpop.permute.xlu0 %2850
        %2854 = vset.pattern.permute.xlu0 0
        %2855 = vperm.xlu0 %2854, %v2725
        %v2856 = vpop.permute.xlu0 %2855
        %2859 = vset.pattern.permute.xlu0 0
        %2860 = vperm.xlu0 %2859, %v2726
        %v2861 = vpop.permute.xlu0 %2860
        %2864 = vset.pattern.permute.xlu0 0
        %2865 = vperm.xlu0 %2864, %v2727
        %v2866 = vpop.permute.xlu0 %2865
        %2869 = vset.pattern.permute.xlu0 0
        %2870 = vperm.xlu0 %2869, %v2728
        %v2871 = vpop.permute.xlu0 %2870
        %2874 = vset.pattern.permute.xlu0 0
        %2875 = vperm.xlu0 %2874, %v2729
        %v2876 = vpop.permute.xlu0 %2875
        %2879 = vset.pattern.permute.xlu0 0
        %2880 = vperm.xlu0 %2879, %v2730
        %v2881 = vpop.permute.xlu0 %2880
        %2884 = vset.pattern.permute.xlu0 0
        %2885 = vperm.xlu0 %2884, %v2731
        %v2886 = vpop.permute.xlu0 %2885
        %2889 = vset.pattern.permute.xlu0 0
        %2890 = vperm.xlu0 %2889, %v2732
        %v2891 = vpop.permute.xlu0 %2890
        %v2893 = vsub.f32 %v1396, %v2816
        %v2894 = vsub.f32 %v1445, %v2816
        %v2895 = vsub.f32 %v1494, %v2816
        %v2896 = vsub.f32 %v1543, %v2816
        %v2897 = vsub.f32 %v1592, %v2816
        %v2898 = vsub.f32 %v1641, %v2816
        %v2899 = vsub.f32 %v1690, %v2816
        %v2900 = vsub.f32 %v1739, %v2816
        %v2901 = vsub.f32 %v1788, %v2816
        %v2902 = vsub.f32 %v1837, %v2816
        %v2903 = vsub.f32 %v1886, %v2816
        %v2904 = vsub.f32 %v1935, %v2816
        %v2905 = vsub.f32 %v1984, %v2816
        %v2906 = vsub.f32 %v2033, %v2816
        %v2907 = vsub.f32 %v2082, %v2816
        %v2908 = vsub.f32 %v2131, %v2816
        %v2909 = vsub.f32 %v1398, %v2821
        %v2910 = vsub.f32 %v1447, %v2821
        %v2911 = vsub.f32 %v1496, %v2821
        %v2912 = vsub.f32 %v1545, %v2821
        %v2913 = vsub.f32 %v1594, %v2821
        %v2914 = vsub.f32 %v1643, %v2821
        %v2915 = vsub.f32 %v1692, %v2821
        %v2916 = vsub.f32 %v1741, %v2821
        %v2917 = vsub.f32 %v1790, %v2821
        %v2918 = vsub.f32 %v1839, %v2821
        %v2919 = vsub.f32 %v1888, %v2821
        %v2920 = vsub.f32 %v1937, %v2821
        %v2921 = vsub.f32 %v1986, %v2821
        %v2922 = vsub.f32 %v2035, %v2821
        %v2923 = vsub.f32 %v2084, %v2821
        %v2924 = vsub.f32 %v2133, %v2821
        %v2925 = vsub.f32 %v1401, %v2826
        %v2926 = vsub.f32 %v1450, %v2826
        %v2927 = vsub.f32 %v1499, %v2826
        %v2928 = vsub.f32 %v1548, %v2826
        %v2929 = vsub.f32 %v1597, %v2826
        %v2930 = vsub.f32 %v1646, %v2826
        %v2931 = vsub.f32 %v1695, %v2826
        %v2932 = vsub.f32 %v1744, %v2826
        %v2933 = vsub.f32 %v1793, %v2826
        %v2934 = vsub.f32 %v1842, %v2826
        %v2935 = vsub.f32 %v1891, %v2826
        %v2936 = vsub.f32 %v1940, %v2826
        %v2937 = vsub.f32 %v1989, %v2826
        %v2938 = vsub.f32 %v2038, %v2826
        %v2939 = vsub.f32 %v2087, %v2826
        %v2940 = vsub.f32 %v2136, %v2826
        %v2941 = vsub.f32 %v1403, %v2831
        %v2942 = vsub.f32 %v1452, %v2831
        %v2943 = vsub.f32 %v1501, %v2831
        %v2944 = vsub.f32 %v1550, %v2831
        %v2945 = vsub.f32 %v1599, %v2831
        %v2946 = vsub.f32 %v1648, %v2831
        %v2947 = vsub.f32 %v1697, %v2831
        %v2948 = vsub.f32 %v1746, %v2831
        %v2949 = vsub.f32 %v1795, %v2831
        %v2950 = vsub.f32 %v1844, %v2831
        %v2951 = vsub.f32 %v1893, %v2831
        %v2952 = vsub.f32 %v1942, %v2831
        %v2953 = vsub.f32 %v1991, %v2831
        %v2954 = vsub.f32 %v2040, %v2831
        %v2955 = vsub.f32 %v2089, %v2831
        %v2956 = vsub.f32 %v2138, %v2831
        %v2957 = vsub.f32 %v1406, %v2836
        %v2958 = vsub.f32 %v1455, %v2836
        %v2959 = vsub.f32 %v1504, %v2836
        %v2960 = vsub.f32 %v1553, %v2836
        %v2961 = vsub.f32 %v1602, %v2836
        %v2962 = vsub.f32 %v1651, %v2836
        %v2963 = vsub.f32 %v1700, %v2836
        %v2964 = vsub.f32 %v1749, %v2836
        %v2965 = vsub.f32 %v1798, %v2836
        %v2966 = vsub.f32 %v1847, %v2836
        %v2967 = vsub.f32 %v1896, %v2836
        %v2968 = vsub.f32 %v1945, %v2836
        %v2969 = vsub.f32 %v1994, %v2836
        %v2970 = vsub.f32 %v2043, %v2836
        %v2971 = vsub.f32 %v2092, %v2836
        %v2972 = vsub.f32 %v2141, %v2836
        %v2973 = vsub.f32 %v1408, %v2841
        %v2974 = vsub.f32 %v1457, %v2841
        %v2975 = vsub.f32 %v1506, %v2841
        %v2976 = vsub.f32 %v1555, %v2841
        %v2977 = vsub.f32 %v1604, %v2841
        %v2978 = vsub.f32 %v1653, %v2841
        %v2979 = vsub.f32 %v1702, %v2841
        %v2980 = vsub.f32 %v1751, %v2841
        %v2981 = vsub.f32 %v1800, %v2841
        %v2982 = vsub.f32 %v1849, %v2841
        %v2983 = vsub.f32 %v1898, %v2841
        %v2984 = vsub.f32 %v1947, %v2841
        %v2985 = vsub.f32 %v1996, %v2841
        %v2986 = vsub.f32 %v2045, %v2841
        %v2987 = vsub.f32 %v2094, %v2841
        %v2988 = vsub.f32 %v2143, %v2841
        %v2989 = vsub.f32 %v1411, %v2846
        %v2990 = vsub.f32 %v1460, %v2846
        %v2991 = vsub.f32 %v1509, %v2846
        %v2992 = vsub.f32 %v1558, %v2846
        %v2993 = vsub.f32 %v1607, %v2846
        %v2994 = vsub.f32 %v1656, %v2846
        %v2995 = vsub.f32 %v1705, %v2846
        %v2996 = vsub.f32 %v1754, %v2846
        %v2997 = vsub.f32 %v1803, %v2846
        %v2998 = vsub.f32 %v1852, %v2846
        %v2999 = vsub.f32 %v1901, %v2846
        %v3000 = vsub.f32 %v1950, %v2846
        %v3001 = vsub.f32 %v1999, %v2846
        %v3002 = vsub.f32 %v2048, %v2846
        %v3003 = vsub.f32 %v2097, %v2846
        %v3004 = vsub.f32 %v2146, %v2846
        %v3005 = vsub.f32 %v1413, %v2851
        %v3006 = vsub.f32 %v1462, %v2851
        %v3007 = vsub.f32 %v1511, %v2851
        %v3008 = vsub.f32 %v1560, %v2851
        %v3009 = vsub.f32 %v1609, %v2851
        %v3010 = vsub.f32 %v1658, %v2851
        %v3011 = vsub.f32 %v1707, %v2851
        %v3012 = vsub.f32 %v1756, %v2851
        %v3013 = vsub.f32 %v1805, %v2851
        %v3014 = vsub.f32 %v1854, %v2851
        %v3015 = vsub.f32 %v1903, %v2851
        %v3016 = vsub.f32 %v1952, %v2851
        %v3017 = vsub.f32 %v2001, %v2851
        %v3018 = vsub.f32 %v2050, %v2851
        %v3019 = vsub.f32 %v2099, %v2851
        %v3020 = vsub.f32 %v2148, %v2851
        %v3021 = vsub.f32 %v1416, %v2856
        %v3022 = vsub.f32 %v1465, %v2856
        %v3023 = vsub.f32 %v1514, %v2856
        %v3024 = vsub.f32 %v1563, %v2856
        %v3025 = vsub.f32 %v1612, %v2856
        %v3026 = vsub.f32 %v1661, %v2856
        %v3027 = vsub.f32 %v1710, %v2856
        %v3028 = vsub.f32 %v1759, %v2856
        %v3029 = vsub.f32 %v1808, %v2856
        %v3030 = vsub.f32 %v1857, %v2856
        %v3031 = vsub.f32 %v1906, %v2856
        %v3032 = vsub.f32 %v1955, %v2856
        %v3033 = vsub.f32 %v2004, %v2856
        %v3034 = vsub.f32 %v2053, %v2856
        %v3035 = vsub.f32 %v2102, %v2856
        %v3036 = vsub.f32 %v2151, %v2856
        %v3037 = vsub.f32 %v1418, %v2861
        %v3038 = vsub.f32 %v1467, %v2861
        %v3039 = vsub.f32 %v1516, %v2861
        %v3040 = vsub.f32 %v1565, %v2861
        %v3041 = vsub.f32 %v1614, %v2861
        %v3042 = vsub.f32 %v1663, %v2861
        %v3043 = vsub.f32 %v1712, %v2861
        %v3044 = vsub.f32 %v1761, %v2861
        %v3045 = vsub.f32 %v1810, %v2861
        %v3046 = vsub.f32 %v1859, %v2861
        %v3047 = vsub.f32 %v1908, %v2861
        %v3048 = vsub.f32 %v1957, %v2861
        %v3049 = vsub.f32 %v2006, %v2861
        %v3050 = vsub.f32 %v2055, %v2861
        %v3051 = vsub.f32 %v2104, %v2861
        %v3052 = vsub.f32 %v2153, %v2861
        %v3053 = vsub.f32 %v1421, %v2866
        %v3054 = vsub.f32 %v1470, %v2866
        %v3055 = vsub.f32 %v1519, %v2866
        %v3056 = vsub.f32 %v1568, %v2866
        %v3057 = vsub.f32 %v1617, %v2866
        %v3058 = vsub.f32 %v1666, %v2866
        %v3059 = vsub.f32 %v1715, %v2866
        %v3060 = vsub.f32 %v1764, %v2866
        %v3061 = vsub.f32 %v1813, %v2866
        %v3062 = vsub.f32 %v1862, %v2866
        %v3063 = vsub.f32 %v1911, %v2866
        %v3064 = vsub.f32 %v1960, %v2866
        %v3065 = vsub.f32 %v2009, %v2866
        %v3066 = vsub.f32 %v2058, %v2866
        %v3067 = vsub.f32 %v2107, %v2866
        %v3068 = vsub.f32 %v2156, %v2866
        %v3069 = vsub.f32 %v1423, %v2871
        %v3070 = vsub.f32 %v1472, %v2871
        %v3071 = vsub.f32 %v1521, %v2871
        %v3072 = vsub.f32 %v1570, %v2871
        %v3073 = vsub.f32 %v1619, %v2871
        %v3074 = vsub.f32 %v1668, %v2871
        %v3075 = vsub.f32 %v1717, %v2871
        %v3076 = vsub.f32 %v1766, %v2871
        %v3077 = vsub.f32 %v1815, %v2871
        %v3078 = vsub.f32 %v1864, %v2871
        %v3079 = vsub.f32 %v1913, %v2871
        %v3080 = vsub.f32 %v1962, %v2871
        %v3081 = vsub.f32 %v2011, %v2871
        %v3082 = vsub.f32 %v2060, %v2871
        %v3083 = vsub.f32 %v2109, %v2871
        %v3084 = vsub.f32 %v2158, %v2871
        %v3085 = vsub.f32 %v1426, %v2876
        %v3086 = vsub.f32 %v1475, %v2876
        %v3087 = vsub.f32 %v1524, %v2876
        %v3088 = vsub.f32 %v1573, %v2876
        %v3089 = vsub.f32 %v1622, %v2876
        %v3090 = vsub.f32 %v1671, %v2876
        %v3091 = vsub.f32 %v1720, %v2876
        %v3092 = vsub.f32 %v1769, %v2876
        %v3093 = vsub.f32 %v1818, %v2876
        %v3094 = vsub.f32 %v1867, %v2876
        %v3095 = vsub.f32 %v1916, %v2876
        %v3096 = vsub.f32 %v1965, %v2876
        %v3097 = vsub.f32 %v2014, %v2876
        %v3098 = vsub.f32 %v2063, %v2876
        %v3099 = vsub.f32 %v2112, %v2876
        %v3100 = vsub.f32 %v2161, %v2876
        %v3101 = vsub.f32 %v1428, %v2881
        %v3102 = vsub.f32 %v1477, %v2881
        %v3103 = vsub.f32 %v1526, %v2881
        %v3104 = vsub.f32 %v1575, %v2881
        %v3105 = vsub.f32 %v1624, %v2881
        %v3106 = vsub.f32 %v1673, %v2881
        %v3107 = vsub.f32 %v1722, %v2881
        %v3108 = vsub.f32 %v1771, %v2881
        %v3109 = vsub.f32 %v1820, %v2881
        %v3110 = vsub.f32 %v1869, %v2881
        %v3111 = vsub.f32 %v1918, %v2881
        %v3112 = vsub.f32 %v1967, %v2881
        %v3113 = vsub.f32 %v2016, %v2881
        %v3114 = vsub.f32 %v2065, %v2881
        %v3115 = vsub.f32 %v2114, %v2881
        %v3116 = vsub.f32 %v2163, %v2881
        %v3117 = vsub.f32 %v1431, %v2886
        %v3118 = vsub.f32 %v1480, %v2886
        %v3119 = vsub.f32 %v1529, %v2886
        %v3120 = vsub.f32 %v1578, %v2886
        %v3121 = vsub.f32 %v1627, %v2886
        %v3122 = vsub.f32 %v1676, %v2886
        %v3123 = vsub.f32 %v1725, %v2886
        %v3124 = vsub.f32 %v1774, %v2886
        %v3125 = vsub.f32 %v1823, %v2886
        %v3126 = vsub.f32 %v1872, %v2886
        %v3127 = vsub.f32 %v1921, %v2886
        %v3128 = vsub.f32 %v1970, %v2886
        %v3129 = vsub.f32 %v2019, %v2886
        %v3130 = vsub.f32 %v2068, %v2886
        %v3131 = vsub.f32 %v2117, %v2886
        %v3132 = vsub.f32 %v2166, %v2886
        %v3133 = vsub.f32 %v1433, %v2891
        %v3134 = vsub.f32 %v1482, %v2891
        %v3135 = vsub.f32 %v1531, %v2891
        %v3136 = vsub.f32 %v1580, %v2891
        %v3137 = vsub.f32 %v1629, %v2891
        %v3138 = vsub.f32 %v1678, %v2891
        %v3139 = vsub.f32 %v1727, %v2891
        %v3140 = vsub.f32 %v1776, %v2891
        %v3141 = vsub.f32 %v1825, %v2891
        %v3142 = vsub.f32 %v1874, %v2891
        %v3143 = vsub.f32 %v1923, %v2891
        %v3144 = vsub.f32 %v1972, %v2891
        %v3145 = vsub.f32 %v2021, %v2891
        %v3146 = vsub.f32 %v2070, %v2891
        %v3147 = vsub.f32 %v2119, %v2891
        %v3148 = vsub.f32 %v2168, %v2891
        %v3149 = vmul.f32 %v2893, 1.442695
        %v3150 = vpow.pop %v3149
        %v3151 = vmul.f32 %v2894, 1.442695
        %v3152 = vpow.pop %v3151
        %v3153 = vmul.f32 %v2895, 1.442695
        %v3154 = vpow.pop %v3153
        %v3155 = vmul.f32 %v2896, 1.442695
        %v3156 = vpow.pop %v3155
        %v3157 = vmul.f32 %v2897, 1.442695
        %v3158 = vpow.pop %v3157
        %v3159 = vmul.f32 %v2898, 1.442695
        %v3160 = vpow.pop %v3159
        %v3161 = vmul.f32 %v2899, 1.442695
        %v3162 = vpow.pop %v3161
        %v3163 = vmul.f32 %v2900, 1.442695
        %v3164 = vpow.pop %v3163
        %v3165 = vmul.f32 %v2901, 1.442695
        %v3166 = vpow.pop %v3165
        %v3167 = vmul.f32 %v2902, 1.442695
        %v3168 = vpow.pop %v3167
        %v3169 = vmul.f32 %v2903, 1.442695
        %v3170 = vpow.pop %v3169
        %v3171 = vmul.f32 %v2904, 1.442695
        %v3172 = vpow.pop %v3171
        %v3173 = vmul.f32 %v2905, 1.442695
        %v3174 = vpow.pop %v3173
        %v3175 = vmul.f32 %v2906, 1.442695
        %v3176 = vpow.pop %v3175
        %v3177 = vmul.f32 %v2907, 1.442695
        %v3178 = vpow.pop %v3177
        %v3179 = vmul.f32 %v2908, 1.442695
        %v3180 = vpow.pop %v3179
        %v3181 = vmul.f32 %v2909, 1.442695
        %v3182 = vpow.pop %v3181
        %v3183 = vmul.f32 %v2910, 1.442695
        %v3184 = vpow.pop %v3183
        %v3185 = vmul.f32 %v2911, 1.442695
        %v3186 = vpow.pop %v3185
        %v3187 = vmul.f32 %v2912, 1.442695
        %v3188 = vpow.pop %v3187
        %v3189 = vmul.f32 %v2913, 1.442695
        %v3190 = vpow.pop %v3189
        %v3191 = vmul.f32 %v2914, 1.442695
        %v3192 = vpow.pop %v3191
        %v3193 = vmul.f32 %v2915, 1.442695
        %v3194 = vpow.pop %v3193
        %v3195 = vmul.f32 %v2916, 1.442695
        %v3196 = vpow.pop %v3195
        %v3197 = vmul.f32 %v2917, 1.442695
        %v3198 = vpow.pop %v3197
        %v3199 = vmul.f32 %v2918, 1.442695
        %v3200 = vpow.pop %v3199
        %v3201 = vmul.f32 %v2919, 1.442695
        %v3202 = vpow.pop %v3201
        %v3203 = vmul.f32 %v2920, 1.442695
        %v3204 = vpow.pop %v3203
        %v3205 = vmul.f32 %v2921, 1.442695
        %v3206 = vpow.pop %v3205
        %v3207 = vmul.f32 %v2922, 1.442695
        %v3208 = vpow.pop %v3207
        %v3209 = vmul.f32 %v2923, 1.442695
        %v3210 = vpow.pop %v3209
        %v3211 = vmul.f32 %v2924, 1.442695
        %v3212 = vpow.pop %v3211
        %v3213 = vmul.f32 %v2925, 1.442695
        %v3214 = vpow.pop %v3213
        %v3215 = vmul.f32 %v2926, 1.442695
        %v3216 = vpow.pop %v3215
        %v3217 = vmul.f32 %v2927, 1.442695
        %v3218 = vpow.pop %v3217
        %v3219 = vmul.f32 %v2928, 1.442695
        %v3220 = vpow.pop %v3219
        %v3221 = vmul.f32 %v2929, 1.442695
        %v3222 = vpow.pop %v3221
        %v3223 = vmul.f32 %v2930, 1.442695
        %v3224 = vpow.pop %v3223
        %v3225 = vmul.f32 %v2931, 1.442695
        %v3226 = vpow.pop %v3225
        %v3227 = vmul.f32 %v2932, 1.442695
        %v3228 = vpow.pop %v3227
        %v3229 = vmul.f32 %v2933, 1.442695
        %v3230 = vpow.pop %v3229
        %v3231 = vmul.f32 %v2934, 1.442695
        %v3232 = vpow.pop %v3231
        %v3233 = vmul.f32 %v2935, 1.442695
        %v3234 = vpow.pop %v3233
        %v3235 = vmul.f32 %v2936, 1.442695
        %v3236 = vpow.pop %v3235
        %v3237 = vmul.f32 %v2937, 1.442695
        %v3238 = vpow.pop %v3237
        %v3239 = vmul.f32 %v2938, 1.442695
        %v3240 = vpow.pop %v3239
        %v3241 = vmul.f32 %v2939, 1.442695
        %v3242 = vpow.pop %v3241
        %v3243 = vmul.f32 %v2940, 1.442695
        %v3244 = vpow.pop %v3243
        %v3245 = vmul.f32 %v2941, 1.442695
        %v3246 = vpow.pop %v3245
        %v3247 = vmul.f32 %v2942, 1.442695
        %v3248 = vpow.pop %v3247
        %v3249 = vmul.f32 %v2943, 1.442695
        %v3250 = vpow.pop %v3249
        %v3251 = vmul.f32 %v2944, 1.442695
        %v3252 = vpow.pop %v3251
        %v3253 = vmul.f32 %v2945, 1.442695
        %v3254 = vpow.pop %v3253
        %v3255 = vmul.f32 %v2946, 1.442695
        %v3256 = vpow.pop %v3255
        %v3257 = vmul.f32 %v2947, 1.442695
        %v3258 = vpow.pop %v3257
        %v3259 = vmul.f32 %v2948, 1.442695
        %v3260 = vpow.pop %v3259
        %v3261 = vmul.f32 %v2949, 1.442695
        %v3262 = vpow.pop %v3261
        %v3263 = vmul.f32 %v2950, 1.442695
        %v3264 = vpow.pop %v3263
        %v3265 = vmul.f32 %v2951, 1.442695
        %v3266 = vpow.pop %v3265
        %v3267 = vmul.f32 %v2952, 1.442695
        %v3268 = vpow.pop %v3267
        %v3269 = vmul.f32 %v2953, 1.442695
        %v3270 = vpow.pop %v3269
        %v3271 = vmul.f32 %v2954, 1.442695
        %v3272 = vpow.pop %v3271
        %v3273 = vmul.f32 %v2955, 1.442695
        %v3274 = vpow.pop %v3273
        %v3275 = vmul.f32 %v2956, 1.442695
        %v3276 = vpow.pop %v3275
        %v3277 = vmul.f32 %v2957, 1.442695
        %v3278 = vpow.pop %v3277
        %v3279 = vmul.f32 %v2958, 1.442695
        %v3280 = vpow.pop %v3279
        %v3281 = vmul.f32 %v2959, 1.442695
        %v3282 = vpow.pop %v3281
        %v3283 = vmul.f32 %v2960, 1.442695
        %v3284 = vpow.pop %v3283
        %v3285 = vmul.f32 %v2961, 1.442695
        %v3286 = vpow.pop %v3285
        %v3287 = vmul.f32 %v2962, 1.442695
        %v3288 = vpow.pop %v3287
        %v3289 = vmul.f32 %v2963, 1.442695
        %v3290 = vpow.pop %v3289
        %v3291 = vmul.f32 %v2964, 1.442695
        %v3292 = vpow.pop %v3291
        %v3293 = vmul.f32 %v2965, 1.442695
        %v3294 = vpow.pop %v3293
        %v3295 = vmul.f32 %v2966, 1.442695
        %v3296 = vpow.pop %v3295
        %v3297 = vmul.f32 %v2967, 1.442695
        %v3298 = vpow.pop %v3297
        %v3299 = vmul.f32 %v2968, 1.442695
        %v3300 = vpow.pop %v3299
        %v3301 = vmul.f32 %v2969, 1.442695
        %v3302 = vpow.pop %v3301
        %v3303 = vmul.f32 %v2970, 1.442695
        %v3304 = vpow.pop %v3303
        %v3305 = vmul.f32 %v2971, 1.442695
        %v3306 = vpow.pop %v3305
        %v3307 = vmul.f32 %v2972, 1.442695
        %v3308 = vpow.pop %v3307
        %v3309 = vmul.f32 %v2973, 1.442695
        %v3310 = vpow.pop %v3309
        %v3311 = vmul.f32 %v2974, 1.442695
        %v3312 = vpow.pop %v3311
        %v3313 = vmul.f32 %v2975, 1.442695
        %v3314 = vpow.pop %v3313
        %v3315 = vmul.f32 %v2976, 1.442695
        %v3316 = vpow.pop %v3315
        %v3317 = vmul.f32 %v2977, 1.442695
        %v3318 = vpow.pop %v3317
        %v3319 = vmul.f32 %v2978, 1.442695
        %v3320 = vpow.pop %v3319
        %v3321 = vmul.f32 %v2979, 1.442695
        %v3322 = vpow.pop %v3321
        %v3323 = vmul.f32 %v2980, 1.442695
        %v3324 = vpow.pop %v3323
        %v3325 = vmul.f32 %v2981, 1.442695
        %v3326 = vpow.pop %v3325
        %v3327 = vmul.f32 %v2982, 1.442695
        %v3328 = vpow.pop %v3327
        %v3329 = vmul.f32 %v2983, 1.442695
        %v3330 = vpow.pop %v3329
        %v3331 = vmul.f32 %v2984, 1.442695
        %v3332 = vpow.pop %v3331
        %v3333 = vmul.f32 %v2985, 1.442695
        %v3334 = vpow.pop %v3333
        %v3335 = vmul.f32 %v2986, 1.442695
        %v3336 = vpow.pop %v3335
        %v3337 = vmul.f32 %v2987, 1.442695
        %v3338 = vpow.pop %v3337
        %v3339 = vmul.f32 %v2988, 1.442695
        %v3340 = vpow.pop %v3339
        %v3341 = vmul.f32 %v2989, 1.442695
        %v3342 = vpow.pop %v3341
        %v3343 = vmul.f32 %v2990, 1.442695
        %v3344 = vpow.pop %v3343
        %v3345 = vmul.f32 %v2991, 1.442695
        %v3346 = vpow.pop %v3345
        %v3347 = vmul.f32 %v2992, 1.442695
        %v3348 = vpow.pop %v3347
        %v3349 = vmul.f32 %v2993, 1.442695
        %v3350 = vpow.pop %v3349
        %v3351 = vmul.f32 %v2994, 1.442695
        %v3352 = vpow.pop %v3351
        %v3353 = vmul.f32 %v2995, 1.442695
        %v3354 = vpow.pop %v3353
        %v3355 = vmul.f32 %v2996, 1.442695
        %v3356 = vpow.pop %v3355
        %v3357 = vmul.f32 %v2997, 1.442695
        %v3358 = vpow.pop %v3357
        %v3359 = vmul.f32 %v2998, 1.442695
        %v3360 = vpow.pop %v3359
        %v3361 = vmul.f32 %v2999, 1.442695
        %v3362 = vpow.pop %v3361
        %v3363 = vmul.f32 %v3000, 1.442695
        %v3364 = vpow.pop %v3363
        %v3365 = vmul.f32 %v3001, 1.442695
        %v3366 = vpow.pop %v3365
        %v3367 = vmul.f32 %v3002, 1.442695
        %v3368 = vpow.pop %v3367
        %v3369 = vmul.f32 %v3003, 1.442695
        %v3370 = vpow.pop %v3369
        %v3371 = vmul.f32 %v3004, 1.442695
        %v3372 = vpow.pop %v3371
        %v3373 = vmul.f32 %v3005, 1.442695
        %v3374 = vpow.pop %v3373
        %v3375 = vmul.f32 %v3006, 1.442695
        %v3376 = vpow.pop %v3375
        %v3377 = vmul.f32 %v3007, 1.442695
        %v3378 = vpow.pop %v3377
        %v3379 = vmul.f32 %v3008, 1.442695
        %v3380 = vpow.pop %v3379
        %v3381 = vmul.f32 %v3009, 1.442695
        %v3382 = vpow.pop %v3381
        %v3383 = vmul.f32 %v3010, 1.442695
        %v3384 = vpow.pop %v3383
        %v3385 = vmul.f32 %v3011, 1.442695
        %v3386 = vpow.pop %v3385
        %v3387 = vmul.f32 %v3012, 1.442695
        %v3388 = vpow.pop %v3387
        %v3389 = vmul.f32 %v3013, 1.442695
        %v3390 = vpow.pop %v3389
        %v3391 = vmul.f32 %v3014, 1.442695
        %v3392 = vpow.pop %v3391
        %v3393 = vmul.f32 %v3015, 1.442695
        %v3394 = vpow.pop %v3393
        %v3395 = vmul.f32 %v3016, 1.442695
        %v3396 = vpow.pop %v3395
        %v3397 = vmul.f32 %v3017, 1.442695
        %v3398 = vpow.pop %v3397
        %v3399 = vmul.f32 %v3018, 1.442695
        %v3400 = vpow.pop %v3399
        %v3401 = vmul.f32 %v3019, 1.442695
        %v3402 = vpow.pop %v3401
        %v3403 = vmul.f32 %v3020, 1.442695
        %v3404 = vpow.pop %v3403
        %v3405 = vmul.f32 %v3021, 1.442695
        %v3406 = vpow.pop %v3405
        %v3407 = vmul.f32 %v3022, 1.442695
        %v3408 = vpow.pop %v3407
        %v3409 = vmul.f32 %v3023, 1.442695
        %v3410 = vpow.pop %v3409
        %v3411 = vmul.f32 %v3024, 1.442695
        %v3412 = vpow.pop %v3411
        %v3413 = vmul.f32 %v3025, 1.442695
        %v3414 = vpow.pop %v3413
        %v3415 = vmul.f32 %v3026, 1.442695
        %v3416 = vpow.pop %v3415
        %v3417 = vmul.f32 %v3027, 1.442695
        %v3418 = vpow.pop %v3417
        %v3419 = vmul.f32 %v3028, 1.442695
        %v3420 = vpow.pop %v3419
        %v3421 = vmul.f32 %v3029, 1.442695
        %v3422 = vpow.pop %v3421
        %v3423 = vmul.f32 %v3030, 1.442695
        %v3424 = vpow.pop %v3423
        %v3425 = vmul.f32 %v3031, 1.442695
        %v3426 = vpow.pop %v3425
        %v3427 = vmul.f32 %v3032, 1.442695
        %v3428 = vpow.pop %v3427
        %v3429 = vmul.f32 %v3033, 1.442695
        %v3430 = vpow.pop %v3429
        %v3431 = vmul.f32 %v3034, 1.442695
        %v3432 = vpow.pop %v3431
        %v3433 = vmul.f32 %v3035, 1.442695
        %v3434 = vpow.pop %v3433
        %v3435 = vmul.f32 %v3036, 1.442695
        %v3436 = vpow.pop %v3435
        %v3437 = vmul.f32 %v3037, 1.442695
        %v3438 = vpow.pop %v3437
        %v3439 = vmul.f32 %v3038, 1.442695
        %v3440 = vpow.pop %v3439
        %v3441 = vmul.f32 %v3039, 1.442695
        %v3442 = vpow.pop %v3441
        %v3443 = vmul.f32 %v3040, 1.442695
        %v3444 = vpow.pop %v3443
        %v3445 = vmul.f32 %v3041, 1.442695
        %v3446 = vpow.pop %v3445
        %v3447 = vmul.f32 %v3042, 1.442695
        %v3448 = vpow.pop %v3447
        %v3449 = vmul.f32 %v3043, 1.442695
        %v3450 = vpow.pop %v3449
        %v3451 = vmul.f32 %v3044, 1.442695
        %v3452 = vpow.pop %v3451
        %v3453 = vmul.f32 %v3045, 1.442695
        %v3454 = vpow.pop %v3453
        %v3455 = vmul.f32 %v3046, 1.442695
        %v3456 = vpow.pop %v3455
        %v3457 = vmul.f32 %v3047, 1.442695
        %v3458 = vpow.pop %v3457
        %v3459 = vmul.f32 %v3048, 1.442695
        %v3460 = vpow.pop %v3459
        %v3461 = vmul.f32 %v3049, 1.442695
        %v3462 = vpow.pop %v3461
        %v3463 = vmul.f32 %v3050, 1.442695
        %v3464 = vpow.pop %v3463
        %v3465 = vmul.f32 %v3051, 1.442695
        %v3466 = vpow.pop %v3465
        %v3467 = vmul.f32 %v3052, 1.442695
        %v3468 = vpow.pop %v3467
        %v3469 = vmul.f32 %v3053, 1.442695
        %v3470 = vpow.pop %v3469
        %v3471 = vmul.f32 %v3054, 1.442695
        %v3472 = vpow.pop %v3471
        %v3473 = vmul.f32 %v3055, 1.442695
        %v3474 = vpow.pop %v3473
        %v3475 = vmul.f32 %v3056, 1.442695
        %v3476 = vpow.pop %v3475
        %v3477 = vmul.f32 %v3057, 1.442695
        %v3478 = vpow.pop %v3477
        %v3479 = vmul.f32 %v3058, 1.442695
        %v3480 = vpow.pop %v3479
        %v3481 = vmul.f32 %v3059, 1.442695
        %v3482 = vpow.pop %v3481
        %v3483 = vmul.f32 %v3060, 1.442695
        %v3484 = vpow.pop %v3483
        %v3485 = vmul.f32 %v3061, 1.442695
        %v3486 = vpow.pop %v3485
        %v3487 = vmul.f32 %v3062, 1.442695
        %v3488 = vpow.pop %v3487
        %v3489 = vmul.f32 %v3063, 1.442695
        %v3490 = vpow.pop %v3489
        %v3491 = vmul.f32 %v3064, 1.442695
        %v3492 = vpow.pop %v3491
        %v3493 = vmul.f32 %v3065, 1.442695
        %v3494 = vpow.pop %v3493
        %v3495 = vmul.f32 %v3066, 1.442695
        %v3496 = vpow.pop %v3495
        %v3497 = vmul.f32 %v3067, 1.442695
        %v3498 = vpow.pop %v3497
        %v3499 = vmul.f32 %v3068, 1.442695
        %v3500 = vpow.pop %v3499
        %v3501 = vmul.f32 %v3069, 1.442695
        %v3502 = vpow.pop %v3501
        %v3503 = vmul.f32 %v3070, 1.442695
        %v3504 = vpow.pop %v3503
        %v3505 = vmul.f32 %v3071, 1.442695
        %v3506 = vpow.pop %v3505
        %v3507 = vmul.f32 %v3072, 1.442695
        %v3508 = vpow.pop %v3507
        %v3509 = vmul.f32 %v3073, 1.442695
        %v3510 = vpow.pop %v3509
        %v3511 = vmul.f32 %v3074, 1.442695
        %v3512 = vpow.pop %v3511
        %v3513 = vmul.f32 %v3075, 1.442695
        %v3514 = vpow.pop %v3513
        %v3515 = vmul.f32 %v3076, 1.442695
        %v3516 = vpow.pop %v3515
        %v3517 = vmul.f32 %v3077, 1.442695
        %v3518 = vpow.pop %v3517
        %v3519 = vmul.f32 %v3078, 1.442695
        %v3520 = vpow.pop %v3519
        %v3521 = vmul.f32 %v3079, 1.442695
        %v3522 = vpow.pop %v3521
        %v3523 = vmul.f32 %v3080, 1.442695
        %v3524 = vpow.pop %v3523
        %v3525 = vmul.f32 %v3081, 1.442695
        %v3526 = vpow.pop %v3525
        %v3527 = vmul.f32 %v3082, 1.442695
        %v3528 = vpow.pop %v3527
        %v3529 = vmul.f32 %v3083, 1.442695
        %v3530 = vpow.pop %v3529
        %v3531 = vmul.f32 %v3084, 1.442695
        %v3532 = vpow.pop %v3531
        %v3533 = vmul.f32 %v3085, 1.442695
        %v3534 = vpow.pop %v3533
        %v3535 = vmul.f32 %v3086, 1.442695
        %v3536 = vpow.pop %v3535
        %v3537 = vmul.f32 %v3087, 1.442695
        %v3538 = vpow.pop %v3537
        %v3539 = vmul.f32 %v3088, 1.442695
        %v3540 = vpow.pop %v3539
        %v3541 = vmul.f32 %v3089, 1.442695
        %v3542 = vpow.pop %v3541
        %v3543 = vmul.f32 %v3090, 1.442695
        %v3544 = vpow.pop %v3543
        %v3545 = vmul.f32 %v3091, 1.442695
        %v3546 = vpow.pop %v3545
        %v3547 = vmul.f32 %v3092, 1.442695
        %v3548 = vpow.pop %v3547
        %v3549 = vmul.f32 %v3093, 1.442695
        %v3550 = vpow.pop %v3549
        %v3551 = vmul.f32 %v3094, 1.442695
        %v3552 = vpow.pop %v3551
        %v3553 = vmul.f32 %v3095, 1.442695
        %v3554 = vpow.pop %v3553
        %v3555 = vmul.f32 %v3096, 1.442695
        %v3556 = vpow.pop %v3555
        %v3557 = vmul.f32 %v3097, 1.442695
        %v3558 = vpow.pop %v3557
        %v3559 = vmul.f32 %v3098, 1.442695
        %v3560 = vpow.pop %v3559
        %v3561 = vmul.f32 %v3099, 1.442695
        %v3562 = vpow.pop %v3561
        %v3563 = vmul.f32 %v3100, 1.442695
        %v3564 = vpow.pop %v3563
        %v3565 = vmul.f32 %v3101, 1.442695
        %v3566 = vpow.pop %v3565
        %v3567 = vmul.f32 %v3102, 1.442695
        %v3568 = vpow.pop %v3567
        %v3569 = vmul.f32 %v3103, 1.442695
        %v3570 = vpow.pop %v3569
        %v3571 = vmul.f32 %v3104, 1.442695
        %v3572 = vpow.pop %v3571
        %v3573 = vmul.f32 %v3105, 1.442695
        %v3574 = vpow.pop %v3573
        %v3575 = vmul.f32 %v3106, 1.442695
        %v3576 = vpow.pop %v3575
        %v3577 = vmul.f32 %v3107, 1.442695
        %v3578 = vpow.pop %v3577
        %v3579 = vmul.f32 %v3108, 1.442695
        %v3580 = vpow.pop %v3579
        %v3581 = vmul.f32 %v3109, 1.442695
        %v3582 = vpow.pop %v3581
        %v3583 = vmul.f32 %v3110, 1.442695
        %v3584 = vpow.pop %v3583
        %v3585 = vmul.f32 %v3111, 1.442695
        %v3586 = vpow.pop %v3585
        %v3587 = vmul.f32 %v3112, 1.442695
        %v3588 = vpow.pop %v3587
        %v3589 = vmul.f32 %v3113, 1.442695
        %v3590 = vpow.pop %v3589
        %v3591 = vmul.f32 %v3114, 1.442695
        %v3592 = vpow.pop %v3591
        %v3593 = vmul.f32 %v3115, 1.442695
        %v3594 = vpow.pop %v3593
        %v3595 = vmul.f32 %v3116, 1.442695
        %v3596 = vpow.pop %v3595
        %v3597 = vmul.f32 %v3117, 1.442695
        %v3598 = vpow.pop %v3597
        %v3599 = vmul.f32 %v3118, 1.442695
        %v3600 = vpow.pop %v3599
        %v3601 = vmul.f32 %v3119, 1.442695
        %v3602 = vpow.pop %v3601
        %v3603 = vmul.f32 %v3120, 1.442695
        %v3604 = vpow.pop %v3603
        %v3605 = vmul.f32 %v3121, 1.442695
        %v3606 = vpow.pop %v3605
        %v3607 = vmul.f32 %v3122, 1.442695
        %v3608 = vpow.pop %v3607
        %v3609 = vmul.f32 %v3123, 1.442695
        %v3610 = vpow.pop %v3609
        %v3611 = vmul.f32 %v3124, 1.442695
        %v3612 = vpow.pop %v3611
        %v3613 = vmul.f32 %v3125, 1.442695
        %v3614 = vpow.pop %v3613
        %v3615 = vmul.f32 %v3126, 1.442695
        %v3616 = vpow.pop %v3615
        %v3617 = vmul.f32 %v3127, 1.442695
        %v3618 = vpow.pop %v3617
        %v3619 = vmul.f32 %v3128, 1.442695
        %v3620 = vpow.pop %v3619
        %v3621 = vmul.f32 %v3129, 1.442695
        %v3622 = vpow.pop %v3621
        %v3623 = vmul.f32 %v3130, 1.442695
        %v3624 = vpow.pop %v3623
        %v3625 = vmul.f32 %v3131, 1.442695
        %v3626 = vpow.pop %v3625
        %v3627 = vmul.f32 %v3132, 1.442695
        %v3628 = vpow.pop %v3627
        %v3629 = vmul.f32 %v3133, 1.442695
        %v3630 = vpow.pop %v3629
        %v3631 = vmul.f32 %v3134, 1.442695
        %v3632 = vpow.pop %v3631
        %v3633 = vmul.f32 %v3135, 1.442695
        %v3634 = vpow.pop %v3633
        %v3635 = vmul.f32 %v3136, 1.442695
        %v3636 = vpow.pop %v3635
        %v3637 = vmul.f32 %v3137, 1.442695
        %v3638 = vpow.pop %v3637
        %v3639 = vmul.f32 %v3138, 1.442695
        %v3640 = vpow.pop %v3639
        %v3641 = vmul.f32 %v3139, 1.442695
        %v3642 = vpow.pop %v3641
        %v3643 = vmul.f32 %v3140, 1.442695
        %v3644 = vpow.pop %v3643
        %v3645 = vmul.f32 %v3141, 1.442695
        %v3646 = vpow.pop %v3645
        %v3647 = vmul.f32 %v3142, 1.442695
        %v3648 = vpow.pop %v3647
        %v3649 = vmul.f32 %v3143, 1.442695
        %v3650 = vpow.pop %v3649
        %v3651 = vmul.f32 %v3144, 1.442695
        %v3652 = vpow.pop %v3651
        %v3653 = vmul.f32 %v3145, 1.442695
        %v3654 = vpow.pop %v3653
        %v3655 = vmul.f32 %v3146, 1.442695
        %v3656 = vpow.pop %v3655
        %v3657 = vmul.f32 %v3147, 1.442695
        %v3658 = vpow.pop %v3657
        %v3659 = vmul.f32 %v3148, 1.442695
        %v3660 = vpow.pop %v3659
        %v3661 = vadd.f32 %v3150, %v3152
        %v3662 = vadd.f32 %v3661, %v3154
        %v3663 = vadd.f32 %v3662, %v3156
        %v3664 = vadd.f32 %v3663, %v3158
        %v3665 = vadd.f32 %v3664, %v3160
        %v3666 = vadd.f32 %v3665, %v3162
        %v3667 = vadd.f32 %v3666, %v3164
        %v3668 = vadd.f32 %v3667, %v3166
        %v3669 = vadd.f32 %v3668, %v3168
        %v3670 = vadd.f32 %v3669, %v3170
        %v3671 = vadd.f32 %v3670, %v3172
        %v3672 = vadd.f32 %v3671, %v3174
        %v3673 = vadd.f32 %v3672, %v3176
        %v3674 = vadd.f32 %v3673, %v3178
        %v3675 = vadd.f32 %v3674, %v3180
        %3676 = vadd.xlane.f32.xlu0 %v3675
        %v3677 = vpop.xlane.xlu0 %3676
        %v3678 = vadd.f32 %v3182, %v3184
        %v3679 = vadd.f32 %v3678, %v3186
        %v3680 = vadd.f32 %v3679, %v3188
        %v3681 = vadd.f32 %v3680, %v3190
        %v3682 = vadd.f32 %v3681, %v3192
        %v3683 = vadd.f32 %v3682, %v3194
        %v3684 = vadd.f32 %v3683, %v3196
        %v3685 = vadd.f32 %v3684, %v3198
        %v3686 = vadd.f32 %v3685, %v3200
        %v3687 = vadd.f32 %v3686, %v3202
        %v3688 = vadd.f32 %v3687, %v3204
        %v3689 = vadd.f32 %v3688, %v3206
        %v3690 = vadd.f32 %v3689, %v3208
        %v3691 = vadd.f32 %v3690, %v3210
        %v3692 = vadd.f32 %v3691, %v3212
        %3693 = vadd.xlane.f32.xlu0 %v3692
        %v3694 = vpop.xlane.xlu0 %3693
        %v3695 = vadd.f32 %v3214, %v3216
        %v3696 = vadd.f32 %v3695, %v3218
        %v3697 = vadd.f32 %v3696, %v3220
        %v3698 = vadd.f32 %v3697, %v3222
        %v3699 = vadd.f32 %v3698, %v3224
        %v3700 = vadd.f32 %v3699, %v3226
        %v3701 = vadd.f32 %v3700, %v3228
        %v3702 = vadd.f32 %v3701, %v3230
        %v3703 = vadd.f32 %v3702, %v3232
        %v3704 = vadd.f32 %v3703, %v3234
        %v3705 = vadd.f32 %v3704, %v3236
        %v3706 = vadd.f32 %v3705, %v3238
        %v3707 = vadd.f32 %v3706, %v3240
        %v3708 = vadd.f32 %v3707, %v3242
        %v3709 = vadd.f32 %v3708, %v3244
        %3710 = vadd.xlane.f32.xlu0 %v3709
        %v3711 = vpop.xlane.xlu0 %3710
        %v3712 = vadd.f32 %v3246, %v3248
        %v3713 = vadd.f32 %v3712, %v3250
        %v3714 = vadd.f32 %v3713, %v3252
        %v3715 = vadd.f32 %v3714, %v3254
        %v3716 = vadd.f32 %v3715, %v3256
        %v3717 = vadd.f32 %v3716, %v3258
        %v3718 = vadd.f32 %v3717, %v3260
        %v3719 = vadd.f32 %v3718, %v3262
        %v3720 = vadd.f32 %v3719, %v3264
        %v3721 = vadd.f32 %v3720, %v3266
        %v3722 = vadd.f32 %v3721, %v3268
        %v3723 = vadd.f32 %v3722, %v3270
        %v3724 = vadd.f32 %v3723, %v3272
        %v3725 = vadd.f32 %v3724, %v3274
        %v3726 = vadd.f32 %v3725, %v3276
        %3727 = vadd.xlane.f32.xlu0 %v3726
        %v3728 = vpop.xlane.xlu0 %3727
        %v3729 = vadd.f32 %v3278, %v3280
        %v3730 = vadd.f32 %v3729, %v3282
        %v3731 = vadd.f32 %v3730, %v3284
        %v3732 = vadd.f32 %v3731, %v3286
        %v3733 = vadd.f32 %v3732, %v3288
        %v3734 = vadd.f32 %v3733, %v3290
        %v3735 = vadd.f32 %v3734, %v3292
        %v3736 = vadd.f32 %v3735, %v3294
        %v3737 = vadd.f32 %v3736, %v3296
        %v3738 = vadd.f32 %v3737, %v3298
        %v3739 = vadd.f32 %v3738, %v3300
        %v3740 = vadd.f32 %v3739, %v3302
        %v3741 = vadd.f32 %v3740, %v3304
        %v3742 = vadd.f32 %v3741, %v3306
        %v3743 = vadd.f32 %v3742, %v3308
        %3744 = vadd.xlane.f32.xlu0 %v3743
        %v3745 = vpop.xlane.xlu0 %3744
        %v3746 = vadd.f32 %v3310, %v3312
        %v3747 = vadd.f32 %v3746, %v3314
        %v3748 = vadd.f32 %v3747, %v3316
        %v3749 = vadd.f32 %v3748, %v3318
        %v3750 = vadd.f32 %v3749, %v3320
        %v3751 = vadd.f32 %v3750, %v3322
        %v3752 = vadd.f32 %v3751, %v3324
        %v3753 = vadd.f32 %v3752, %v3326
        %v3754 = vadd.f32 %v3753, %v3328
        %v3755 = vadd.f32 %v3754, %v3330
        %v3756 = vadd.f32 %v3755, %v3332
        %v3757 = vadd.f32 %v3756, %v3334
        %v3758 = vadd.f32 %v3757, %v3336
        %v3759 = vadd.f32 %v3758, %v3338
        %v3760 = vadd.f32 %v3759, %v3340
        %3761 = vadd.xlane.f32.xlu0 %v3760
        %v3762 = vpop.xlane.xlu0 %3761
        %v3763 = vadd.f32 %v3342, %v3344
        %v3764 = vadd.f32 %v3763, %v3346
        %v3765 = vadd.f32 %v3764, %v3348
        %v3766 = vadd.f32 %v3765, %v3350
        %v3767 = vadd.f32 %v3766, %v3352
        %v3768 = vadd.f32 %v3767, %v3354
        %v3769 = vadd.f32 %v3768, %v3356
        %v3770 = vadd.f32 %v3769, %v3358
        %v3771 = vadd.f32 %v3770, %v3360
        %v3772 = vadd.f32 %v3771, %v3362
        %v3773 = vadd.f32 %v3772, %v3364
        %v3774 = vadd.f32 %v3773, %v3366
        %v3775 = vadd.f32 %v3774, %v3368
        %v3776 = vadd.f32 %v3775, %v3370
        %v3777 = vadd.f32 %v3776, %v3372
        %3778 = vadd.xlane.f32.xlu0 %v3777
        %v3779 = vpop.xlane.xlu0 %3778
        %v3780 = vadd.f32 %v3374, %v3376
        %v3781 = vadd.f32 %v3780, %v3378
        %v3782 = vadd.f32 %v3781, %v3380
        %v3783 = vadd.f32 %v3782, %v3382
        %v3784 = vadd.f32 %v3783, %v3384
        %v3785 = vadd.f32 %v3784, %v3386
        %v3786 = vadd.f32 %v3785, %v3388
        %v3787 = vadd.f32 %v3786, %v3390
        %v3788 = vadd.f32 %v3787, %v3392
        %v3789 = vadd.f32 %v3788, %v3394
        %v3790 = vadd.f32 %v3789, %v3396
        %v3791 = vadd.f32 %v3790, %v3398
        %v3792 = vadd.f32 %v3791, %v3400
        %v3793 = vadd.f32 %v3792, %v3402
        %v3794 = vadd.f32 %v3793, %v3404
        %3795 = vadd.xlane.f32.xlu0 %v3794
        %v3796 = vpop.xlane.xlu0 %3795
        %v3797 = vadd.f32 %v3406, %v3408
        %v3798 = vadd.f32 %v3797, %v3410
        %v3799 = vadd.f32 %v3798, %v3412
        %v3800 = vadd.f32 %v3799, %v3414
        %v3801 = vadd.f32 %v3800, %v3416
        %v3802 = vadd.f32 %v3801, %v3418
        %v3803 = vadd.f32 %v3802, %v3420
        %v3804 = vadd.f32 %v3803, %v3422
        %v3805 = vadd.f32 %v3804, %v3424
        %v3806 = vadd.f32 %v3805, %v3426
        %v3807 = vadd.f32 %v3806, %v3428
        %v3808 = vadd.f32 %v3807, %v3430
        %v3809 = vadd.f32 %v3808, %v3432
        %v3810 = vadd.f32 %v3809, %v3434
        %v3811 = vadd.f32 %v3810, %v3436
        %3812 = vadd.xlane.f32.xlu0 %v3811
        %v3813 = vpop.xlane.xlu0 %3812
        %v3814 = vadd.f32 %v3438, %v3440
        %v3815 = vadd.f32 %v3814, %v3442
        %v3816 = vadd.f32 %v3815, %v3444
        %v3817 = vadd.f32 %v3816, %v3446
        %v3818 = vadd.f32 %v3817, %v3448
        %v3819 = vadd.f32 %v3818, %v3450
        %v3820 = vadd.f32 %v3819, %v3452
        %v3821 = vadd.f32 %v3820, %v3454
        %v3822 = vadd.f32 %v3821, %v3456
        %v3823 = vadd.f32 %v3822, %v3458
        %v3824 = vadd.f32 %v3823, %v3460
        %v3825 = vadd.f32 %v3824, %v3462
        %v3826 = vadd.f32 %v3825, %v3464
        %v3827 = vadd.f32 %v3826, %v3466
        %v3828 = vadd.f32 %v3827, %v3468
        %3829 = vadd.xlane.f32.xlu0 %v3828
        %v3830 = vpop.xlane.xlu0 %3829
        %v3831 = vadd.f32 %v3470, %v3472
        %v3832 = vadd.f32 %v3831, %v3474
        %v3833 = vadd.f32 %v3832, %v3476
        %v3834 = vadd.f32 %v3833, %v3478
        %v3835 = vadd.f32 %v3834, %v3480
        %v3836 = vadd.f32 %v3835, %v3482
        %v3837 = vadd.f32 %v3836, %v3484
        %v3838 = vadd.f32 %v3837, %v3486
        %v3839 = vadd.f32 %v3838, %v3488
        %v3840 = vadd.f32 %v3839, %v3490
        %v3841 = vadd.f32 %v3840, %v3492
        %v3842 = vadd.f32 %v3841, %v3494
        %v3843 = vadd.f32 %v3842, %v3496
        %v3844 = vadd.f32 %v3843, %v3498
        %v3845 = vadd.f32 %v3844, %v3500
        %3846 = vadd.xlane.f32.xlu0 %v3845
        %v3847 = vpop.xlane.xlu0 %3846
        %v3848 = vadd.f32 %v3502, %v3504
        %v3849 = vadd.f32 %v3848, %v3506
        %v3850 = vadd.f32 %v3849, %v3508
        %v3851 = vadd.f32 %v3850, %v3510
        %v3852 = vadd.f32 %v3851, %v3512
        %v3853 = vadd.f32 %v3852, %v3514
        %v3854 = vadd.f32 %v3853, %v3516
        %v3855 = vadd.f32 %v3854, %v3518
        %v3856 = vadd.f32 %v3855, %v3520
        %v3857 = vadd.f32 %v3856, %v3522
        %v3858 = vadd.f32 %v3857, %v3524
        %v3859 = vadd.f32 %v3858, %v3526
        %v3860 = vadd.f32 %v3859, %v3528
        %v3861 = vadd.f32 %v3860, %v3530
        %v3862 = vadd.f32 %v3861, %v3532
        %3863 = vadd.xlane.f32.xlu0 %v3862
        %v3864 = vpop.xlane.xlu0 %3863
        %v3865 = vadd.f32 %v3534, %v3536
        %v3866 = vadd.f32 %v3865, %v3538
        %v3867 = vadd.f32 %v3866, %v3540
        %v3868 = vadd.f32 %v3867, %v3542
        %v3869 = vadd.f32 %v3868, %v3544
        %v3870 = vadd.f32 %v3869, %v3546
        %v3871 = vadd.f32 %v3870, %v3548
        %v3872 = vadd.f32 %v3871, %v3550
        %v3873 = vadd.f32 %v3872, %v3552
        %v3874 = vadd.f32 %v3873, %v3554
        %v3875 = vadd.f32 %v3874, %v3556
        %v3876 = vadd.f32 %v3875, %v3558
        %v3877 = vadd.f32 %v3876, %v3560
        %v3878 = vadd.f32 %v3877, %v3562
        %v3879 = vadd.f32 %v3878, %v3564
        %3880 = vadd.xlane.f32.xlu0 %v3879
        %v3881 = vpop.xlane.xlu0 %3880
        %v3882 = vadd.f32 %v3566, %v3568
        %v3883 = vadd.f32 %v3882, %v3570
        %v3884 = vadd.f32 %v3883, %v3572
        %v3885 = vadd.f32 %v3884, %v3574
        %v3886 = vadd.f32 %v3885, %v3576
        %v3887 = vadd.f32 %v3886, %v3578
        %v3888 = vadd.f32 %v3887, %v3580
        %v3889 = vadd.f32 %v3888, %v3582
        %v3890 = vadd.f32 %v3889, %v3584
        %v3891 = vadd.f32 %v3890, %v3586
        %v3892 = vadd.f32 %v3891, %v3588
        %v3893 = vadd.f32 %v3892, %v3590
        %v3894 = vadd.f32 %v3893, %v3592
        %v3895 = vadd.f32 %v3894, %v3594
        %v3896 = vadd.f32 %v3895, %v3596
        %3897 = vadd.xlane.f32.xlu0 %v3896
        %v3898 = vpop.xlane.xlu0 %3897
        %v3899 = vadd.f32 %v3598, %v3600
        %v3900 = vadd.f32 %v3899, %v3602
        %v3901 = vadd.f32 %v3900, %v3604
        %v3902 = vadd.f32 %v3901, %v3606
        %v3903 = vadd.f32 %v3902, %v3608
        %v3904 = vadd.f32 %v3903, %v3610
        %v3905 = vadd.f32 %v3904, %v3612
        %v3906 = vadd.f32 %v3905, %v3614
        %v3907 = vadd.f32 %v3906, %v3616
        %v3908 = vadd.f32 %v3907, %v3618
        %v3909 = vadd.f32 %v3908, %v3620
        %v3910 = vadd.f32 %v3909, %v3622
        %v3911 = vadd.f32 %v3910, %v3624
        %v3912 = vadd.f32 %v3911, %v3626
        %v3913 = vadd.f32 %v3912, %v3628
        %3914 = vadd.xlane.f32.xlu0 %v3913
        %v3915 = vpop.xlane.xlu0 %3914
        %v3916 = vadd.f32 %v3630, %v3632
        %v3917 = vadd.f32 %v3916, %v3634
        %v3918 = vadd.f32 %v3917, %v3636
        %v3919 = vadd.f32 %v3918, %v3638
        %v3920 = vadd.f32 %v3919, %v3640
        %v3921 = vadd.f32 %v3920, %v3642
        %v3922 = vadd.f32 %v3921, %v3644
        %v3923 = vadd.f32 %v3922, %v3646
        %v3924 = vadd.f32 %v3923, %v3648
        %v3925 = vadd.f32 %v3924, %v3650
        %v3926 = vadd.f32 %v3925, %v3652
        %v3927 = vadd.f32 %v3926, %v3654
        %v3928 = vadd.f32 %v3927, %v3656
        %v3929 = vadd.f32 %v3928, %v3658
        %v3930 = vadd.f32 %v3929, %v3660
        %3931 = vadd.xlane.f32.xlu0 %v3930
        %v3932 = vpop.xlane.xlu0 %3931
        %v3933 = vadd.f32 %v2797, %v3677
        %v3934 = vadd.f32 %v2798, %v3694
        %v3935 = vadd.f32 %v2799, %v3711
        %v3936 = vadd.f32 %v2800, %v3728
        %v3937 = vadd.f32 %v2801, %v3745
        %v3938 = vadd.f32 %v2802, %v3762
        %v3939 = vadd.f32 %v2803, %v3779
        %v3940 = vadd.f32 %v2804, %v3796
        %v3941 = vadd.f32 %v2805, %v3813
        %v3942 = vadd.f32 %v2806, %v3830
        %v3943 = vadd.f32 %v2807, %v3847
        %v3944 = vadd.f32 %v2808, %v3864
        %v3945 = vadd.f32 %v2809, %v3881
        %v3946 = vadd.f32 %v2810, %v3898
        %v3947 = vadd.f32 %v2811, %v3915
        %v3948 = vadd.f32 %v2812, %v3932
        %vm3949 = vcmask 7168
        %3950 = vst.msk [vmem:[#allocation4] sm:$0xff] %vm3949, %v3933
        %3951 = vst.msk [vmem:[#allocation4 + $0x8] sm:$0xff] %vm3949, %v3934
        %3952 = vst.msk [vmem:[#allocation4 + $0x10] sm:$0xff] %vm3949, %v3935
        %3953 = vst.msk [vmem:[#allocation4 + $0x18] sm:$0xff] %vm3949, %v3936
        %3954 = vst.msk [vmem:[#allocation4 + $0x20] sm:$0xff] %vm3949, %v3937
        %3955 = vst.msk [vmem:[#allocation4 + $0x28] sm:$0xff] %vm3949, %v3938
        %3956 = vst.msk [vmem:[#allocation4 + $0x30] sm:$0xff] %vm3949, %v3939
        %3957 = vst.msk [vmem:[#allocation4 + $0x38] sm:$0xff] %vm3949, %v3940
        %3958 = vst.msk [vmem:[#allocation4 + $0x40] sm:$0xff] %vm3949, %v3941
        %3959 = vst.msk [vmem:[#allocation4 + $0x48] sm:$0xff] %vm3949, %v3942
        %3960 = vst.msk [vmem:[#allocation4 + $0x50] sm:$0xff] %vm3949, %v3943
        %3961 = vst.msk [vmem:[#allocation4 + $0x58] sm:$0xff] %vm3949, %v3944
        %3962 = vst.msk [vmem:[#allocation4 + $0x60] sm:$0xff] %vm3949, %v3945
        %3963 = vst.msk [vmem:[#allocation4 + $0x68] sm:$0xff] %vm3949, %v3946
        %3964 = vst.msk [vmem:[#allocation4 + $0x70] sm:$0xff] %vm3949, %v3947
        %3965 = vst.msk [vmem:[#allocation4 + $0x78] sm:$0xff] %vm3949, %v3948
        %3966 = vst.msk [vmem:[#allocation3] sm:$0xff] %vm3949, %v2717
        %3967 = vst.msk [vmem:[#allocation3 + $0x8] sm:$0xff] %vm3949, %v2718
        %3968 = vst.msk [vmem:[#allocation3 + $0x10] sm:$0xff] %vm3949, %v2719
        %3969 = vst.msk [vmem:[#allocation3 + $0x18] sm:$0xff] %vm3949, %v2720
        %3970 = vst.msk [vmem:[#allocation3 + $0x20] sm:$0xff] %vm3949, %v2721
        %3971 = vst.msk [vmem:[#allocation3 + $0x28] sm:$0xff] %vm3949, %v2722
        %3972 = vst.msk [vmem:[#allocation3 + $0x30] sm:$0xff] %vm3949, %v2723
        %3973 = vst.msk [vmem:[#allocation3 + $0x38] sm:$0xff] %vm3949, %v2724
        %3974 = vst.msk [vmem:[#allocation3 + $0x40] sm:$0xff] %vm3949, %v2725
        %3975 = vst.msk [vmem:[#allocation3 + $0x48] sm:$0xff] %vm3949, %v2726
        %3976 = vst.msk [vmem:[#allocation3 + $0x50] sm:$0xff] %vm3949, %v2727
        %3977 = vst.msk [vmem:[#allocation3 + $0x58] sm:$0xff] %vm3949, %v2728
        %3978 = vst.msk [vmem:[#allocation3 + $0x60] sm:$0xff] %vm3949, %v2729
        %3979 = vst.msk [vmem:[#allocation3 + $0x68] sm:$0xff] %vm3949, %v2730
        %3980 = vst.msk [vmem:[#allocation3 + $0x70] sm:$0xff] %vm3949, %v2731
        %3981 = vst.msk [vmem:[#allocation3 + $0x78] sm:$0xff] %vm3949, %v2732
        %p3982 = scmp.eq.s32.totalorder %s22, 1
        // Predicated region
        $region60: #{skipgram_forward.1} parent=50 // pred_check
          %p3983 = pneg %p3982
        $region61: #{skipgram_forward.1} parent=50 // pred_check_branch
          %3985 = sbr.rel (%p3983) target = $region63
        $region62: #{skipgram_forward.1} parent=50 // pred_region
          %v3986 = vld [vmem:[#allocation3] sm:$0xff]
          %v3987 = vld [vmem:[#allocation3 + $0x8] sm:$0xff]
          %v3988 = vld [vmem:[#allocation3 + $0x10] sm:$0xff]
          %v3989 = vld [vmem:[#allocation3 + $0x18] sm:$0xff]
          %v3990 = vld [vmem:[#allocation3 + $0x20] sm:$0xff]
          %v3991 = vld [vmem:[#allocation3 + $0x28] sm:$0xff]
          %v3992 = vld [vmem:[#allocation3 + $0x30] sm:$0xff]
          %v3993 = vld [vmem:[#allocation3 + $0x38] sm:$0xff]
          %v3994 = vld [vmem:[#allocation3 + $0x40] sm:$0xff]
          %v3995 = vld [vmem:[#allocation3 + $0x48] sm:$0xff]
          %v3996 = vld [vmem:[#allocation3 + $0x50] sm:$0xff]
          %v3997 = vld [vmem:[#allocation3 + $0x58] sm:$0xff]
          %v3998 = vld [vmem:[#allocation3 + $0x60] sm:$0xff]
          %v3999 = vld [vmem:[#allocation3 + $0x68] sm:$0xff]
          %v4000 = vld [vmem:[#allocation3 + $0x70] sm:$0xff]
          %v4001 = vld [vmem:[#allocation3 + $0x78] sm:$0xff]
          %v4002 = vld [vmem:[#allocation4] sm:$0xff]
          %v4003 = vld [vmem:[#allocation4 + $0x8] sm:$0xff]
          %v4004 = vld [vmem:[#allocation4 + $0x10] sm:$0xff]
          %v4005 = vld [vmem:[#allocation4 + $0x18] sm:$0xff]
          %v4006 = vld [vmem:[#allocation4 + $0x20] sm:$0xff]
          %v4007 = vld [vmem:[#allocation4 + $0x28] sm:$0xff]
          %v4008 = vld [vmem:[#allocation4 + $0x30] sm:$0xff]
          %v4009 = vld [vmem:[#allocation4 + $0x38] sm:$0xff]
          %v4010 = vld [vmem:[#allocation4 + $0x40] sm:$0xff]
          %v4011 = vld [vmem:[#allocation4 + $0x48] sm:$0xff]
          %v4012 = vld [vmem:[#allocation4 + $0x50] sm:$0xff]
          %v4013 = vld [vmem:[#allocation4 + $0x58] sm:$0xff]
          %v4014 = vld [vmem:[#allocation4 + $0x60] sm:$0xff]
          %v4015 = vld [vmem:[#allocation4 + $0x68] sm:$0xff]
          %v4016 = vld [vmem:[#allocation4 + $0x70] sm:$0xff]
          %v4017 = vld [vmem:[#allocation4 + $0x78] sm:$0xff]
          %v4018 = vlog2.pop %v4002
          %v4019 = vmul.f32 %v4018, 0.6931472
          %v4020 = vlog2.pop %v4003
          %v4021 = vmul.f32 %v4020, 0.6931472
          %v4022 = vlog2.pop %v4004
          %v4023 = vmul.f32 %v4022, 0.6931472
          %v4024 = vlog2.pop %v4005
          %v4025 = vmul.f32 %v4024, 0.6931472
          %v4026 = vlog2.pop %v4006
          %v4027 = vmul.f32 %v4026, 0.6931472
          %v4028 = vlog2.pop %v4007
          %v4029 = vmul.f32 %v4028, 0.6931472
          %v4030 = vlog2.pop %v4008
          %v4031 = vmul.f32 %v4030, 0.6931472
          %v4032 = vlog2.pop %v4009
          %v4033 = vmul.f32 %v4032, 0.6931472
          %v4034 = vlog2.pop %v4010
          %v4035 = vmul.f32 %v4034, 0.6931472
          %v4036 = vlog2.pop %v4011
          %v4037 = vmul.f32 %v4036, 0.6931472
          %v4038 = vlog2.pop %v4012
          %v4039 = vmul.f32 %v4038, 0.6931472
          %v4040 = vlog2.pop %v4013
          %v4041 = vmul.f32 %v4040, 0.6931472
          %v4042 = vlog2.pop %v4014
          %v4043 = vmul.f32 %v4042, 0.6931472
          %v4044 = vlog2.pop %v4015
          %v4045 = vmul.f32 %v4044, 0.6931472
          %v4046 = vlog2.pop %v4016
          %v4047 = vmul.f32 %v4046, 0.6931472
          %v4048 = vlog2.pop %v4017
          %v4049 = vmul.f32 %v4048, 0.6931472
          %v4050 = vadd.f32 %v3986, %v4019
          %v4051 = vadd.f32 %v3987, %v4021
          %v4052 = vadd.f32 %v3988, %v4023
          %v4053 = vadd.f32 %v3989, %v4025
          %v4054 = vadd.f32 %v3990, %v4027
          %v4055 = vadd.f32 %v3991, %v4029
          %v4056 = vadd.f32 %v3992, %v4031
          %v4057 = vadd.f32 %v3993, %v4033
          %v4058 = vadd.f32 %v3994, %v4035
          %v4059 = vadd.f32 %v3995, %v4037
          %v4060 = vadd.f32 %v3996, %v4039
          %v4061 = vadd.f32 %v3997, %v4041
          %v4062 = vadd.f32 %v3998, %v4043
          %v4063 = vadd.f32 %v3999, %v4045
          %v4064 = vadd.f32 %v4000, %v4047
          %v4065 = vadd.f32 %v4001, %v4049
          %v4066 = vld [vmem:[#allocation2] sm:$0xff]
          %v4067 = vld [vmem:[#allocation2 + $0x8] sm:$0xff]
          %v4068 = vld [vmem:[#allocation2 + $0x10] sm:$0xff]
          %v4069 = vld [vmem:[#allocation2 + $0x18] sm:$0xff]
          %v4070 = vld [vmem:[#allocation2 + $0x20] sm:$0xff]
          %v4071 = vld [vmem:[#allocation2 + $0x28] sm:$0xff]
          %v4072 = vld [vmem:[#allocation2 + $0x30] sm:$0xff]
          %v4073 = vld [vmem:[#allocation2 + $0x38] sm:$0xff]
          %v4074 = vld [vmem:[#allocation2 + $0x40] sm:$0xff]
          %v4075 = vld [vmem:[#allocation2 + $0x48] sm:$0xff]
          %v4076 = vld [vmem:[#allocation2 + $0x50] sm:$0xff]
          %v4077 = vld [vmem:[#allocation2 + $0x58] sm:$0xff]
          %v4078 = vld [vmem:[#allocation2 + $0x60] sm:$0xff]
          %v4079 = vld [vmem:[#allocation2 + $0x68] sm:$0xff]
          %v4080 = vld [vmem:[#allocation2 + $0x70] sm:$0xff]
          %v4081 = vld [vmem:[#allocation2 + $0x78] sm:$0xff]
          %v4082 = vld [vmem:[#allocation2 + $0x80] sm:$0xff]
          %v4083 = vld [vmem:[#allocation2 + $0x88] sm:$0xff]
          %v4084 = vld [vmem:[#allocation2 + $0x90] sm:$0xff]
          %v4085 = vld [vmem:[#allocation2 + $0x98] sm:$0xff]
          %v4086 = vld [vmem:[#allocation2 + $0xa0] sm:$0xff]
          %v4087 = vld [vmem:[#allocation2 + $0xa8] sm:$0xff]
          %v4088 = vld [vmem:[#allocation2 + $0xb0] sm:$0xff]
          %v4089 = vld [vmem:[#allocation2 + $0xb8] sm:$0xff]
          %v4090 = vld [vmem:[#allocation2 + $0xc0] sm:$0xff]
          %v4091 = vld [vmem:[#allocation2 + $0xc8] sm:$0xff]
          %v4092 = vld [vmem:[#allocation2 + $0xd0] sm:$0xff]
          %v4093 = vld [vmem:[#allocation2 + $0xd8] sm:$0xff]
          %v4094 = vld [vmem:[#allocation2 + $0xe0] sm:$0xff]
          %v4095 = vld [vmem:[#allocation2 + $0xe8] sm:$0xff]
          %v4096 = vld [vmem:[#allocation2 + $0xf0] sm:$0xff]
          %v4097 = vld [vmem:[#allocation2 + $0xf8] sm:$0xff]
          %v4098 = vld [vmem:[#allocation2 + $0x100] sm:$0xff]
          %v4099 = vld [vmem:[#allocation2 + $0x108] sm:$0xff]
          %v4100 = vld [vmem:[#allocation2 + $0x110] sm:$0xff]
          %v4101 = vld [vmem:[#allocation2 + $0x118] sm:$0xff]
          %v4102 = vld [vmem:[#allocation2 + $0x120] sm:$0xff]
          %v4103 = vld [vmem:[#allocation2 + $0x128] sm:$0xff]
          %v4104 = vld [vmem:[#allocation2 + $0x130] sm:$0xff]
          %v4105 = vld [vmem:[#allocation2 + $0x138] sm:$0xff]
          %v4106 = vld [vmem:[#allocation2 + $0x140] sm:$0xff]
          %v4107 = vld [vmem:[#allocation2 + $0x148] sm:$0xff]
          %v4108 = vld [vmem:[#allocation2 + $0x150] sm:$0xff]
          %v4109 = vld [vmem:[#allocation2 + $0x158] sm:$0xff]
          %v4110 = vld [vmem:[#allocation2 + $0x160] sm:$0xff]
          %v4111 = vld [vmem:[#allocation2 + $0x168] sm:$0xff]
          %v4112 = vld [vmem:[#allocation2 + $0x170] sm:$0xff]
          %v4113 = vld [vmem:[#allocation2 + $0x178] sm:$0xff]
          %v4114 = vld [vmem:[#allocation2 + $0x180] sm:$0xff]
          %v4115 = vld [vmem:[#allocation2 + $0x188] sm:$0xff]
          %v4116 = vld [vmem:[#allocation2 + $0x190] sm:$0xff]
          %v4117 = vld [vmem:[#allocation2 + $0x198] sm:$0xff]
          %v4118 = vld [vmem:[#allocation2 + $0x1a0] sm:$0xff]
          %v4119 = vld [vmem:[#allocation2 + $0x1a8] sm:$0xff]
          %v4120 = vld [vmem:[#allocation2 + $0x1b0] sm:$0xff]
          %v4121 = vld [vmem:[#allocation2 + $0x1b8] sm:$0xff]
          %v4122 = vld [vmem:[#allocation2 + $0x1c0] sm:$0xff]
          %v4123 = vld [vmem:[#allocation2 + $0x1c8] sm:$0xff]
          %v4124 = vld [vmem:[#allocation2 + $0x1d0] sm:$0xff]
          %v4125 = vld [vmem:[#allocation2 + $0x1d8] sm:$0xff]
          %v4126 = vld [vmem:[#allocation2 + $0x1e0] sm:$0xff]
          %v4127 = vld [vmem:[#allocation2 + $0x1e8] sm:$0xff]
          %v4128 = vld [vmem:[#allocation2 + $0x1f0] sm:$0xff]
          %v4129 = vld [vmem:[#allocation2 + $0x1f8] sm:$0xff]
          %v4130 = vld [vmem:[#allocation2 + $0x200] sm:$0xff]
          %v4131 = vld [vmem:[#allocation2 + $0x208] sm:$0xff]
          %v4132 = vld [vmem:[#allocation2 + $0x210] sm:$0xff]
          %v4133 = vld [vmem:[#allocation2 + $0x218] sm:$0xff]
          %v4134 = vld [vmem:[#allocation2 + $0x220] sm:$0xff]
          %v4135 = vld [vmem:[#allocation2 + $0x228] sm:$0xff]
          %v4136 = vld [vmem:[#allocation2 + $0x230] sm:$0xff]
          %v4137 = vld [vmem:[#allocation2 + $0x238] sm:$0xff]
          %v4138 = vld [vmem:[#allocation2 + $0x240] sm:$0xff]
          %v4139 = vld [vmem:[#allocation2 + $0x248] sm:$0xff]
          %v4140 = vld [vmem:[#allocation2 + $0x250] sm:$0xff]
          %v4141 = vld [vmem:[#allocation2 + $0x258] sm:$0xff]
          %v4142 = vld [vmem:[#allocation2 + $0x260] sm:$0xff]
          %v4143 = vld [vmem:[#allocation2 + $0x268] sm:$0xff]
          %v4144 = vld [vmem:[#allocation2 + $0x270] sm:$0xff]
          %v4145 = vld [vmem:[#allocation2 + $0x278] sm:$0xff]
          %v4146 = vld [vmem:[#allocation2 + $0x280] sm:$0xff]
          %v4147 = vld [vmem:[#allocation2 + $0x288] sm:$0xff]
          %v4148 = vld [vmem:[#allocation2 + $0x290] sm:$0xff]
          %v4149 = vld [vmem:[#allocation2 + $0x298] sm:$0xff]
          %v4150 = vld [vmem:[#allocation2 + $0x2a0] sm:$0xff]
          %v4151 = vld [vmem:[#allocation2 + $0x2a8] sm:$0xff]
          %v4152 = vld [vmem:[#allocation2 + $0x2b0] sm:$0xff]
          %v4153 = vld [vmem:[#allocation2 + $0x2b8] sm:$0xff]
          %v4154 = vld [vmem:[#allocation2 + $0x2c0] sm:$0xff]
          %v4155 = vld [vmem:[#allocation2 + $0x2c8] sm:$0xff]
          %v4156 = vld [vmem:[#allocation2 + $0x2d0] sm:$0xff]
          %v4157 = vld [vmem:[#allocation2 + $0x2d8] sm:$0xff]
          %v4158 = vld [vmem:[#allocation2 + $0x2e0] sm:$0xff]
          %v4159 = vld [vmem:[#allocation2 + $0x2e8] sm:$0xff]
          %v4160 = vld [vmem:[#allocation2 + $0x2f0] sm:$0xff]
          %v4161 = vld [vmem:[#allocation2 + $0x2f8] sm:$0xff]
          %v4162 = vld [vmem:[#allocation2 + $0x300] sm:$0xff]
          %v4163 = vld [vmem:[#allocation2 + $0x308] sm:$0xff]
          %v4164 = vld [vmem:[#allocation2 + $0x310] sm:$0xff]
          %v4165 = vld [vmem:[#allocation2 + $0x318] sm:$0xff]
          %v4166 = vld [vmem:[#allocation2 + $0x320] sm:$0xff]
          %v4167 = vld [vmem:[#allocation2 + $0x328] sm:$0xff]
          %v4168 = vld [vmem:[#allocation2 + $0x330] sm:$0xff]
          %v4169 = vld [vmem:[#allocation2 + $0x338] sm:$0xff]
          %v4170 = vld [vmem:[#allocation2 + $0x340] sm:$0xff]
          %v4171 = vld [vmem:[#allocation2 + $0x348] sm:$0xff]
          %v4172 = vld [vmem:[#allocation2 + $0x350] sm:$0xff]
          %v4173 = vld [vmem:[#allocation2 + $0x358] sm:$0xff]
          %v4174 = vld [vmem:[#allocation2 + $0x360] sm:$0xff]
          %v4175 = vld [vmem:[#allocation2 + $0x368] sm:$0xff]
          %v4176 = vld [vmem:[#allocation2 + $0x370] sm:$0xff]
          %v4177 = vld [vmem:[#allocation2 + $0x378] sm:$0xff]
          %v4178 = vld [vmem:[#allocation2 + $0x380] sm:$0xff]
          %v4179 = vld [vmem:[#allocation2 + $0x388] sm:$0xff]
          %v4180 = vld [vmem:[#allocation2 + $0x390] sm:$0xff]
          %v4181 = vld [vmem:[#allocation2 + $0x398] sm:$0xff]
          %v4182 = vld [vmem:[#allocation2 + $0x3a0] sm:$0xff]
          %v4183 = vld [vmem:[#allocation2 + $0x3a8] sm:$0xff]
          %v4184 = vld [vmem:[#allocation2 + $0x3b0] sm:$0xff]
          %v4185 = vld [vmem:[#allocation2 + $0x3b8] sm:$0xff]
          %v4186 = vld [vmem:[#allocation2 + $0x3c0] sm:$0xff]
          %v4187 = vld [vmem:[#allocation2 + $0x3c8] sm:$0xff]
          %v4188 = vld [vmem:[#allocation2 + $0x3d0] sm:$0xff]
          %v4189 = vld [vmem:[#allocation2 + $0x3d8] sm:$0xff]
          %v4190 = vld [vmem:[#allocation2 + $0x3e0] sm:$0xff]
          %v4191 = vld [vmem:[#allocation2 + $0x3e8] sm:$0xff]
          %v4192 = vld [vmem:[#allocation2 + $0x3f0] sm:$0xff]
          %v4193 = vld [vmem:[#allocation2 + $0x3f8] sm:$0xff]
          %v4194 = vld [vmem:[#allocation2 + $0x400] sm:$0xff]
          %v4195 = vld [vmem:[#allocation2 + $0x408] sm:$0xff]
          %v4196 = vld [vmem:[#allocation2 + $0x410] sm:$0xff]
          %v4197 = vld [vmem:[#allocation2 + $0x418] sm:$0xff]
          %v4198 = vld [vmem:[#allocation2 + $0x420] sm:$0xff]
          %v4199 = vld [vmem:[#allocation2 + $0x428] sm:$0xff]
          %v4200 = vld [vmem:[#allocation2 + $0x430] sm:$0xff]
          %v4201 = vld [vmem:[#allocation2 + $0x438] sm:$0xff]
          %v4202 = vld [vmem:[#allocation2 + $0x440] sm:$0xff]
          %v4203 = vld [vmem:[#allocation2 + $0x448] sm:$0xff]
          %v4204 = vld [vmem:[#allocation2 + $0x450] sm:$0xff]
          %v4205 = vld [vmem:[#allocation2 + $0x458] sm:$0xff]
          %v4206 = vld [vmem:[#allocation2 + $0x460] sm:$0xff]
          %v4207 = vld [vmem:[#allocation2 + $0x468] sm:$0xff]
          %v4208 = vld [vmem:[#allocation2 + $0x470] sm:$0xff]
          %v4209 = vld [vmem:[#allocation2 + $0x478] sm:$0xff]
          %v4210 = vld [vmem:[#allocation2 + $0x480] sm:$0xff]
          %v4211 = vld [vmem:[#allocation2 + $0x488] sm:$0xff]
          %v4212 = vld [vmem:[#allocation2 + $0x490] sm:$0xff]
          %v4213 = vld [vmem:[#allocation2 + $0x498] sm:$0xff]
          %v4214 = vld [vmem:[#allocation2 + $0x4a0] sm:$0xff]
          %v4215 = vld [vmem:[#allocation2 + $0x4a8] sm:$0xff]
          %v4216 = vld [vmem:[#allocation2 + $0x4b0] sm:$0xff]
          %v4217 = vld [vmem:[#allocation2 + $0x4b8] sm:$0xff]
          %v4218 = vld [vmem:[#allocation2 + $0x4c0] sm:$0xff]
          %v4219 = vld [vmem:[#allocation2 + $0x4c8] sm:$0xff]
          %v4220 = vld [vmem:[#allocation2 + $0x4d0] sm:$0xff]
          %v4221 = vld [vmem:[#allocation2 + $0x4d8] sm:$0xff]
          %v4222 = vld [vmem:[#allocation2 + $0x4e0] sm:$0xff]
          %v4223 = vld [vmem:[#allocation2 + $0x4e8] sm:$0xff]
          %v4224 = vld [vmem:[#allocation2 + $0x4f0] sm:$0xff]
          %v4225 = vld [vmem:[#allocation2 + $0x4f8] sm:$0xff]
          %v4226 = vld [vmem:[#allocation2 + $0x500] sm:$0xff]
          %v4227 = vld [vmem:[#allocation2 + $0x508] sm:$0xff]
          %v4228 = vld [vmem:[#allocation2 + $0x510] sm:$0xff]
          %v4229 = vld [vmem:[#allocation2 + $0x518] sm:$0xff]
          %v4230 = vld [vmem:[#allocation2 + $0x520] sm:$0xff]
          %v4231 = vld [vmem:[#allocation2 + $0x528] sm:$0xff]
          %v4232 = vld [vmem:[#allocation2 + $0x530] sm:$0xff]
          %v4233 = vld [vmem:[#allocation2 + $0x538] sm:$0xff]
          %v4234 = vld [vmem:[#allocation2 + $0x540] sm:$0xff]
          %v4235 = vld [vmem:[#allocation2 + $0x548] sm:$0xff]
          %v4236 = vld [vmem:[#allocation2 + $0x550] sm:$0xff]
          %v4237 = vld [vmem:[#allocation2 + $0x558] sm:$0xff]
          %v4238 = vld [vmem:[#allocation2 + $0x560] sm:$0xff]
          %v4239 = vld [vmem:[#allocation2 + $0x568] sm:$0xff]
          %v4240 = vld [vmem:[#allocation2 + $0x570] sm:$0xff]
          %v4241 = vld [vmem:[#allocation2 + $0x578] sm:$0xff]
          %v4242 = vld [vmem:[#allocation2 + $0x580] sm:$0xff]
          %v4243 = vld [vmem:[#allocation2 + $0x588] sm:$0xff]
          %v4244 = vld [vmem:[#allocation2 + $0x590] sm:$0xff]
          %v4245 = vld [vmem:[#allocation2 + $0x598] sm:$0xff]
          %v4246 = vld [vmem:[#allocation2 + $0x5a0] sm:$0xff]
          %v4247 = vld [vmem:[#allocation2 + $0x5a8] sm:$0xff]
          %v4248 = vld [vmem:[#allocation2 + $0x5b0] sm:$0xff]
          %v4249 = vld [vmem:[#allocation2 + $0x5b8] sm:$0xff]
          %v4250 = vld [vmem:[#allocation2 + $0x5c0] sm:$0xff]
          %v4251 = vld [vmem:[#allocation2 + $0x5c8] sm:$0xff]
          %v4252 = vld [vmem:[#allocation2 + $0x5d0] sm:$0xff]
          %v4253 = vld [vmem:[#allocation2 + $0x5d8] sm:$0xff]
          %v4254 = vld [vmem:[#allocation2 + $0x5e0] sm:$0xff]
          %v4255 = vld [vmem:[#allocation2 + $0x5e8] sm:$0xff]
          %v4256 = vld [vmem:[#allocation2 + $0x5f0] sm:$0xff]
          %v4257 = vld [vmem:[#allocation2 + $0x5f8] sm:$0xff]
          %v4258 = vld [vmem:[#allocation2 + $0x600] sm:$0xff]
          %v4259 = vld [vmem:[#allocation2 + $0x608] sm:$0xff]
          %v4260 = vld [vmem:[#allocation2 + $0x610] sm:$0xff]
          %v4261 = vld [vmem:[#allocation2 + $0x618] sm:$0xff]
          %v4262 = vld [vmem:[#allocation2 + $0x620] sm:$0xff]
          %v4263 = vld [vmem:[#allocation2 + $0x628] sm:$0xff]
          %v4264 = vld [vmem:[#allocation2 + $0x630] sm:$0xff]
          %v4265 = vld [vmem:[#allocation2 + $0x638] sm:$0xff]
          %v4266 = vld [vmem:[#allocation2 + $0x640] sm:$0xff]
          %v4267 = vld [vmem:[#allocation2 + $0x648] sm:$0xff]
          %v4268 = vld [vmem:[#allocation2 + $0x650] sm:$0xff]
          %v4269 = vld [vmem:[#allocation2 + $0x658] sm:$0xff]
          %v4270 = vld [vmem:[#allocation2 + $0x660] sm:$0xff]
          %v4271 = vld [vmem:[#allocation2 + $0x668] sm:$0xff]
          %v4272 = vld [vmem:[#allocation2 + $0x670] sm:$0xff]
          %v4273 = vld [vmem:[#allocation2 + $0x678] sm:$0xff]
          %v4274 = vld [vmem:[#allocation2 + $0x680] sm:$0xff]
          %v4275 = vld [vmem:[#allocation2 + $0x688] sm:$0xff]
          %v4276 = vld [vmem:[#allocation2 + $0x690] sm:$0xff]
          %v4277 = vld [vmem:[#allocation2 + $0x698] sm:$0xff]
          %v4278 = vld [vmem:[#allocation2 + $0x6a0] sm:$0xff]
          %v4279 = vld [vmem:[#allocation2 + $0x6a8] sm:$0xff]
          %v4280 = vld [vmem:[#allocation2 + $0x6b0] sm:$0xff]
          %v4281 = vld [vmem:[#allocation2 + $0x6b8] sm:$0xff]
          %v4282 = vld [vmem:[#allocation2 + $0x6c0] sm:$0xff]
          %v4283 = vld [vmem:[#allocation2 + $0x6c8] sm:$0xff]
          %v4284 = vld [vmem:[#allocation2 + $0x6d0] sm:$0xff]
          %v4285 = vld [vmem:[#allocation2 + $0x6d8] sm:$0xff]
          %v4286 = vld [vmem:[#allocation2 + $0x6e0] sm:$0xff]
          %v4287 = vld [vmem:[#allocation2 + $0x6e8] sm:$0xff]
          %v4288 = vld [vmem:[#allocation2 + $0x6f0] sm:$0xff]
          %v4289 = vld [vmem:[#allocation2 + $0x6f8] sm:$0xff]
          %v4290 = vld [vmem:[#allocation2 + $0x700] sm:$0xff]
          %v4291 = vld [vmem:[#allocation2 + $0x708] sm:$0xff]
          %v4292 = vld [vmem:[#allocation2 + $0x710] sm:$0xff]
          %v4293 = vld [vmem:[#allocation2 + $0x718] sm:$0xff]
          %v4294 = vld [vmem:[#allocation2 + $0x720] sm:$0xff]
          %v4295 = vld [vmem:[#allocation2 + $0x728] sm:$0xff]
          %v4296 = vld [vmem:[#allocation2 + $0x730] sm:$0xff]
          %v4297 = vld [vmem:[#allocation2 + $0x738] sm:$0xff]
          %v4298 = vld [vmem:[#allocation2 + $0x740] sm:$0xff]
          %v4299 = vld [vmem:[#allocation2 + $0x748] sm:$0xff]
          %v4300 = vld [vmem:[#allocation2 + $0x750] sm:$0xff]
          %v4301 = vld [vmem:[#allocation2 + $0x758] sm:$0xff]
          %v4302 = vld [vmem:[#allocation2 + $0x760] sm:$0xff]
          %v4303 = vld [vmem:[#allocation2 + $0x768] sm:$0xff]
          %v4304 = vld [vmem:[#allocation2 + $0x770] sm:$0xff]
          %v4305 = vld [vmem:[#allocation2 + $0x778] sm:$0xff]
          %v4306 = vld [vmem:[#allocation2 + $0x780] sm:$0xff]
          %v4307 = vld [vmem:[#allocation2 + $0x788] sm:$0xff]
          %v4308 = vld [vmem:[#allocation2 + $0x790] sm:$0xff]
          %v4309 = vld [vmem:[#allocation2 + $0x798] sm:$0xff]
          %v4310 = vld [vmem:[#allocation2 + $0x7a0] sm:$0xff]
          %v4311 = vld [vmem:[#allocation2 + $0x7a8] sm:$0xff]
          %v4312 = vld [vmem:[#allocation2 + $0x7b0] sm:$0xff]
          %v4313 = vld [vmem:[#allocation2 + $0x7b8] sm:$0xff]
          %v4314 = vld [vmem:[#allocation2 + $0x7c0] sm:$0xff]
          %v4315 = vld [vmem:[#allocation2 + $0x7c8] sm:$0xff]
          %v4316 = vld [vmem:[#allocation2 + $0x7d0] sm:$0xff]
          %v4317 = vld [vmem:[#allocation2 + $0x7d8] sm:$0xff]
          %v4318 = vld [vmem:[#allocation2 + $0x7e0] sm:$0xff]
          %v4319 = vld [vmem:[#allocation2 + $0x7e8] sm:$0xff]
          %v4320 = vld [vmem:[#allocation2 + $0x7f0] sm:$0xff]
          %v4321 = vld [vmem:[#allocation2 + $0x7f8] sm:$0xff]
          %4323 = vset.pattern.permute.xlu0 0
          %4324 = vperm.xlu0 %4323, %v4050
          %v4325 = vpop.permute.xlu0 %4324
          %4328 = vset.pattern.permute.xlu0 0
          %4329 = vperm.xlu0 %4328, %v4051
          %v4330 = vpop.permute.xlu0 %4329
          %4333 = vset.pattern.permute.xlu0 0
          %4334 = vperm.xlu0 %4333, %v4052
          %v4335 = vpop.permute.xlu0 %4334
          %4338 = vset.pattern.permute.xlu0 0
          %4339 = vperm.xlu0 %4338, %v4053
          %v4340 = vpop.permute.xlu0 %4339
          %4343 = vset.pattern.permute.xlu0 0
          %4344 = vperm.xlu0 %4343, %v4054
          %v4345 = vpop.permute.xlu0 %4344
          %4348 = vset.pattern.permute.xlu0 0
          %4349 = vperm.xlu0 %4348, %v4055
          %v4350 = vpop.permute.xlu0 %4349
          %4353 = vset.pattern.permute.xlu0 0
          %4354 = vperm.xlu0 %4353, %v4056
          %v4355 = vpop.permute.xlu0 %4354
          %4358 = vset.pattern.permute.xlu0 0
          %4359 = vperm.xlu0 %4358, %v4057
          %v4360 = vpop.permute.xlu0 %4359
          %4363 = vset.pattern.permute.xlu0 0
          %4364 = vperm.xlu0 %4363, %v4058
          %v4365 = vpop.permute.xlu0 %4364
          %4368 = vset.pattern.permute.xlu0 0
          %4369 = vperm.xlu0 %4368, %v4059
          %v4370 = vpop.permute.xlu0 %4369
          %4373 = vset.pattern.permute.xlu0 0
          %4374 = vperm.xlu0 %4373, %v4060
          %v4375 = vpop.permute.xlu0 %4374
          %4378 = vset.pattern.permute.xlu0 0
          %4379 = vperm.xlu0 %4378, %v4061
          %v4380 = vpop.permute.xlu0 %4379
          %4383 = vset.pattern.permute.xlu0 0
          %4384 = vperm.xlu0 %4383, %v4062
          %v4385 = vpop.permute.xlu0 %4384
          %4388 = vset.pattern.permute.xlu0 0
          %4389 = vperm.xlu0 %4388, %v4063
          %v4390 = vpop.permute.xlu0 %4389
          %4393 = vset.pattern.permute.xlu0 0
          %4394 = vperm.xlu0 %4393, %v4064
          %v4395 = vpop.permute.xlu0 %4394
          %4398 = vset.pattern.permute.xlu0 0
          %4399 = vperm.xlu0 %4398, %v4065
          %v4400 = vpop.permute.xlu0 %4399
          %v4402 = vsub.f32 %v4066, %v4325
          %v4403 = vsub.f32 %v4067, %v4325
          %v4404 = vsub.f32 %v4068, %v4325
          %v4405 = vsub.f32 %v4069, %v4325
          %v4406 = vsub.f32 %v4070, %v4325
          %v4407 = vsub.f32 %v4071, %v4325
          %v4408 = vsub.f32 %v4072, %v4325
          %v4409 = vsub.f32 %v4073, %v4325
          %v4410 = vsub.f32 %v4074, %v4325
          %v4411 = vsub.f32 %v4075, %v4325
          %v4412 = vsub.f32 %v4076, %v4325
          %v4413 = vsub.f32 %v4077, %v4325
          %v4414 = vsub.f32 %v4078, %v4325
          %v4415 = vsub.f32 %v4079, %v4325
          %v4416 = vsub.f32 %v4080, %v4325
          %v4417 = vsub.f32 %v4081, %v4325
          %v4418 = vsub.f32 %v4082, %v4330
          %v4419 = vsub.f32 %v4083, %v4330
          %v4420 = vsub.f32 %v4084, %v4330
          %v4421 = vsub.f32 %v4085, %v4330
          %v4422 = vsub.f32 %v4086, %v4330
          %v4423 = vsub.f32 %v4087, %v4330
          %v4424 = vsub.f32 %v4088, %v4330
          %v4425 = vsub.f32 %v4089, %v4330
          %v4426 = vsub.f32 %v4090, %v4330
          %v4427 = vsub.f32 %v4091, %v4330
          %v4428 = vsub.f32 %v4092, %v4330
          %v4429 = vsub.f32 %v4093, %v4330
          %v4430 = vsub.f32 %v4094, %v4330
          %v4431 = vsub.f32 %v4095, %v4330
          %v4432 = vsub.f32 %v4096, %v4330
          %v4433 = vsub.f32 %v4097, %v4330
          %v4434 = vsub.f32 %v4098, %v4335
          %v4435 = vsub.f32 %v4099, %v4335
          %v4436 = vsub.f32 %v4100, %v4335
          %v4437 = vsub.f32 %v4101, %v4335
          %v4438 = vsub.f32 %v4102, %v4335
          %v4439 = vsub.f32 %v4103, %v4335
          %v4440 = vsub.f32 %v4104, %v4335
          %v4441 = vsub.f32 %v4105, %v4335
          %v4442 = vsub.f32 %v4106, %v4335
          %v4443 = vsub.f32 %v4107, %v4335
          %v4444 = vsub.f32 %v4108, %v4335
          %v4445 = vsub.f32 %v4109, %v4335
          %v4446 = vsub.f32 %v4110, %v4335
          %v4447 = vsub.f32 %v4111, %v4335
          %v4448 = vsub.f32 %v4112, %v4335
          %v4449 = vsub.f32 %v4113, %v4335
          %v4450 = vsub.f32 %v4114, %v4340
          %v4451 = vsub.f32 %v4115, %v4340
          %v4452 = vsub.f32 %v4116, %v4340
          %v4453 = vsub.f32 %v4117, %v4340
          %v4454 = vsub.f32 %v4118, %v4340
          %v4455 = vsub.f32 %v4119, %v4340
          %v4456 = vsub.f32 %v4120, %v4340
          %v4457 = vsub.f32 %v4121, %v4340
          %v4458 = vsub.f32 %v4122, %v4340
          %v4459 = vsub.f32 %v4123, %v4340
          %v4460 = vsub.f32 %v4124, %v4340
          %v4461 = vsub.f32 %v4125, %v4340
          %v4462 = vsub.f32 %v4126, %v4340
          %v4463 = vsub.f32 %v4127, %v4340
          %v4464 = vsub.f32 %v4128, %v4340
          %v4465 = vsub.f32 %v4129, %v4340
          %v4466 = vsub.f32 %v4130, %v4345
          %v4467 = vsub.f32 %v4131, %v4345
          %v4468 = vsub.f32 %v4132, %v4345
          %v4469 = vsub.f32 %v4133, %v4345
          %v4470 = vsub.f32 %v4134, %v4345
          %v4471 = vsub.f32 %v4135, %v4345
          %v4472 = vsub.f32 %v4136, %v4345
          %v4473 = vsub.f32 %v4137, %v4345
          %v4474 = vsub.f32 %v4138, %v4345
          %v4475 = vsub.f32 %v4139, %v4345
          %v4476 = vsub.f32 %v4140, %v4345
          %v4477 = vsub.f32 %v4141, %v4345
          %v4478 = vsub.f32 %v4142, %v4345
          %v4479 = vsub.f32 %v4143, %v4345
          %v4480 = vsub.f32 %v4144, %v4345
          %v4481 = vsub.f32 %v4145, %v4345
          %v4482 = vsub.f32 %v4146, %v4350
          %v4483 = vsub.f32 %v4147, %v4350
          %v4484 = vsub.f32 %v4148, %v4350
          %v4485 = vsub.f32 %v4149, %v4350
          %v4486 = vsub.f32 %v4150, %v4350
          %v4487 = vsub.f32 %v4151, %v4350
          %v4488 = vsub.f32 %v4152, %v4350
          %v4489 = vsub.f32 %v4153, %v4350
          %v4490 = vsub.f32 %v4154, %v4350
          %v4491 = vsub.f32 %v4155, %v4350
          %v4492 = vsub.f32 %v4156, %v4350
          %v4493 = vsub.f32 %v4157, %v4350
          %v4494 = vsub.f32 %v4158, %v4350
          %v4495 = vsub.f32 %v4159, %v4350
          %v4496 = vsub.f32 %v4160, %v4350
          %v4497 = vsub.f32 %v4161, %v4350
          %v4498 = vsub.f32 %v4162, %v4355
          %v4499 = vsub.f32 %v4163, %v4355
          %v4500 = vsub.f32 %v4164, %v4355
          %v4501 = vsub.f32 %v4165, %v4355
          %v4502 = vsub.f32 %v4166, %v4355
          %v4503 = vsub.f32 %v4167, %v4355
          %v4504 = vsub.f32 %v4168, %v4355
          %v4505 = vsub.f32 %v4169, %v4355
          %v4506 = vsub.f32 %v4170, %v4355
          %v4507 = vsub.f32 %v4171, %v4355
          %v4508 = vsub.f32 %v4172, %v4355
          %v4509 = vsub.f32 %v4173, %v4355
          %v4510 = vsub.f32 %v4174, %v4355
          %v4511 = vsub.f32 %v4175, %v4355
          %v4512 = vsub.f32 %v4176, %v4355
          %v4513 = vsub.f32 %v4177, %v4355
          %v4514 = vsub.f32 %v4178, %v4360
          %v4515 = vsub.f32 %v4179, %v4360
          %v4516 = vsub.f32 %v4180, %v4360
          %v4517 = vsub.f32 %v4181, %v4360
          %v4518 = vsub.f32 %v4182, %v4360
          %v4519 = vsub.f32 %v4183, %v4360
          %v4520 = vsub.f32 %v4184, %v4360
          %v4521 = vsub.f32 %v4185, %v4360
          %v4522 = vsub.f32 %v4186, %v4360
          %v4523 = vsub.f32 %v4187, %v4360
          %v4524 = vsub.f32 %v4188, %v4360
          %v4525 = vsub.f32 %v4189, %v4360
          %v4526 = vsub.f32 %v4190, %v4360
          %v4527 = vsub.f32 %v4191, %v4360
          %v4528 = vsub.f32 %v4192, %v4360
          %v4529 = vsub.f32 %v4193, %v4360
          %v4530 = vsub.f32 %v4194, %v4365
          %v4531 = vsub.f32 %v4195, %v4365
          %v4532 = vsub.f32 %v4196, %v4365
          %v4533 = vsub.f32 %v4197, %v4365
          %v4534 = vsub.f32 %v4198, %v4365
          %v4535 = vsub.f32 %v4199, %v4365
          %v4536 = vsub.f32 %v4200, %v4365
          %v4537 = vsub.f32 %v4201, %v4365
          %v4538 = vsub.f32 %v4202, %v4365
          %v4539 = vsub.f32 %v4203, %v4365
          %v4540 = vsub.f32 %v4204, %v4365
          %v4541 = vsub.f32 %v4205, %v4365
          %v4542 = vsub.f32 %v4206, %v4365
          %v4543 = vsub.f32 %v4207, %v4365
          %v4544 = vsub.f32 %v4208, %v4365
          %v4545 = vsub.f32 %v4209, %v4365
          %v4546 = vsub.f32 %v4210, %v4370
          %v4547 = vsub.f32 %v4211, %v4370
          %v4548 = vsub.f32 %v4212, %v4370
          %v4549 = vsub.f32 %v4213, %v4370
          %v4550 = vsub.f32 %v4214, %v4370
          %v4551 = vsub.f32 %v4215, %v4370
          %v4552 = vsub.f32 %v4216, %v4370
          %v4553 = vsub.f32 %v4217, %v4370
          %v4554 = vsub.f32 %v4218, %v4370
          %v4555 = vsub.f32 %v4219, %v4370
          %v4556 = vsub.f32 %v4220, %v4370
          %v4557 = vsub.f32 %v4221, %v4370
          %v4558 = vsub.f32 %v4222, %v4370
          %v4559 = vsub.f32 %v4223, %v4370
          %v4560 = vsub.f32 %v4224, %v4370
          %v4561 = vsub.f32 %v4225, %v4370
          %v4562 = vsub.f32 %v4226, %v4375
          %v4563 = vsub.f32 %v4227, %v4375
          %v4564 = vsub.f32 %v4228, %v4375
          %v4565 = vsub.f32 %v4229, %v4375
          %v4566 = vsub.f32 %v4230, %v4375
          %v4567 = vsub.f32 %v4231, %v4375
          %v4568 = vsub.f32 %v4232, %v4375
          %v4569 = vsub.f32 %v4233, %v4375
          %v4570 = vsub.f32 %v4234, %v4375
          %v4571 = vsub.f32 %v4235, %v4375
          %v4572 = vsub.f32 %v4236, %v4375
          %v4573 = vsub.f32 %v4237, %v4375
          %v4574 = vsub.f32 %v4238, %v4375
          %v4575 = vsub.f32 %v4239, %v4375
          %v4576 = vsub.f32 %v4240, %v4375
          %v4577 = vsub.f32 %v4241, %v4375
          %v4578 = vsub.f32 %v4242, %v4380
          %v4579 = vsub.f32 %v4243, %v4380
          %v4580 = vsub.f32 %v4244, %v4380
          %v4581 = vsub.f32 %v4245, %v4380
          %v4582 = vsub.f32 %v4246, %v4380
          %v4583 = vsub.f32 %v4247, %v4380
          %v4584 = vsub.f32 %v4248, %v4380
          %v4585 = vsub.f32 %v4249, %v4380
          %v4586 = vsub.f32 %v4250, %v4380
          %v4587 = vsub.f32 %v4251, %v4380
          %v4588 = vsub.f32 %v4252, %v4380
          %v4589 = vsub.f32 %v4253, %v4380
          %v4590 = vsub.f32 %v4254, %v4380
          %v4591 = vsub.f32 %v4255, %v4380
          %v4592 = vsub.f32 %v4256, %v4380
          %v4593 = vsub.f32 %v4257, %v4380
          %v4594 = vsub.f32 %v4258, %v4385
          %v4595 = vsub.f32 %v4259, %v4385
          %v4596 = vsub.f32 %v4260, %v4385
          %v4597 = vsub.f32 %v4261, %v4385
          %v4598 = vsub.f32 %v4262, %v4385
          %v4599 = vsub.f32 %v4263, %v4385
          %v4600 = vsub.f32 %v4264, %v4385
          %v4601 = vsub.f32 %v4265, %v4385
          %v4602 = vsub.f32 %v4266, %v4385
          %v4603 = vsub.f32 %v4267, %v4385
          %v4604 = vsub.f32 %v4268, %v4385
          %v4605 = vsub.f32 %v4269, %v4385
          %v4606 = vsub.f32 %v4270, %v4385
          %v4607 = vsub.f32 %v4271, %v4385
          %v4608 = vsub.f32 %v4272, %v4385
          %v4609 = vsub.f32 %v4273, %v4385
          %v4610 = vsub.f32 %v4274, %v4390
          %v4611 = vsub.f32 %v4275, %v4390
          %v4612 = vsub.f32 %v4276, %v4390
          %v4613 = vsub.f32 %v4277, %v4390
          %v4614 = vsub.f32 %v4278, %v4390
          %v4615 = vsub.f32 %v4279, %v4390
          %v4616 = vsub.f32 %v4280, %v4390
          %v4617 = vsub.f32 %v4281, %v4390
          %v4618 = vsub.f32 %v4282, %v4390
          %v4619 = vsub.f32 %v4283, %v4390
          %v4620 = vsub.f32 %v4284, %v4390
          %v4621 = vsub.f32 %v4285, %v4390
          %v4622 = vsub.f32 %v4286, %v4390
          %v4623 = vsub.f32 %v4287, %v4390
          %v4624 = vsub.f32 %v4288, %v4390
          %v4625 = vsub.f32 %v4289, %v4390
          %v4626 = vsub.f32 %v4290, %v4395
          %v4627 = vsub.f32 %v4291, %v4395
          %v4628 = vsub.f32 %v4292, %v4395
          %v4629 = vsub.f32 %v4293, %v4395
          %v4630 = vsub.f32 %v4294, %v4395
          %v4631 = vsub.f32 %v4295, %v4395
          %v4632 = vsub.f32 %v4296, %v4395
          %v4633 = vsub.f32 %v4297, %v4395
          %v4634 = vsub.f32 %v4298, %v4395
          %v4635 = vsub.f32 %v4299, %v4395
          %v4636 = vsub.f32 %v4300, %v4395
          %v4637 = vsub.f32 %v4301, %v4395
          %v4638 = vsub.f32 %v4302, %v4395
          %v4639 = vsub.f32 %v4303, %v4395
          %v4640 = vsub.f32 %v4304, %v4395
          %v4641 = vsub.f32 %v4305, %v4395
          %v4642 = vsub.f32 %v4306, %v4400
          %v4643 = vsub.f32 %v4307, %v4400
          %v4644 = vsub.f32 %v4308, %v4400
          %v4645 = vsub.f32 %v4309, %v4400
          %v4646 = vsub.f32 %v4310, %v4400
          %v4647 = vsub.f32 %v4311, %v4400
          %v4648 = vsub.f32 %v4312, %v4400
          %v4649 = vsub.f32 %v4313, %v4400
          %v4650 = vsub.f32 %v4314, %v4400
          %v4651 = vsub.f32 %v4315, %v4400
          %v4652 = vsub.f32 %v4316, %v4400
          %v4653 = vsub.f32 %v4317, %v4400
          %v4654 = vsub.f32 %v4318, %v4400
          %v4655 = vsub.f32 %v4319, %v4400
          %v4656 = vsub.f32 %v4320, %v4400
          %v4657 = vsub.f32 %v4321, %v4400
          %4658 = vst [vmem:[%s470] sm:$0xff] %v4402
          %4659 = vst [vmem:[%s470 + $0x8] sm:$0xff] %v4403
          %4660 = vst [vmem:[%s470 + $0x10] sm:$0xff] %v4404
          %4661 = vst [vmem:[%s470 + $0x18] sm:$0xff] %v4405
          %4662 = vst [vmem:[%s470 + $0x20] sm:$0xff] %v4406
          %4663 = vst [vmem:[%s470 + $0x28] sm:$0xff] %v4407
          %4664 = vst [vmem:[%s470 + $0x30] sm:$0xff] %v4408
          %4665 = vst [vmem:[%s470 + $0x38] sm:$0xff] %v4409
          %4666 = vst [vmem:[%s470 + $0x40] sm:$0xff] %v4410
          %4667 = vst [vmem:[%s470 + $0x48] sm:$0xff] %v4411
          %4668 = vst [vmem:[%s470 + $0x50] sm:$0xff] %v4412
          %4669 = vst [vmem:[%s470 + $0x58] sm:$0xff] %v4413
          %4670 = vst [vmem:[%s470 + $0x60] sm:$0xff] %v4414
          %4671 = vst [vmem:[%s470 + $0x68] sm:$0xff] %v4415
          %4672 = vst [vmem:[%s470 + $0x70] sm:$0xff] %v4416
          %4673 = vst [vmem:[%s470 + $0x78] sm:$0xff] %v4417
          %4674 = vst [vmem:[%s470 + $0x100] sm:$0xff] %v4418
          %4675 = vst [vmem:[%s470 + $0x108] sm:$0xff] %v4419
          %4676 = vst [vmem:[%s470 + $0x110] sm:$0xff] %v4420
          %4677 = vst [vmem:[%s470 + $0x118] sm:$0xff] %v4421
          %4678 = vst [vmem:[%s470 + $0x120] sm:$0xff] %v4422
          %4679 = vst [vmem:[%s470 + $0x128] sm:$0xff] %v4423
          %4680 = vst [vmem:[%s470 + $0x130] sm:$0xff] %v4424
          %4681 = vst [vmem:[%s470 + $0x138] sm:$0xff] %v4425
          %4682 = vst [vmem:[%s470 + $0x140] sm:$0xff] %v4426
          %4683 = vst [vmem:[%s470 + $0x148] sm:$0xff] %v4427
          %4684 = vst [vmem:[%s470 + $0x150] sm:$0xff] %v4428
          %4685 = vst [vmem:[%s470 + $0x158] sm:$0xff] %v4429
          %4686 = vst [vmem:[%s470 + $0x160] sm:$0xff] %v4430
          %4687 = vst [vmem:[%s470 + $0x168] sm:$0xff] %v4431
          %4688 = vst [vmem:[%s470 + $0x170] sm:$0xff] %v4432
          %4689 = vst [vmem:[%s470 + $0x178] sm:$0xff] %v4433
          %4690 = vst [vmem:[%s470 + $0x200] sm:$0xff] %v4434
          %4691 = vst [vmem:[%s470 + $0x208] sm:$0xff] %v4435
          %4692 = vst [vmem:[%s470 + $0x210] sm:$0xff] %v4436
          %4693 = vst [vmem:[%s470 + $0x218] sm:$0xff] %v4437
          %4694 = vst [vmem:[%s470 + $0x220] sm:$0xff] %v4438
          %4695 = vst [vmem:[%s470 + $0x228] sm:$0xff] %v4439
          %4696 = vst [vmem:[%s470 + $0x230] sm:$0xff] %v4440
          %4697 = vst [vmem:[%s470 + $0x238] sm:$0xff] %v4441
          %4698 = vst [vmem:[%s470 + $0x240] sm:$0xff] %v4442
          %4699 = vst [vmem:[%s470 + $0x248] sm:$0xff] %v4443
          %4700 = vst [vmem:[%s470 + $0x250] sm:$0xff] %v4444
          %4701 = vst [vmem:[%s470 + $0x258] sm:$0xff] %v4445
          %4702 = vst [vmem:[%s470 + $0x260] sm:$0xff] %v4446
          %4703 = vst [vmem:[%s470 + $0x268] sm:$0xff] %v4447
          %4704 = vst [vmem:[%s470 + $0x270] sm:$0xff] %v4448
          %4705 = vst [vmem:[%s470 + $0x278] sm:$0xff] %v4449
          %4706 = vst [vmem:[%s470 + $0x300] sm:$0xff] %v4450
          %4707 = vst [vmem:[%s470 + $0x308] sm:$0xff] %v4451
          %4708 = vst [vmem:[%s470 + $0x310] sm:$0xff] %v4452
          %4709 = vst [vmem:[%s470 + $0x318] sm:$0xff] %v4453
          %4710 = vst [vmem:[%s470 + $0x320] sm:$0xff] %v4454
          %4711 = vst [vmem:[%s470 + $0x328] sm:$0xff] %v4455
          %4712 = vst [vmem:[%s470 + $0x330] sm:$0xff] %v4456
          %4713 = vst [vmem:[%s470 + $0x338] sm:$0xff] %v4457
          %4714 = vst [vmem:[%s470 + $0x340] sm:$0xff] %v4458
          %4715 = vst [vmem:[%s470 + $0x348] sm:$0xff] %v4459
          %4716 = vst [vmem:[%s470 + $0x350] sm:$0xff] %v4460
          %4717 = vst [vmem:[%s470 + $0x358] sm:$0xff] %v4461
          %4718 = vst [vmem:[%s470 + $0x360] sm:$0xff] %v4462
          %4719 = vst [vmem:[%s470 + $0x368] sm:$0xff] %v4463
          %4720 = vst [vmem:[%s470 + $0x370] sm:$0xff] %v4464
          %4721 = vst [vmem:[%s470 + $0x378] sm:$0xff] %v4465
          %4722 = vst [vmem:[%s470 + $0x400] sm:$0xff] %v4466
          %4723 = vst [vmem:[%s470 + $0x408] sm:$0xff] %v4467
          %4724 = vst [vmem:[%s470 + $0x410] sm:$0xff] %v4468
          %4725 = vst [vmem:[%s470 + $0x418] sm:$0xff] %v4469
          %4726 = vst [vmem:[%s470 + $0x420] sm:$0xff] %v4470
          %4727 = vst [vmem:[%s470 + $0x428] sm:$0xff] %v4471
          %4728 = vst [vmem:[%s470 + $0x430] sm:$0xff] %v4472
          %4729 = vst [vmem:[%s470 + $0x438] sm:$0xff] %v4473
          %4730 = vst [vmem:[%s470 + $0x440] sm:$0xff] %v4474
          %4731 = vst [vmem:[%s470 + $0x448] sm:$0xff] %v4475
          %4732 = vst [vmem:[%s470 + $0x450] sm:$0xff] %v4476
          %4733 = vst [vmem:[%s470 + $0x458] sm:$0xff] %v4477
          %4734 = vst [vmem:[%s470 + $0x460] sm:$0xff] %v4478
          %4735 = vst [vmem:[%s470 + $0x468] sm:$0xff] %v4479
          %4736 = vst [vmem:[%s470 + $0x470] sm:$0xff] %v4480
          %4737 = vst [vmem:[%s470 + $0x478] sm:$0xff] %v4481
          %4738 = vst [vmem:[%s470 + $0x500] sm:$0xff] %v4482
          %4739 = vst [vmem:[%s470 + $0x508] sm:$0xff] %v4483
          %4740 = vst [vmem:[%s470 + $0x510] sm:$0xff] %v4484
          %4741 = vst [vmem:[%s470 + $0x518] sm:$0xff] %v4485
          %4742 = vst [vmem:[%s470 + $0x520] sm:$0xff] %v4486
          %4743 = vst [vmem:[%s470 + $0x528] sm:$0xff] %v4487
          %4744 = vst [vmem:[%s470 + $0x530] sm:$0xff] %v4488
          %4745 = vst [vmem:[%s470 + $0x538] sm:$0xff] %v4489
          %4746 = vst [vmem:[%s470 + $0x540] sm:$0xff] %v4490
          %4747 = vst [vmem:[%s470 + $0x548] sm:$0xff] %v4491
          %4748 = vst [vmem:[%s470 + $0x550] sm:$0xff] %v4492
          %4749 = vst [vmem:[%s470 + $0x558] sm:$0xff] %v4493
          %4750 = vst [vmem:[%s470 + $0x560] sm:$0xff] %v4494
          %4751 = vst [vmem:[%s470 + $0x568] sm:$0xff] %v4495
          %4752 = vst [vmem:[%s470 + $0x570] sm:$0xff] %v4496
          %4753 = vst [vmem:[%s470 + $0x578] sm:$0xff] %v4497
          %4754 = vst [vmem:[%s470 + $0x600] sm:$0xff] %v4498
          %4755 = vst [vmem:[%s470 + $0x608] sm:$0xff] %v4499
          %4756 = vst [vmem:[%s470 + $0x610] sm:$0xff] %v4500
          %4757 = vst [vmem:[%s470 + $0x618] sm:$0xff] %v4501
          %4758 = vst [vmem:[%s470 + $0x620] sm:$0xff] %v4502
          %4759 = vst [vmem:[%s470 + $0x628] sm:$0xff] %v4503
          %4760 = vst [vmem:[%s470 + $0x630] sm:$0xff] %v4504
          %4761 = vst [vmem:[%s470 + $0x638] sm:$0xff] %v4505
          %4762 = vst [vmem:[%s470 + $0x640] sm:$0xff] %v4506
          %4763 = vst [vmem:[%s470 + $0x648] sm:$0xff] %v4507
          %4764 = vst [vmem:[%s470 + $0x650] sm:$0xff] %v4508
          %4765 = vst [vmem:[%s470 + $0x658] sm:$0xff] %v4509
          %4766 = vst [vmem:[%s470 + $0x660] sm:$0xff] %v4510
          %4767 = vst [vmem:[%s470 + $0x668] sm:$0xff] %v4511
          %4768 = vst [vmem:[%s470 + $0x670] sm:$0xff] %v4512
          %4769 = vst [vmem:[%s470 + $0x678] sm:$0xff] %v4513
          %4770 = vst [vmem:[%s470 + $0x700] sm:$0xff] %v4514
          %4771 = vst [vmem:[%s470 + $0x708] sm:$0xff] %v4515
          %4772 = vst [vmem:[%s470 + $0x710] sm:$0xff] %v4516
          %4773 = vst [vmem:[%s470 + $0x718] sm:$0xff] %v4517
          %4774 = vst [vmem:[%s470 + $0x720] sm:$0xff] %v4518
          %4775 = vst [vmem:[%s470 + $0x728] sm:$0xff] %v4519
          %4776 = vst [vmem:[%s470 + $0x730] sm:$0xff] %v4520
          %4777 = vst [vmem:[%s470 + $0x738] sm:$0xff] %v4521
          %4778 = vst [vmem:[%s470 + $0x740] sm:$0xff] %v4522
          %4779 = vst [vmem:[%s470 + $0x748] sm:$0xff] %v4523
          %4780 = vst [vmem:[%s470 + $0x750] sm:$0xff] %v4524
          %4781 = vst [vmem:[%s470 + $0x758] sm:$0xff] %v4525
          %4782 = vst [vmem:[%s470 + $0x760] sm:$0xff] %v4526
          %4783 = vst [vmem:[%s470 + $0x768] sm:$0xff] %v4527
          %4784 = vst [vmem:[%s470 + $0x770] sm:$0xff] %v4528
          %4785 = vst [vmem:[%s470 + $0x778] sm:$0xff] %v4529
          %4786 = vst [vmem:[%s470 + $0x800] sm:$0xff] %v4530
          %4787 = vst [vmem:[%s470 + $0x808] sm:$0xff] %v4531
          %4788 = vst [vmem:[%s470 + $0x810] sm:$0xff] %v4532
          %4789 = vst [vmem:[%s470 + $0x818] sm:$0xff] %v4533
          %4790 = vst [vmem:[%s470 + $0x820] sm:$0xff] %v4534
          %4791 = vst [vmem:[%s470 + $0x828] sm:$0xff] %v4535
          %4792 = vst [vmem:[%s470 + $0x830] sm:$0xff] %v4536
          %4793 = vst [vmem:[%s470 + $0x838] sm:$0xff] %v4537
          %4794 = vst [vmem:[%s470 + $0x840] sm:$0xff] %v4538
          %4795 = vst [vmem:[%s470 + $0x848] sm:$0xff] %v4539
          %4796 = vst [vmem:[%s470 + $0x850] sm:$0xff] %v4540
          %4797 = vst [vmem:[%s470 + $0x858] sm:$0xff] %v4541
          %4798 = vst [vmem:[%s470 + $0x860] sm:$0xff] %v4542
          %4799 = vst [vmem:[%s470 + $0x868] sm:$0xff] %v4543
          %4800 = vst [vmem:[%s470 + $0x870] sm:$0xff] %v4544
          %4801 = vst [vmem:[%s470 + $0x878] sm:$0xff] %v4545
          %4802 = vst [vmem:[%s470 + $0x900] sm:$0xff] %v4546
          %4803 = vst [vmem:[%s470 + $0x908] sm:$0xff] %v4547
          %4804 = vst [vmem:[%s470 + $0x910] sm:$0xff] %v4548
          %4805 = vst [vmem:[%s470 + $0x918] sm:$0xff] %v4549
          %4806 = vst [vmem:[%s470 + $0x920] sm:$0xff] %v4550
          %4807 = vst [vmem:[%s470 + $0x928] sm:$0xff] %v4551
          %4808 = vst [vmem:[%s470 + $0x930] sm:$0xff] %v4552
          %4809 = vst [vmem:[%s470 + $0x938] sm:$0xff] %v4553
          %4810 = vst [vmem:[%s470 + $0x940] sm:$0xff] %v4554
          %4811 = vst [vmem:[%s470 + $0x948] sm:$0xff] %v4555
          %4812 = vst [vmem:[%s470 + $0x950] sm:$0xff] %v4556
          %4813 = vst [vmem:[%s470 + $0x958] sm:$0xff] %v4557
          %4814 = vst [vmem:[%s470 + $0x960] sm:$0xff] %v4558
          %4815 = vst [vmem:[%s470 + $0x968] sm:$0xff] %v4559
          %4816 = vst [vmem:[%s470 + $0x970] sm:$0xff] %v4560
          %4817 = vst [vmem:[%s470 + $0x978] sm:$0xff] %v4561
          %4818 = vst [vmem:[%s470 + $0xa00] sm:$0xff] %v4562
          %4819 = vst [vmem:[%s470 + $0xa08] sm:$0xff] %v4563
          %4820 = vst [vmem:[%s470 + $0xa10] sm:$0xff] %v4564
          %4821 = vst [vmem:[%s470 + $0xa18] sm:$0xff] %v4565
          %4822 = vst [vmem:[%s470 + $0xa20] sm:$0xff] %v4566
          %4823 = vst [vmem:[%s470 + $0xa28] sm:$0xff] %v4567
          %4824 = vst [vmem:[%s470 + $0xa30] sm:$0xff] %v4568
          %4825 = vst [vmem:[%s470 + $0xa38] sm:$0xff] %v4569
          %4826 = vst [vmem:[%s470 + $0xa40] sm:$0xff] %v4570
          %4827 = vst [vmem:[%s470 + $0xa48] sm:$0xff] %v4571
          %4828 = vst [vmem:[%s470 + $0xa50] sm:$0xff] %v4572
          %4829 = vst [vmem:[%s470 + $0xa58] sm:$0xff] %v4573
          %4830 = vst [vmem:[%s470 + $0xa60] sm:$0xff] %v4574
          %4831 = vst [vmem:[%s470 + $0xa68] sm:$0xff] %v4575
          %4832 = vst [vmem:[%s470 + $0xa70] sm:$0xff] %v4576
          %4833 = vst [vmem:[%s470 + $0xa78] sm:$0xff] %v4577
          %4834 = vst [vmem:[%s470 + $0xb00] sm:$0xff] %v4578
          %4835 = vst [vmem:[%s470 + $0xb08] sm:$0xff] %v4579
          %4836 = vst [vmem:[%s470 + $0xb10] sm:$0xff] %v4580
          %4837 = vst [vmem:[%s470 + $0xb18] sm:$0xff] %v4581
          %4838 = vst [vmem:[%s470 + $0xb20] sm:$0xff] %v4582
          %4839 = vst [vmem:[%s470 + $0xb28] sm:$0xff] %v4583
          %4840 = vst [vmem:[%s470 + $0xb30] sm:$0xff] %v4584
          %4841 = vst [vmem:[%s470 + $0xb38] sm:$0xff] %v4585
          %4842 = vst [vmem:[%s470 + $0xb40] sm:$0xff] %v4586
          %4843 = vst [vmem:[%s470 + $0xb48] sm:$0xff] %v4587
          %4844 = vst [vmem:[%s470 + $0xb50] sm:$0xff] %v4588
          %4845 = vst [vmem:[%s470 + $0xb58] sm:$0xff] %v4589
          %4846 = vst [vmem:[%s470 + $0xb60] sm:$0xff] %v4590
          %4847 = vst [vmem:[%s470 + $0xb68] sm:$0xff] %v4591
          %4848 = vst [vmem:[%s470 + $0xb70] sm:$0xff] %v4592
          %4849 = vst [vmem:[%s470 + $0xb78] sm:$0xff] %v4593
          %4850 = vst [vmem:[%s470 + $0xc00] sm:$0xff] %v4594
          %4851 = vst [vmem:[%s470 + $0xc08] sm:$0xff] %v4595
          %4852 = vst [vmem:[%s470 + $0xc10] sm:$0xff] %v4596
          %4853 = vst [vmem:[%s470 + $0xc18] sm:$0xff] %v4597
          %4854 = vst [vmem:[%s470 + $0xc20] sm:$0xff] %v4598
          %4855 = vst [vmem:[%s470 + $0xc28] sm:$0xff] %v4599
          %4856 = vst [vmem:[%s470 + $0xc30] sm:$0xff] %v4600
          %4857 = vst [vmem:[%s470 + $0xc38] sm:$0xff] %v4601
          %4858 = vst [vmem:[%s470 + $0xc40] sm:$0xff] %v4602
          %4859 = vst [vmem:[%s470 + $0xc48] sm:$0xff] %v4603
          %4860 = vst [vmem:[%s470 + $0xc50] sm:$0xff] %v4604
          %4861 = vst [vmem:[%s470 + $0xc58] sm:$0xff] %v4605
          %4862 = vst [vmem:[%s470 + $0xc60] sm:$0xff] %v4606
          %4863 = vst [vmem:[%s470 + $0xc68] sm:$0xff] %v4607
          %4864 = vst [vmem:[%s470 + $0xc70] sm:$0xff] %v4608
          %4865 = vst [vmem:[%s470 + $0xc78] sm:$0xff] %v4609
          %4866 = vst [vmem:[%s470 + $0xd00] sm:$0xff] %v4610
          %4867 = vst [vmem:[%s470 + $0xd08] sm:$0xff] %v4611
          %4868 = vst [vmem:[%s470 + $0xd10] sm:$0xff] %v4612
          %4869 = vst [vmem:[%s470 + $0xd18] sm:$0xff] %v4613
          %4870 = vst [vmem:[%s470 + $0xd20] sm:$0xff] %v4614
          %4871 = vst [vmem:[%s470 + $0xd28] sm:$0xff] %v4615
          %4872 = vst [vmem:[%s470 + $0xd30] sm:$0xff] %v4616
          %4873 = vst [vmem:[%s470 + $0xd38] sm:$0xff] %v4617
          %4874 = vst [vmem:[%s470 + $0xd40] sm:$0xff] %v4618
          %4875 = vst [vmem:[%s470 + $0xd48] sm:$0xff] %v4619
          %4876 = vst [vmem:[%s470 + $0xd50] sm:$0xff] %v4620
          %4877 = vst [vmem:[%s470 + $0xd58] sm:$0xff] %v4621
          %4878 = vst [vmem:[%s470 + $0xd60] sm:$0xff] %v4622
          %4879 = vst [vmem:[%s470 + $0xd68] sm:$0xff] %v4623
          %4880 = vst [vmem:[%s470 + $0xd70] sm:$0xff] %v4624
          %4881 = vst [vmem:[%s470 + $0xd78] sm:$0xff] %v4625
          %4882 = vst [vmem:[%s470 + $0xe00] sm:$0xff] %v4626
          %4883 = vst [vmem:[%s470 + $0xe08] sm:$0xff] %v4627
          %4884 = vst [vmem:[%s470 + $0xe10] sm:$0xff] %v4628
          %4885 = vst [vmem:[%s470 + $0xe18] sm:$0xff] %v4629
          %4886 = vst [vmem:[%s470 + $0xe20] sm:$0xff] %v4630
          %4887 = vst [vmem:[%s470 + $0xe28] sm:$0xff] %v4631
          %4888 = vst [vmem:[%s470 + $0xe30] sm:$0xff] %v4632
          %4889 = vst [vmem:[%s470 + $0xe38] sm:$0xff] %v4633
          %4890 = vst [vmem:[%s470 + $0xe40] sm:$0xff] %v4634
          %4891 = vst [vmem:[%s470 + $0xe48] sm:$0xff] %v4635
          %4892 = vst [vmem:[%s470 + $0xe50] sm:$0xff] %v4636
          %4893 = vst [vmem:[%s470 + $0xe58] sm:$0xff] %v4637
          %4894 = vst [vmem:[%s470 + $0xe60] sm:$0xff] %v4638
          %4895 = vst [vmem:[%s470 + $0xe68] sm:$0xff] %v4639
          %4896 = vst [vmem:[%s470 + $0xe70] sm:$0xff] %v4640
          %4897 = vst [vmem:[%s470 + $0xe78] sm:$0xff] %v4641
          %4898 = vst [vmem:[%s470 + $0xf00] sm:$0xff] %v4642
          %4899 = vst [vmem:[%s470 + $0xf08] sm:$0xff] %v4643
          %4900 = vst [vmem:[%s470 + $0xf10] sm:$0xff] %v4644
          %4901 = vst [vmem:[%s470 + $0xf18] sm:$0xff] %v4645
          %4902 = vst [vmem:[%s470 + $0xf20] sm:$0xff] %v4646
          %4903 = vst [vmem:[%s470 + $0xf28] sm:$0xff] %v4647
          %4904 = vst [vmem:[%s470 + $0xf30] sm:$0xff] %v4648
          %4905 = vst [vmem:[%s470 + $0xf38] sm:$0xff] %v4649
          %4906 = vst [vmem:[%s470 + $0xf40] sm:$0xff] %v4650
          %4907 = vst [vmem:[%s470 + $0xf48] sm:$0xff] %v4651
          %4908 = vst [vmem:[%s470 + $0xf50] sm:$0xff] %v4652
          %4909 = vst [vmem:[%s470 + $0xf58] sm:$0xff] %v4653
          %4910 = vst [vmem:[%s470 + $0xf60] sm:$0xff] %v4654
          %4911 = vst [vmem:[%s470 + $0xf68] sm:$0xff] %v4655
          %4912 = vst [vmem:[%s470 + $0xf70] sm:$0xff] %v4656
          %4913 = vst [vmem:[%s470 + $0xf78] sm:$0xff] %v4657
          %s4914 = scalar_lea.vmem [#allocation2], 2048
          %v4915 = vld [vmem:[%s4914] sm:$0xff]
          %v4916 = vld [vmem:[%s4914 + $0x8] sm:$0xff]
          %v4917 = vld [vmem:[%s4914 + $0x10] sm:$0xff]
          %v4918 = vld [vmem:[%s4914 + $0x18] sm:$0xff]
          %v4919 = vld [vmem:[%s4914 + $0x20] sm:$0xff]
          %v4920 = vld [vmem:[%s4914 + $0x28] sm:$0xff]
          %v4921 = vld [vmem:[%s4914 + $0x30] sm:$0xff]
          %v4922 = vld [vmem:[%s4914 + $0x38] sm:$0xff]
          %v4923 = vld [vmem:[%s4914 + $0x40] sm:$0xff]
          %v4924 = vld [vmem:[%s4914 + $0x48] sm:$0xff]
          %v4925 = vld [vmem:[%s4914 + $0x50] sm:$0xff]
          %v4926 = vld [vmem:[%s4914 + $0x58] sm:$0xff]
          %v4927 = vld [vmem:[%s4914 + $0x60] sm:$0xff]
          %v4928 = vld [vmem:[%s4914 + $0x68] sm:$0xff]
          %v4929 = vld [vmem:[%s4914 + $0x70] sm:$0xff]
          %v4930 = vld [vmem:[%s4914 + $0x78] sm:$0xff]
          %v4931 = vld [vmem:[%s4914 + $0x80] sm:$0xff]
          %v4932 = vld [vmem:[%s4914 + $0x88] sm:$0xff]
          %v4933 = vld [vmem:[%s4914 + $0x90] sm:$0xff]
          %v4934 = vld [vmem:[%s4914 + $0x98] sm:$0xff]
          %v4935 = vld [vmem:[%s4914 + $0xa0] sm:$0xff]
          %v4936 = vld [vmem:[%s4914 + $0xa8] sm:$0xff]
          %v4937 = vld [vmem:[%s4914 + $0xb0] sm:$0xff]
          %v4938 = vld [vmem:[%s4914 + $0xb8] sm:$0xff]
          %v4939 = vld [vmem:[%s4914 + $0xc0] sm:$0xff]
          %v4940 = vld [vmem:[%s4914 + $0xc8] sm:$0xff]
          %v4941 = vld [vmem:[%s4914 + $0xd0] sm:$0xff]
          %v4942 = vld [vmem:[%s4914 + $0xd8] sm:$0xff]
          %v4943 = vld [vmem:[%s4914 + $0xe0] sm:$0xff]
          %v4944 = vld [vmem:[%s4914 + $0xe8] sm:$0xff]
          %v4945 = vld [vmem:[%s4914 + $0xf0] sm:$0xff]
          %v4946 = vld [vmem:[%s4914 + $0xf8] sm:$0xff]
          %v4947 = vld [vmem:[%s4914 + $0x100] sm:$0xff]
          %v4948 = vld [vmem:[%s4914 + $0x108] sm:$0xff]
          %v4949 = vld [vmem:[%s4914 + $0x110] sm:$0xff]
          %v4950 = vld [vmem:[%s4914 + $0x118] sm:$0xff]
          %v4951 = vld [vmem:[%s4914 + $0x120] sm:$0xff]
          %v4952 = vld [vmem:[%s4914 + $0x128] sm:$0xff]
          %v4953 = vld [vmem:[%s4914 + $0x130] sm:$0xff]
          %v4954 = vld [vmem:[%s4914 + $0x138] sm:$0xff]
          %v4955 = vld [vmem:[%s4914 + $0x140] sm:$0xff]
          %v4956 = vld [vmem:[%s4914 + $0x148] sm:$0xff]
          %v4957 = vld [vmem:[%s4914 + $0x150] sm:$0xff]
          %v4958 = vld [vmem:[%s4914 + $0x158] sm:$0xff]
          %v4959 = vld [vmem:[%s4914 + $0x160] sm:$0xff]
          %v4960 = vld [vmem:[%s4914 + $0x168] sm:$0xff]
          %v4961 = vld [vmem:[%s4914 + $0x170] sm:$0xff]
          %v4962 = vld [vmem:[%s4914 + $0x178] sm:$0xff]
          %v4963 = vld [vmem:[%s4914 + $0x180] sm:$0xff]
          %v4964 = vld [vmem:[%s4914 + $0x188] sm:$0xff]
          %v4965 = vld [vmem:[%s4914 + $0x190] sm:$0xff]
          %v4966 = vld [vmem:[%s4914 + $0x198] sm:$0xff]
          %v4967 = vld [vmem:[%s4914 + $0x1a0] sm:$0xff]
          %v4968 = vld [vmem:[%s4914 + $0x1a8] sm:$0xff]
          %v4969 = vld [vmem:[%s4914 + $0x1b0] sm:$0xff]
          %v4970 = vld [vmem:[%s4914 + $0x1b8] sm:$0xff]
          %v4971 = vld [vmem:[%s4914 + $0x1c0] sm:$0xff]
          %v4972 = vld [vmem:[%s4914 + $0x1c8] sm:$0xff]
          %v4973 = vld [vmem:[%s4914 + $0x1d0] sm:$0xff]
          %v4974 = vld [vmem:[%s4914 + $0x1d8] sm:$0xff]
          %v4975 = vld [vmem:[%s4914 + $0x1e0] sm:$0xff]
          %v4976 = vld [vmem:[%s4914 + $0x1e8] sm:$0xff]
          %v4977 = vld [vmem:[%s4914 + $0x1f0] sm:$0xff]
          %v4978 = vld [vmem:[%s4914 + $0x1f8] sm:$0xff]
          %v4979 = vld [vmem:[%s4914 + $0x200] sm:$0xff]
          %v4980 = vld [vmem:[%s4914 + $0x208] sm:$0xff]
          %v4981 = vld [vmem:[%s4914 + $0x210] sm:$0xff]
          %v4982 = vld [vmem:[%s4914 + $0x218] sm:$0xff]
          %v4983 = vld [vmem:[%s4914 + $0x220] sm:$0xff]
          %v4984 = vld [vmem:[%s4914 + $0x228] sm:$0xff]
          %v4985 = vld [vmem:[%s4914 + $0x230] sm:$0xff]
          %v4986 = vld [vmem:[%s4914 + $0x238] sm:$0xff]
          %v4987 = vld [vmem:[%s4914 + $0x240] sm:$0xff]
          %v4988 = vld [vmem:[%s4914 + $0x248] sm:$0xff]
          %v4989 = vld [vmem:[%s4914 + $0x250] sm:$0xff]
          %v4990 = vld [vmem:[%s4914 + $0x258] sm:$0xff]
          %v4991 = vld [vmem:[%s4914 + $0x260] sm:$0xff]
          %v4992 = vld [vmem:[%s4914 + $0x268] sm:$0xff]
          %v4993 = vld [vmem:[%s4914 + $0x270] sm:$0xff]
          %v4994 = vld [vmem:[%s4914 + $0x278] sm:$0xff]
          %v4995 = vld [vmem:[%s4914 + $0x280] sm:$0xff]
          %v4996 = vld [vmem:[%s4914 + $0x288] sm:$0xff]
          %v4997 = vld [vmem:[%s4914 + $0x290] sm:$0xff]
          %v4998 = vld [vmem:[%s4914 + $0x298] sm:$0xff]
          %v4999 = vld [vmem:[%s4914 + $0x2a0] sm:$0xff]
          %v5000 = vld [vmem:[%s4914 + $0x2a8] sm:$0xff]
          %v5001 = vld [vmem:[%s4914 + $0x2b0] sm:$0xff]
          %v5002 = vld [vmem:[%s4914 + $0x2b8] sm:$0xff]
          %v5003 = vld [vmem:[%s4914 + $0x2c0] sm:$0xff]
          %v5004 = vld [vmem:[%s4914 + $0x2c8] sm:$0xff]
          %v5005 = vld [vmem:[%s4914 + $0x2d0] sm:$0xff]
          %v5006 = vld [vmem:[%s4914 + $0x2d8] sm:$0xff]
          %v5007 = vld [vmem:[%s4914 + $0x2e0] sm:$0xff]
          %v5008 = vld [vmem:[%s4914 + $0x2e8] sm:$0xff]
          %v5009 = vld [vmem:[%s4914 + $0x2f0] sm:$0xff]
          %v5010 = vld [vmem:[%s4914 + $0x2f8] sm:$0xff]
          %v5011 = vld [vmem:[%s4914 + $0x300] sm:$0xff]
          %v5012 = vld [vmem:[%s4914 + $0x308] sm:$0xff]
          %v5013 = vld [vmem:[%s4914 + $0x310] sm:$0xff]
          %v5014 = vld [vmem:[%s4914 + $0x318] sm:$0xff]
          %v5015 = vld [vmem:[%s4914 + $0x320] sm:$0xff]
          %v5016 = vld [vmem:[%s4914 + $0x328] sm:$0xff]
          %v5017 = vld [vmem:[%s4914 + $0x330] sm:$0xff]
          %v5018 = vld [vmem:[%s4914 + $0x338] sm:$0xff]
          %v5019 = vld [vmem:[%s4914 + $0x340] sm:$0xff]
          %v5020 = vld [vmem:[%s4914 + $0x348] sm:$0xff]
          %v5021 = vld [vmem:[%s4914 + $0x350] sm:$0xff]
          %v5022 = vld [vmem:[%s4914 + $0x358] sm:$0xff]
          %v5023 = vld [vmem:[%s4914 + $0x360] sm:$0xff]
          %v5024 = vld [vmem:[%s4914 + $0x368] sm:$0xff]
          %v5025 = vld [vmem:[%s4914 + $0x370] sm:$0xff]
          %v5026 = vld [vmem:[%s4914 + $0x378] sm:$0xff]
          %v5027 = vld [vmem:[%s4914 + $0x380] sm:$0xff]
          %v5028 = vld [vmem:[%s4914 + $0x388] sm:$0xff]
          %v5029 = vld [vmem:[%s4914 + $0x390] sm:$0xff]
          %v5030 = vld [vmem:[%s4914 + $0x398] sm:$0xff]
          %v5031 = vld [vmem:[%s4914 + $0x3a0] sm:$0xff]
          %v5032 = vld [vmem:[%s4914 + $0x3a8] sm:$0xff]
          %v5033 = vld [vmem:[%s4914 + $0x3b0] sm:$0xff]
          %v5034 = vld [vmem:[%s4914 + $0x3b8] sm:$0xff]
          %v5035 = vld [vmem:[%s4914 + $0x3c0] sm:$0xff]
          %v5036 = vld [vmem:[%s4914 + $0x3c8] sm:$0xff]
          %v5037 = vld [vmem:[%s4914 + $0x3d0] sm:$0xff]
          %v5038 = vld [vmem:[%s4914 + $0x3d8] sm:$0xff]
          %v5039 = vld [vmem:[%s4914 + $0x3e0] sm:$0xff]
          %v5040 = vld [vmem:[%s4914 + $0x3e8] sm:$0xff]
          %v5041 = vld [vmem:[%s4914 + $0x3f0] sm:$0xff]
          %v5042 = vld [vmem:[%s4914 + $0x3f8] sm:$0xff]
          %v5043 = vld [vmem:[%s4914 + $0x400] sm:$0xff]
          %v5044 = vld [vmem:[%s4914 + $0x408] sm:$0xff]
          %v5045 = vld [vmem:[%s4914 + $0x410] sm:$0xff]
          %v5046 = vld [vmem:[%s4914 + $0x418] sm:$0xff]
          %v5047 = vld [vmem:[%s4914 + $0x420] sm:$0xff]
          %v5048 = vld [vmem:[%s4914 + $0x428] sm:$0xff]
          %v5049 = vld [vmem:[%s4914 + $0x430] sm:$0xff]
          %v5050 = vld [vmem:[%s4914 + $0x438] sm:$0xff]
          %v5051 = vld [vmem:[%s4914 + $0x440] sm:$0xff]
          %v5052 = vld [vmem:[%s4914 + $0x448] sm:$0xff]
          %v5053 = vld [vmem:[%s4914 + $0x450] sm:$0xff]
          %v5054 = vld [vmem:[%s4914 + $0x458] sm:$0xff]
          %v5055 = vld [vmem:[%s4914 + $0x460] sm:$0xff]
          %v5056 = vld [vmem:[%s4914 + $0x468] sm:$0xff]
          %v5057 = vld [vmem:[%s4914 + $0x470] sm:$0xff]
          %v5058 = vld [vmem:[%s4914 + $0x478] sm:$0xff]
          %v5059 = vld [vmem:[%s4914 + $0x480] sm:$0xff]
          %v5060 = vld [vmem:[%s4914 + $0x488] sm:$0xff]
          %v5061 = vld [vmem:[%s4914 + $0x490] sm:$0xff]
          %v5062 = vld [vmem:[%s4914 + $0x498] sm:$0xff]
          %v5063 = vld [vmem:[%s4914 + $0x4a0] sm:$0xff]
          %v5064 = vld [vmem:[%s4914 + $0x4a8] sm:$0xff]
          %v5065 = vld [vmem:[%s4914 + $0x4b0] sm:$0xff]
          %v5066 = vld [vmem:[%s4914 + $0x4b8] sm:$0xff]
          %v5067 = vld [vmem:[%s4914 + $0x4c0] sm:$0xff]
          %v5068 = vld [vmem:[%s4914 + $0x4c8] sm:$0xff]
          %v5069 = vld [vmem:[%s4914 + $0x4d0] sm:$0xff]
          %v5070 = vld [vmem:[%s4914 + $0x4d8] sm:$0xff]
          %v5071 = vld [vmem:[%s4914 + $0x4e0] sm:$0xff]
          %v5072 = vld [vmem:[%s4914 + $0x4e8] sm:$0xff]
          %v5073 = vld [vmem:[%s4914 + $0x4f0] sm:$0xff]
          %v5074 = vld [vmem:[%s4914 + $0x4f8] sm:$0xff]
          %v5075 = vld [vmem:[%s4914 + $0x500] sm:$0xff]
          %v5076 = vld [vmem:[%s4914 + $0x508] sm:$0xff]
          %v5077 = vld [vmem:[%s4914 + $0x510] sm:$0xff]
          %v5078 = vld [vmem:[%s4914 + $0x518] sm:$0xff]
          %v5079 = vld [vmem:[%s4914 + $0x520] sm:$0xff]
          %v5080 = vld [vmem:[%s4914 + $0x528] sm:$0xff]
          %v5081 = vld [vmem:[%s4914 + $0x530] sm:$0xff]
          %v5082 = vld [vmem:[%s4914 + $0x538] sm:$0xff]
          %v5083 = vld [vmem:[%s4914 + $0x540] sm:$0xff]
          %v5084 = vld [vmem:[%s4914 + $0x548] sm:$0xff]
          %v5085 = vld [vmem:[%s4914 + $0x550] sm:$0xff]
          %v5086 = vld [vmem:[%s4914 + $0x558] sm:$0xff]
          %v5087 = vld [vmem:[%s4914 + $0x560] sm:$0xff]
          %v5088 = vld [vmem:[%s4914 + $0x568] sm:$0xff]
          %v5089 = vld [vmem:[%s4914 + $0x570] sm:$0xff]
          %v5090 = vld [vmem:[%s4914 + $0x578] sm:$0xff]
          %v5091 = vld [vmem:[%s4914 + $0x580] sm:$0xff]
          %v5092 = vld [vmem:[%s4914 + $0x588] sm:$0xff]
          %v5093 = vld [vmem:[%s4914 + $0x590] sm:$0xff]
          %v5094 = vld [vmem:[%s4914 + $0x598] sm:$0xff]
          %v5095 = vld [vmem:[%s4914 + $0x5a0] sm:$0xff]
          %v5096 = vld [vmem:[%s4914 + $0x5a8] sm:$0xff]
          %v5097 = vld [vmem:[%s4914 + $0x5b0] sm:$0xff]
          %v5098 = vld [vmem:[%s4914 + $0x5b8] sm:$0xff]
          %v5099 = vld [vmem:[%s4914 + $0x5c0] sm:$0xff]
          %v5100 = vld [vmem:[%s4914 + $0x5c8] sm:$0xff]
          %v5101 = vld [vmem:[%s4914 + $0x5d0] sm:$0xff]
          %v5102 = vld [vmem:[%s4914 + $0x5d8] sm:$0xff]
          %v5103 = vld [vmem:[%s4914 + $0x5e0] sm:$0xff]
          %v5104 = vld [vmem:[%s4914 + $0x5e8] sm:$0xff]
          %v5105 = vld [vmem:[%s4914 + $0x5f0] sm:$0xff]
          %v5106 = vld [vmem:[%s4914 + $0x5f8] sm:$0xff]
          %v5107 = vld [vmem:[%s4914 + $0x600] sm:$0xff]
          %v5108 = vld [vmem:[%s4914 + $0x608] sm:$0xff]
          %v5109 = vld [vmem:[%s4914 + $0x610] sm:$0xff]
          %v5110 = vld [vmem:[%s4914 + $0x618] sm:$0xff]
          %v5111 = vld [vmem:[%s4914 + $0x620] sm:$0xff]
          %v5112 = vld [vmem:[%s4914 + $0x628] sm:$0xff]
          %v5113 = vld [vmem:[%s4914 + $0x630] sm:$0xff]
          %v5114 = vld [vmem:[%s4914 + $0x638] sm:$0xff]
          %v5115 = vld [vmem:[%s4914 + $0x640] sm:$0xff]
          %v5116 = vld [vmem:[%s4914 + $0x648] sm:$0xff]
          %v5117 = vld [vmem:[%s4914 + $0x650] sm:$0xff]
          %v5118 = vld [vmem:[%s4914 + $0x658] sm:$0xff]
          %v5119 = vld [vmem:[%s4914 + $0x660] sm:$0xff]
          %v5120 = vld [vmem:[%s4914 + $0x668] sm:$0xff]
          %v5121 = vld [vmem:[%s4914 + $0x670] sm:$0xff]
          %v5122 = vld [vmem:[%s4914 + $0x678] sm:$0xff]
          %v5123 = vld [vmem:[%s4914 + $0x680] sm:$0xff]
          %v5124 = vld [vmem:[%s4914 + $0x688] sm:$0xff]
          %v5125 = vld [vmem:[%s4914 + $0x690] sm:$0xff]
          %v5126 = vld [vmem:[%s4914 + $0x698] sm:$0xff]
          %v5127 = vld [vmem:[%s4914 + $0x6a0] sm:$0xff]
          %v5128 = vld [vmem:[%s4914 + $0x6a8] sm:$0xff]
          %v5129 = vld [vmem:[%s4914 + $0x6b0] sm:$0xff]
          %v5130 = vld [vmem:[%s4914 + $0x6b8] sm:$0xff]
          %v5131 = vld [vmem:[%s4914 + $0x6c0] sm:$0xff]
          %v5132 = vld [vmem:[%s4914 + $0x6c8] sm:$0xff]
          %v5133 = vld [vmem:[%s4914 + $0x6d0] sm:$0xff]
          %v5134 = vld [vmem:[%s4914 + $0x6d8] sm:$0xff]
          %v5135 = vld [vmem:[%s4914 + $0x6e0] sm:$0xff]
          %v5136 = vld [vmem:[%s4914 + $0x6e8] sm:$0xff]
          %v5137 = vld [vmem:[%s4914 + $0x6f0] sm:$0xff]
          %v5138 = vld [vmem:[%s4914 + $0x6f8] sm:$0xff]
          %v5139 = vld [vmem:[%s4914 + $0x700] sm:$0xff]
          %v5140 = vld [vmem:[%s4914 + $0x708] sm:$0xff]
          %v5141 = vld [vmem:[%s4914 + $0x710] sm:$0xff]
          %v5142 = vld [vmem:[%s4914 + $0x718] sm:$0xff]
          %v5143 = vld [vmem:[%s4914 + $0x720] sm:$0xff]
          %v5144 = vld [vmem:[%s4914 + $0x728] sm:$0xff]
          %v5145 = vld [vmem:[%s4914 + $0x730] sm:$0xff]
          %v5146 = vld [vmem:[%s4914 + $0x738] sm:$0xff]
          %v5147 = vld [vmem:[%s4914 + $0x740] sm:$0xff]
          %v5148 = vld [vmem:[%s4914 + $0x748] sm:$0xff]
          %v5149 = vld [vmem:[%s4914 + $0x750] sm:$0xff]
          %v5150 = vld [vmem:[%s4914 + $0x758] sm:$0xff]
          %v5151 = vld [vmem:[%s4914 + $0x760] sm:$0xff]
          %v5152 = vld [vmem:[%s4914 + $0x768] sm:$0xff]
          %v5153 = vld [vmem:[%s4914 + $0x770] sm:$0xff]
          %v5154 = vld [vmem:[%s4914 + $0x778] sm:$0xff]
          %v5155 = vld [vmem:[%s4914 + $0x780] sm:$0xff]
          %v5156 = vld [vmem:[%s4914 + $0x788] sm:$0xff]
          %v5157 = vld [vmem:[%s4914 + $0x790] sm:$0xff]
          %v5158 = vld [vmem:[%s4914 + $0x798] sm:$0xff]
          %v5159 = vld [vmem:[%s4914 + $0x7a0] sm:$0xff]
          %v5160 = vld [vmem:[%s4914 + $0x7a8] sm:$0xff]
          %v5161 = vld [vmem:[%s4914 + $0x7b0] sm:$0xff]
          %v5162 = vld [vmem:[%s4914 + $0x7b8] sm:$0xff]
          %v5163 = vld [vmem:[%s4914 + $0x7c0] sm:$0xff]
          %v5164 = vld [vmem:[%s4914 + $0x7c8] sm:$0xff]
          %v5165 = vld [vmem:[%s4914 + $0x7d0] sm:$0xff]
          %v5166 = vld [vmem:[%s4914 + $0x7d8] sm:$0xff]
          %v5167 = vld [vmem:[%s4914 + $0x7e0] sm:$0xff]
          %v5168 = vld [vmem:[%s4914 + $0x7e8] sm:$0xff]
          %v5169 = vld [vmem:[%s4914 + $0x7f0] sm:$0xff]
          %v5170 = vld [vmem:[%s4914 + $0x7f8] sm:$0xff]
          %v5171 = vsub.f32 %v4915, %v4325
          %v5172 = vsub.f32 %v4916, %v4325
          %v5173 = vsub.f32 %v4917, %v4325
          %v5174 = vsub.f32 %v4918, %v4325
          %v5175 = vsub.f32 %v4919, %v4325
          %v5176 = vsub.f32 %v4920, %v4325
          %v5177 = vsub.f32 %v4921, %v4325
          %v5178 = vsub.f32 %v4922, %v4325
          %v5179 = vsub.f32 %v4923, %v4325
          %v5180 = vsub.f32 %v4924, %v4325
          %v5181 = vsub.f32 %v4925, %v4325
          %v5182 = vsub.f32 %v4926, %v4325
          %v5183 = vsub.f32 %v4927, %v4325
          %v5184 = vsub.f32 %v4928, %v4325
          %v5185 = vsub.f32 %v4929, %v4325
          %v5186 = vsub.f32 %v4930, %v4325
          %v5187 = vsub.f32 %v4931, %v4330
          %v5188 = vsub.f32 %v4932, %v4330
          %v5189 = vsub.f32 %v4933, %v4330
          %v5190 = vsub.f32 %v4934, %v4330
          %v5191 = vsub.f32 %v4935, %v4330
          %v5192 = vsub.f32 %v4936, %v4330
          %v5193 = vsub.f32 %v4937, %v4330
          %v5194 = vsub.f32 %v4938, %v4330
          %v5195 = vsub.f32 %v4939, %v4330
          %v5196 = vsub.f32 %v4940, %v4330
          %v5197 = vsub.f32 %v4941, %v4330
          %v5198 = vsub.f32 %v4942, %v4330
          %v5199 = vsub.f32 %v4943, %v4330
          %v5200 = vsub.f32 %v4944, %v4330
          %v5201 = vsub.f32 %v4945, %v4330
          %v5202 = vsub.f32 %v4946, %v4330
          %v5203 = vsub.f32 %v4947, %v4335
          %v5204 = vsub.f32 %v4948, %v4335
          %v5205 = vsub.f32 %v4949, %v4335
          %v5206 = vsub.f32 %v4950, %v4335
          %v5207 = vsub.f32 %v4951, %v4335
          %v5208 = vsub.f32 %v4952, %v4335
          %v5209 = vsub.f32 %v4953, %v4335
          %v5210 = vsub.f32 %v4954, %v4335
          %v5211 = vsub.f32 %v4955, %v4335
          %v5212 = vsub.f32 %v4956, %v4335
          %v5213 = vsub.f32 %v4957, %v4335
          %v5214 = vsub.f32 %v4958, %v4335
          %v5215 = vsub.f32 %v4959, %v4335
          %v5216 = vsub.f32 %v4960, %v4335
          %v5217 = vsub.f32 %v4961, %v4335
          %v5218 = vsub.f32 %v4962, %v4335
          %v5219 = vsub.f32 %v4963, %v4340
          %v5220 = vsub.f32 %v4964, %v4340
          %v5221 = vsub.f32 %v4965, %v4340
          %v5222 = vsub.f32 %v4966, %v4340
          %v5223 = vsub.f32 %v4967, %v4340
          %v5224 = vsub.f32 %v4968, %v4340
          %v5225 = vsub.f32 %v4969, %v4340
          %v5226 = vsub.f32 %v4970, %v4340
          %v5227 = vsub.f32 %v4971, %v4340
          %v5228 = vsub.f32 %v4972, %v4340
          %v5229 = vsub.f32 %v4973, %v4340
          %v5230 = vsub.f32 %v4974, %v4340
          %v5231 = vsub.f32 %v4975, %v4340
          %v5232 = vsub.f32 %v4976, %v4340
          %v5233 = vsub.f32 %v4977, %v4340
          %v5234 = vsub.f32 %v4978, %v4340
          %v5235 = vsub.f32 %v4979, %v4345
          %v5236 = vsub.f32 %v4980, %v4345
          %v5237 = vsub.f32 %v4981, %v4345
          %v5238 = vsub.f32 %v4982, %v4345
          %v5239 = vsub.f32 %v4983, %v4345
          %v5240 = vsub.f32 %v4984, %v4345
          %v5241 = vsub.f32 %v4985, %v4345
          %v5242 = vsub.f32 %v4986, %v4345
          %v5243 = vsub.f32 %v4987, %v4345
          %v5244 = vsub.f32 %v4988, %v4345
          %v5245 = vsub.f32 %v4989, %v4345
          %v5246 = vsub.f32 %v4990, %v4345
          %v5247 = vsub.f32 %v4991, %v4345
          %v5248 = vsub.f32 %v4992, %v4345
          %v5249 = vsub.f32 %v4993, %v4345
          %v5250 = vsub.f32 %v4994, %v4345
          %v5251 = vsub.f32 %v4995, %v4350
          %v5252 = vsub.f32 %v4996, %v4350
          %v5253 = vsub.f32 %v4997, %v4350
          %v5254 = vsub.f32 %v4998, %v4350
          %v5255 = vsub.f32 %v4999, %v4350
          %v5256 = vsub.f32 %v5000, %v4350
          %v5257 = vsub.f32 %v5001, %v4350
          %v5258 = vsub.f32 %v5002, %v4350
          %v5259 = vsub.f32 %v5003, %v4350
          %v5260 = vsub.f32 %v5004, %v4350
          %v5261 = vsub.f32 %v5005, %v4350
          %v5262 = vsub.f32 %v5006, %v4350
          %v5263 = vsub.f32 %v5007, %v4350
          %v5264 = vsub.f32 %v5008, %v4350
          %v5265 = vsub.f32 %v5009, %v4350
          %v5266 = vsub.f32 %v5010, %v4350
          %v5267 = vsub.f32 %v5011, %v4355
          %v5268 = vsub.f32 %v5012, %v4355
          %v5269 = vsub.f32 %v5013, %v4355
          %v5270 = vsub.f32 %v5014, %v4355
          %v5271 = vsub.f32 %v5015, %v4355
          %v5272 = vsub.f32 %v5016, %v4355
          %v5273 = vsub.f32 %v5017, %v4355
          %v5274 = vsub.f32 %v5018, %v4355
          %v5275 = vsub.f32 %v5019, %v4355
          %v5276 = vsub.f32 %v5020, %v4355
          %v5277 = vsub.f32 %v5021, %v4355
          %v5278 = vsub.f32 %v5022, %v4355
          %v5279 = vsub.f32 %v5023, %v4355
          %v5280 = vsub.f32 %v5024, %v4355
          %v5281 = vsub.f32 %v5025, %v4355
          %v5282 = vsub.f32 %v5026, %v4355
          %v5283 = vsub.f32 %v5027, %v4360
          %v5284 = vsub.f32 %v5028, %v4360
          %v5285 = vsub.f32 %v5029, %v4360
          %v5286 = vsub.f32 %v5030, %v4360
          %v5287 = vsub.f32 %v5031, %v4360
          %v5288 = vsub.f32 %v5032, %v4360
          %v5289 = vsub.f32 %v5033, %v4360
          %v5290 = vsub.f32 %v5034, %v4360
          %v5291 = vsub.f32 %v5035, %v4360
          %v5292 = vsub.f32 %v5036, %v4360
          %v5293 = vsub.f32 %v5037, %v4360
          %v5294 = vsub.f32 %v5038, %v4360
          %v5295 = vsub.f32 %v5039, %v4360
          %v5296 = vsub.f32 %v5040, %v4360
          %v5297 = vsub.f32 %v5041, %v4360
          %v5298 = vsub.f32 %v5042, %v4360
          %v5299 = vsub.f32 %v5043, %v4365
          %v5300 = vsub.f32 %v5044, %v4365
          %v5301 = vsub.f32 %v5045, %v4365
          %v5302 = vsub.f32 %v5046, %v4365
          %v5303 = vsub.f32 %v5047, %v4365
          %v5304 = vsub.f32 %v5048, %v4365
          %v5305 = vsub.f32 %v5049, %v4365
          %v5306 = vsub.f32 %v5050, %v4365
          %v5307 = vsub.f32 %v5051, %v4365
          %v5308 = vsub.f32 %v5052, %v4365
          %v5309 = vsub.f32 %v5053, %v4365
          %v5310 = vsub.f32 %v5054, %v4365
          %v5311 = vsub.f32 %v5055, %v4365
          %v5312 = vsub.f32 %v5056, %v4365
          %v5313 = vsub.f32 %v5057, %v4365
          %v5314 = vsub.f32 %v5058, %v4365
          %v5315 = vsub.f32 %v5059, %v4370
          %v5316 = vsub.f32 %v5060, %v4370
          %v5317 = vsub.f32 %v5061, %v4370
          %v5318 = vsub.f32 %v5062, %v4370
          %v5319 = vsub.f32 %v5063, %v4370
          %v5320 = vsub.f32 %v5064, %v4370
          %v5321 = vsub.f32 %v5065, %v4370
          %v5322 = vsub.f32 %v5066, %v4370
          %v5323 = vsub.f32 %v5067, %v4370
          %v5324 = vsub.f32 %v5068, %v4370
          %v5325 = vsub.f32 %v5069, %v4370
          %v5326 = vsub.f32 %v5070, %v4370
          %v5327 = vsub.f32 %v5071, %v4370
          %v5328 = vsub.f32 %v5072, %v4370
          %v5329 = vsub.f32 %v5073, %v4370
          %v5330 = vsub.f32 %v5074, %v4370
          %v5331 = vsub.f32 %v5075, %v4375
          %v5332 = vsub.f32 %v5076, %v4375
          %v5333 = vsub.f32 %v5077, %v4375
          %v5334 = vsub.f32 %v5078, %v4375
          %v5335 = vsub.f32 %v5079, %v4375
          %v5336 = vsub.f32 %v5080, %v4375
          %v5337 = vsub.f32 %v5081, %v4375
          %v5338 = vsub.f32 %v5082, %v4375
          %v5339 = vsub.f32 %v5083, %v4375
          %v5340 = vsub.f32 %v5084, %v4375
          %v5341 = vsub.f32 %v5085, %v4375
          %v5342 = vsub.f32 %v5086, %v4375
          %v5343 = vsub.f32 %v5087, %v4375
          %v5344 = vsub.f32 %v5088, %v4375
          %v5345 = vsub.f32 %v5089, %v4375
          %v5346 = vsub.f32 %v5090, %v4375
          %v5347 = vsub.f32 %v5091, %v4380
          %v5348 = vsub.f32 %v5092, %v4380
          %v5349 = vsub.f32 %v5093, %v4380
          %v5350 = vsub.f32 %v5094, %v4380
          %v5351 = vsub.f32 %v5095, %v4380
          %v5352 = vsub.f32 %v5096, %v4380
          %v5353 = vsub.f32 %v5097, %v4380
          %v5354 = vsub.f32 %v5098, %v4380
          %v5355 = vsub.f32 %v5099, %v4380
          %v5356 = vsub.f32 %v5100, %v4380
          %v5357 = vsub.f32 %v5101, %v4380
          %v5358 = vsub.f32 %v5102, %v4380
          %v5359 = vsub.f32 %v5103, %v4380
          %v5360 = vsub.f32 %v5104, %v4380
          %v5361 = vsub.f32 %v5105, %v4380
          %v5362 = vsub.f32 %v5106, %v4380
          %v5363 = vsub.f32 %v5107, %v4385
          %v5364 = vsub.f32 %v5108, %v4385
          %v5365 = vsub.f32 %v5109, %v4385
          %v5366 = vsub.f32 %v5110, %v4385
          %v5367 = vsub.f32 %v5111, %v4385
          %v5368 = vsub.f32 %v5112, %v4385
          %v5369 = vsub.f32 %v5113, %v4385
          %v5370 = vsub.f32 %v5114, %v4385
          %v5371 = vsub.f32 %v5115, %v4385
          %v5372 = vsub.f32 %v5116, %v4385
          %v5373 = vsub.f32 %v5117, %v4385
          %v5374 = vsub.f32 %v5118, %v4385
          %v5375 = vsub.f32 %v5119, %v4385
          %v5376 = vsub.f32 %v5120, %v4385
          %v5377 = vsub.f32 %v5121, %v4385
          %v5378 = vsub.f32 %v5122, %v4385
          %v5379 = vsub.f32 %v5123, %v4390
          %v5380 = vsub.f32 %v5124, %v4390
          %v5381 = vsub.f32 %v5125, %v4390
          %v5382 = vsub.f32 %v5126, %v4390
          %v5383 = vsub.f32 %v5127, %v4390
          %v5384 = vsub.f32 %v5128, %v4390
          %v5385 = vsub.f32 %v5129, %v4390
          %v5386 = vsub.f32 %v5130, %v4390
          %v5387 = vsub.f32 %v5131, %v4390
          %v5388 = vsub.f32 %v5132, %v4390
          %v5389 = vsub.f32 %v5133, %v4390
          %v5390 = vsub.f32 %v5134, %v4390
          %v5391 = vsub.f32 %v5135, %v4390
          %v5392 = vsub.f32 %v5136, %v4390
          %v5393 = vsub.f32 %v5137, %v4390
          %v5394 = vsub.f32 %v5138, %v4390
          %v5395 = vsub.f32 %v5139, %v4395
          %v5396 = vsub.f32 %v5140, %v4395
          %v5397 = vsub.f32 %v5141, %v4395
          %v5398 = vsub.f32 %v5142, %v4395
          %v5399 = vsub.f32 %v5143, %v4395
          %v5400 = vsub.f32 %v5144, %v4395
          %v5401 = vsub.f32 %v5145, %v4395
          %v5402 = vsub.f32 %v5146, %v4395
          %v5403 = vsub.f32 %v5147, %v4395
          %v5404 = vsub.f32 %v5148, %v4395
          %v5405 = vsub.f32 %v5149, %v4395
          %v5406 = vsub.f32 %v5150, %v4395
          %v5407 = vsub.f32 %v5151, %v4395
          %v5408 = vsub.f32 %v5152, %v4395
          %v5409 = vsub.f32 %v5153, %v4395
          %v5410 = vsub.f32 %v5154, %v4395
          %v5411 = vsub.f32 %v5155, %v4400
          %v5412 = vsub.f32 %v5156, %v4400
          %v5413 = vsub.f32 %v5157, %v4400
          %v5414 = vsub.f32 %v5158, %v4400
          %v5415 = vsub.f32 %v5159, %v4400
          %v5416 = vsub.f32 %v5160, %v4400
          %v5417 = vsub.f32 %v5161, %v4400
          %v5418 = vsub.f32 %v5162, %v4400
          %v5419 = vsub.f32 %v5163, %v4400
          %v5420 = vsub.f32 %v5164, %v4400
          %v5421 = vsub.f32 %v5165, %v4400
          %v5422 = vsub.f32 %v5166, %v4400
          %v5423 = vsub.f32 %v5167, %v4400
          %v5424 = vsub.f32 %v5168, %v4400
          %v5425 = vsub.f32 %v5169, %v4400
          %v5426 = vsub.f32 %v5170, %v4400
          %5427 = vst [vmem:[%s470 + $0x80] sm:$0xff] %v5171
          %5428 = vst [vmem:[%s470 + $0x88] sm:$0xff] %v5172
          %5429 = vst [vmem:[%s470 + $0x90] sm:$0xff] %v5173
          %5430 = vst [vmem:[%s470 + $0x98] sm:$0xff] %v5174
          %5431 = vst [vmem:[%s470 + $0xa0] sm:$0xff] %v5175
          %5432 = vst [vmem:[%s470 + $0xa8] sm:$0xff] %v5176
          %5433 = vst [vmem:[%s470 + $0xb0] sm:$0xff] %v5177
          %5434 = vst [vmem:[%s470 + $0xb8] sm:$0xff] %v5178
          %5435 = vst [vmem:[%s470 + $0xc0] sm:$0xff] %v5179
          %5436 = vst [vmem:[%s470 + $0xc8] sm:$0xff] %v5180
          %5437 = vst [vmem:[%s470 + $0xd0] sm:$0xff] %v5181
          %5438 = vst [vmem:[%s470 + $0xd8] sm:$0xff] %v5182
          %5439 = vst [vmem:[%s470 + $0xe0] sm:$0xff] %v5183
          %5440 = vst [vmem:[%s470 + $0xe8] sm:$0xff] %v5184
          %5441 = vst [vmem:[%s470 + $0xf0] sm:$0xff] %v5185
          %5442 = vst [vmem:[%s470 + $0xf8] sm:$0xff] %v5186
          %5443 = vst [vmem:[%s470 + $0x180] sm:$0xff] %v5187
          %5444 = vst [vmem:[%s470 + $0x188] sm:$0xff] %v5188
          %5445 = vst [vmem:[%s470 + $0x190] sm:$0xff] %v5189
          %5446 = vst [vmem:[%s470 + $0x198] sm:$0xff] %v5190
          %5447 = vst [vmem:[%s470 + $0x1a0] sm:$0xff] %v5191
          %5448 = vst [vmem:[%s470 + $0x1a8] sm:$0xff] %v5192
          %5449 = vst [vmem:[%s470 + $0x1b0] sm:$0xff] %v5193
          %5450 = vst [vmem:[%s470 + $0x1b8] sm:$0xff] %v5194
          %5451 = vst [vmem:[%s470 + $0x1c0] sm:$0xff] %v5195
          %5452 = vst [vmem:[%s470 + $0x1c8] sm:$0xff] %v5196
          %5453 = vst [vmem:[%s470 + $0x1d0] sm:$0xff] %v5197
          %5454 = vst [vmem:[%s470 + $0x1d8] sm:$0xff] %v5198
          %5455 = vst [vmem:[%s470 + $0x1e0] sm:$0xff] %v5199
          %5456 = vst [vmem:[%s470 + $0x1e8] sm:$0xff] %v5200
          %5457 = vst [vmem:[%s470 + $0x1f0] sm:$0xff] %v5201
          %5458 = vst [vmem:[%s470 + $0x1f8] sm:$0xff] %v5202
          %5459 = vst [vmem:[%s470 + $0x280] sm:$0xff] %v5203
          %5460 = vst [vmem:[%s470 + $0x288] sm:$0xff] %v5204
          %5461 = vst [vmem:[%s470 + $0x290] sm:$0xff] %v5205
          %5462 = vst [vmem:[%s470 + $0x298] sm:$0xff] %v5206
          %5463 = vst [vmem:[%s470 + $0x2a0] sm:$0xff] %v5207
          %5464 = vst [vmem:[%s470 + $0x2a8] sm:$0xff] %v5208
          %5465 = vst [vmem:[%s470 + $0x2b0] sm:$0xff] %v5209
          %5466 = vst [vmem:[%s470 + $0x2b8] sm:$0xff] %v5210
          %5467 = vst [vmem:[%s470 + $0x2c0] sm:$0xff] %v5211
          %5468 = vst [vmem:[%s470 + $0x2c8] sm:$0xff] %v5212
          %5469 = vst [vmem:[%s470 + $0x2d0] sm:$0xff] %v5213
          %5470 = vst [vmem:[%s470 + $0x2d8] sm:$0xff] %v5214
          %5471 = vst [vmem:[%s470 + $0x2e0] sm:$0xff] %v5215
          %5472 = vst [vmem:[%s470 + $0x2e8] sm:$0xff] %v5216
          %5473 = vst [vmem:[%s470 + $0x2f0] sm:$0xff] %v5217
          %5474 = vst [vmem:[%s470 + $0x2f8] sm:$0xff] %v5218
          %5475 = vst [vmem:[%s470 + $0x380] sm:$0xff] %v5219
          %5476 = vst [vmem:[%s470 + $0x388] sm:$0xff] %v5220
          %5477 = vst [vmem:[%s470 + $0x390] sm:$0xff] %v5221
          %5478 = vst [vmem:[%s470 + $0x398] sm:$0xff] %v5222
          %5479 = vst [vmem:[%s470 + $0x3a0] sm:$0xff] %v5223
          %5480 = vst [vmem:[%s470 + $0x3a8] sm:$0xff] %v5224
          %5481 = vst [vmem:[%s470 + $0x3b0] sm:$0xff] %v5225
          %5482 = vst [vmem:[%s470 + $0x3b8] sm:$0xff] %v5226
          %5483 = vst [vmem:[%s470 + $0x3c0] sm:$0xff] %v5227
          %5484 = vst [vmem:[%s470 + $0x3c8] sm:$0xff] %v5228
          %5485 = vst [vmem:[%s470 + $0x3d0] sm:$0xff] %v5229
          %5486 = vst [vmem:[%s470 + $0x3d8] sm:$0xff] %v5230
          %5487 = vst [vmem:[%s470 + $0x3e0] sm:$0xff] %v5231
          %5488 = vst [vmem:[%s470 + $0x3e8] sm:$0xff] %v5232
          %5489 = vst [vmem:[%s470 + $0x3f0] sm:$0xff] %v5233
          %5490 = vst [vmem:[%s470 + $0x3f8] sm:$0xff] %v5234
          %5491 = vst [vmem:[%s470 + $0x480] sm:$0xff] %v5235
          %5492 = vst [vmem:[%s470 + $0x488] sm:$0xff] %v5236
          %5493 = vst [vmem:[%s470 + $0x490] sm:$0xff] %v5237
          %5494 = vst [vmem:[%s470 + $0x498] sm:$0xff] %v5238
          %5495 = vst [vmem:[%s470 + $0x4a0] sm:$0xff] %v5239
          %5496 = vst [vmem:[%s470 + $0x4a8] sm:$0xff] %v5240
          %5497 = vst [vmem:[%s470 + $0x4b0] sm:$0xff] %v5241
          %5498 = vst [vmem:[%s470 + $0x4b8] sm:$0xff] %v5242
          %5499 = vst [vmem:[%s470 + $0x4c0] sm:$0xff] %v5243
          %5500 = vst [vmem:[%s470 + $0x4c8] sm:$0xff] %v5244
          %5501 = vst [vmem:[%s470 + $0x4d0] sm:$0xff] %v5245
          %5502 = vst [vmem:[%s470 + $0x4d8] sm:$0xff] %v5246
          %5503 = vst [vmem:[%s470 + $0x4e0] sm:$0xff] %v5247
          %5504 = vst [vmem:[%s470 + $0x4e8] sm:$0xff] %v5248
          %5505 = vst [vmem:[%s470 + $0x4f0] sm:$0xff] %v5249
          %5506 = vst [vmem:[%s470 + $0x4f8] sm:$0xff] %v5250
          %5507 = vst [vmem:[%s470 + $0x580] sm:$0xff] %v5251
          %5508 = vst [vmem:[%s470 + $0x588] sm:$0xff] %v5252
          %5509 = vst [vmem:[%s470 + $0x590] sm:$0xff] %v5253
          %5510 = vst [vmem:[%s470 + $0x598] sm:$0xff] %v5254
          %5511 = vst [vmem:[%s470 + $0x5a0] sm:$0xff] %v5255
          %5512 = vst [vmem:[%s470 + $0x5a8] sm:$0xff] %v5256
          %5513 = vst [vmem:[%s470 + $0x5b0] sm:$0xff] %v5257
          %5514 = vst [vmem:[%s470 + $0x5b8] sm:$0xff] %v5258
          %5515 = vst [vmem:[%s470 + $0x5c0] sm:$0xff] %v5259
          %5516 = vst [vmem:[%s470 + $0x5c8] sm:$0xff] %v5260
          %5517 = vst [vmem:[%s470 + $0x5d0] sm:$0xff] %v5261
          %5518 = vst [vmem:[%s470 + $0x5d8] sm:$0xff] %v5262
          %5519 = vst [vmem:[%s470 + $0x5e0] sm:$0xff] %v5263
          %5520 = vst [vmem:[%s470 + $0x5e8] sm:$0xff] %v5264
          %5521 = vst [vmem:[%s470 + $0x5f0] sm:$0xff] %v5265
          %5522 = vst [vmem:[%s470 + $0x5f8] sm:$0xff] %v5266
          %5523 = vst [vmem:[%s470 + $0x680] sm:$0xff] %v5267
          %5524 = vst [vmem:[%s470 + $0x688] sm:$0xff] %v5268
          %5525 = vst [vmem:[%s470 + $0x690] sm:$0xff] %v5269
          %5526 = vst [vmem:[%s470 + $0x698] sm:$0xff] %v5270
          %5527 = vst [vmem:[%s470 + $0x6a0] sm:$0xff] %v5271
          %5528 = vst [vmem:[%s470 + $0x6a8] sm:$0xff] %v5272
          %5529 = vst [vmem:[%s470 + $0x6b0] sm:$0xff] %v5273
          %5530 = vst [vmem:[%s470 + $0x6b8] sm:$0xff] %v5274
          %5531 = vst [vmem:[%s470 + $0x6c0] sm:$0xff] %v5275
          %5532 = vst [vmem:[%s470 + $0x6c8] sm:$0xff] %v5276
          %5533 = vst [vmem:[%s470 + $0x6d0] sm:$0xff] %v5277
          %5534 = vst [vmem:[%s470 + $0x6d8] sm:$0xff] %v5278
          %5535 = vst [vmem:[%s470 + $0x6e0] sm:$0xff] %v5279
          %5536 = vst [vmem:[%s470 + $0x6e8] sm:$0xff] %v5280
          %5537 = vst [vmem:[%s470 + $0x6f0] sm:$0xff] %v5281
          %5538 = vst [vmem:[%s470 + $0x6f8] sm:$0xff] %v5282
          %5539 = vst [vmem:[%s470 + $0x780] sm:$0xff] %v5283
          %5540 = vst [vmem:[%s470 + $0x788] sm:$0xff] %v5284
          %5541 = vst [vmem:[%s470 + $0x790] sm:$0xff] %v5285
          %5542 = vst [vmem:[%s470 + $0x798] sm:$0xff] %v5286
          %5543 = vst [vmem:[%s470 + $0x7a0] sm:$0xff] %v5287
          %5544 = vst [vmem:[%s470 + $0x7a8] sm:$0xff] %v5288
          %5545 = vst [vmem:[%s470 + $0x7b0] sm:$0xff] %v5289
          %5546 = vst [vmem:[%s470 + $0x7b8] sm:$0xff] %v5290
          %5547 = vst [vmem:[%s470 + $0x7c0] sm:$0xff] %v5291
          %5548 = vst [vmem:[%s470 + $0x7c8] sm:$0xff] %v5292
          %5549 = vst [vmem:[%s470 + $0x7d0] sm:$0xff] %v5293
          %5550 = vst [vmem:[%s470 + $0x7d8] sm:$0xff] %v5294
          %5551 = vst [vmem:[%s470 + $0x7e0] sm:$0xff] %v5295
          %5552 = vst [vmem:[%s470 + $0x7e8] sm:$0xff] %v5296
          %5553 = vst [vmem:[%s470 + $0x7f0] sm:$0xff] %v5297
          %5554 = vst [vmem:[%s470 + $0x7f8] sm:$0xff] %v5298
          %5555 = vst [vmem:[%s470 + $0x880] sm:$0xff] %v5299
          %5556 = vst [vmem:[%s470 + $0x888] sm:$0xff] %v5300
          %5557 = vst [vmem:[%s470 + $0x890] sm:$0xff] %v5301
          %5558 = vst [vmem:[%s470 + $0x898] sm:$0xff] %v5302
          %5559 = vst [vmem:[%s470 + $0x8a0] sm:$0xff] %v5303
          %5560 = vst [vmem:[%s470 + $0x8a8] sm:$0xff] %v5304
          %5561 = vst [vmem:[%s470 + $0x8b0] sm:$0xff] %v5305
          %5562 = vst [vmem:[%s470 + $0x8b8] sm:$0xff] %v5306
          %5563 = vst [vmem:[%s470 + $0x8c0] sm:$0xff] %v5307
          %5564 = vst [vmem:[%s470 + $0x8c8] sm:$0xff] %v5308
          %5565 = vst [vmem:[%s470 + $0x8d0] sm:$0xff] %v5309
          %5566 = vst [vmem:[%s470 + $0x8d8] sm:$0xff] %v5310
          %5567 = vst [vmem:[%s470 + $0x8e0] sm:$0xff] %v5311
          %5568 = vst [vmem:[%s470 + $0x8e8] sm:$0xff] %v5312
          %5569 = vst [vmem:[%s470 + $0x8f0] sm:$0xff] %v5313
          %5570 = vst [vmem:[%s470 + $0x8f8] sm:$0xff] %v5314
          %5571 = vst [vmem:[%s470 + $0x980] sm:$0xff] %v5315
          %5572 = vst [vmem:[%s470 + $0x988] sm:$0xff] %v5316
          %5573 = vst [vmem:[%s470 + $0x990] sm:$0xff] %v5317
          %5574 = vst [vmem:[%s470 + $0x998] sm:$0xff] %v5318
          %5575 = vst [vmem:[%s470 + $0x9a0] sm:$0xff] %v5319
          %5576 = vst [vmem:[%s470 + $0x9a8] sm:$0xff] %v5320
          %5577 = vst [vmem:[%s470 + $0x9b0] sm:$0xff] %v5321
          %5578 = vst [vmem:[%s470 + $0x9b8] sm:$0xff] %v5322
          %5579 = vst [vmem:[%s470 + $0x9c0] sm:$0xff] %v5323
          %5580 = vst [vmem:[%s470 + $0x9c8] sm:$0xff] %v5324
          %5581 = vst [vmem:[%s470 + $0x9d0] sm:$0xff] %v5325
          %5582 = vst [vmem:[%s470 + $0x9d8] sm:$0xff] %v5326
          %5583 = vst [vmem:[%s470 + $0x9e0] sm:$0xff] %v5327
          %5584 = vst [vmem:[%s470 + $0x9e8] sm:$0xff] %v5328
          %5585 = vst [vmem:[%s470 + $0x9f0] sm:$0xff] %v5329
          %5586 = vst [vmem:[%s470 + $0x9f8] sm:$0xff] %v5330
          %5587 = vst [vmem:[%s470 + $0xa80] sm:$0xff] %v5331
          %5588 = vst [vmem:[%s470 + $0xa88] sm:$0xff] %v5332
          %5589 = vst [vmem:[%s470 + $0xa90] sm:$0xff] %v5333
          %5590 = vst [vmem:[%s470 + $0xa98] sm:$0xff] %v5334
          %5591 = vst [vmem:[%s470 + $0xaa0] sm:$0xff] %v5335
          %5592 = vst [vmem:[%s470 + $0xaa8] sm:$0xff] %v5336
          %5593 = vst [vmem:[%s470 + $0xab0] sm:$0xff] %v5337
          %5594 = vst [vmem:[%s470 + $0xab8] sm:$0xff] %v5338
          %5595 = vst [vmem:[%s470 + $0xac0] sm:$0xff] %v5339
          %5596 = vst [vmem:[%s470 + $0xac8] sm:$0xff] %v5340
          %5597 = vst [vmem:[%s470 + $0xad0] sm:$0xff] %v5341
          %5598 = vst [vmem:[%s470 + $0xad8] sm:$0xff] %v5342
          %5599 = vst [vmem:[%s470 + $0xae0] sm:$0xff] %v5343
          %5600 = vst [vmem:[%s470 + $0xae8] sm:$0xff] %v5344
          %5601 = vst [vmem:[%s470 + $0xaf0] sm:$0xff] %v5345
          %5602 = vst [vmem:[%s470 + $0xaf8] sm:$0xff] %v5346
          %5603 = vst [vmem:[%s470 + $0xb80] sm:$0xff] %v5347
          %5604 = vst [vmem:[%s470 + $0xb88] sm:$0xff] %v5348
          %5605 = vst [vmem:[%s470 + $0xb90] sm:$0xff] %v5349
          %5606 = vst [vmem:[%s470 + $0xb98] sm:$0xff] %v5350
          %5607 = vst [vmem:[%s470 + $0xba0] sm:$0xff] %v5351
          %5608 = vst [vmem:[%s470 + $0xba8] sm:$0xff] %v5352
          %5609 = vst [vmem:[%s470 + $0xbb0] sm:$0xff] %v5353
          %5610 = vst [vmem:[%s470 + $0xbb8] sm:$0xff] %v5354
          %5611 = vst [vmem:[%s470 + $0xbc0] sm:$0xff] %v5355
          %5612 = vst [vmem:[%s470 + $0xbc8] sm:$0xff] %v5356
          %5613 = vst [vmem:[%s470 + $0xbd0] sm:$0xff] %v5357
          %5614 = vst [vmem:[%s470 + $0xbd8] sm:$0xff] %v5358
          %5615 = vst [vmem:[%s470 + $0xbe0] sm:$0xff] %v5359
          %5616 = vst [vmem:[%s470 + $0xbe8] sm:$0xff] %v5360
          %5617 = vst [vmem:[%s470 + $0xbf0] sm:$0xff] %v5361
          %5618 = vst [vmem:[%s470 + $0xbf8] sm:$0xff] %v5362
          %5619 = vst [vmem:[%s470 + $0xc80] sm:$0xff] %v5363
          %5620 = vst [vmem:[%s470 + $0xc88] sm:$0xff] %v5364
          %5621 = vst [vmem:[%s470 + $0xc90] sm:$0xff] %v5365
          %5622 = vst [vmem:[%s470 + $0xc98] sm:$0xff] %v5366
          %5623 = vst [vmem:[%s470 + $0xca0] sm:$0xff] %v5367
          %5624 = vst [vmem:[%s470 + $0xca8] sm:$0xff] %v5368
          %5625 = vst [vmem:[%s470 + $0xcb0] sm:$0xff] %v5369
          %5626 = vst [vmem:[%s470 + $0xcb8] sm:$0xff] %v5370
          %5627 = vst [vmem:[%s470 + $0xcc0] sm:$0xff] %v5371
          %5628 = vst [vmem:[%s470 + $0xcc8] sm:$0xff] %v5372
          %5629 = vst [vmem:[%s470 + $0xcd0] sm:$0xff] %v5373
          %5630 = vst [vmem:[%s470 + $0xcd8] sm:$0xff] %v5374
          %5631 = vst [vmem:[%s470 + $0xce0] sm:$0xff] %v5375
          %5632 = vst [vmem:[%s470 + $0xce8] sm:$0xff] %v5376
          %5633 = vst [vmem:[%s470 + $0xcf0] sm:$0xff] %v5377
          %5634 = vst [vmem:[%s470 + $0xcf8] sm:$0xff] %v5378
          %5635 = vst [vmem:[%s470 + $0xd80] sm:$0xff] %v5379
          %5636 = vst [vmem:[%s470 + $0xd88] sm:$0xff] %v5380
          %5637 = vst [vmem:[%s470 + $0xd90] sm:$0xff] %v5381
          %5638 = vst [vmem:[%s470 + $0xd98] sm:$0xff] %v5382
          %5639 = vst [vmem:[%s470 + $0xda0] sm:$0xff] %v5383
          %5640 = vst [vmem:[%s470 + $0xda8] sm:$0xff] %v5384
          %5641 = vst [vmem:[%s470 + $0xdb0] sm:$0xff] %v5385
          %5642 = vst [vmem:[%s470 + $0xdb8] sm:$0xff] %v5386
          %5643 = vst [vmem:[%s470 + $0xdc0] sm:$0xff] %v5387
          %5644 = vst [vmem:[%s470 + $0xdc8] sm:$0xff] %v5388
          %5645 = vst [vmem:[%s470 + $0xdd0] sm:$0xff] %v5389
          %5646 = vst [vmem:[%s470 + $0xdd8] sm:$0xff] %v5390
          %5647 = vst [vmem:[%s470 + $0xde0] sm:$0xff] %v5391
          %5648 = vst [vmem:[%s470 + $0xde8] sm:$0xff] %v5392
          %5649 = vst [vmem:[%s470 + $0xdf0] sm:$0xff] %v5393
          %5650 = vst [vmem:[%s470 + $0xdf8] sm:$0xff] %v5394
          %5651 = vst [vmem:[%s470 + $0xe80] sm:$0xff] %v5395
          %5652 = vst [vmem:[%s470 + $0xe88] sm:$0xff] %v5396
          %5653 = vst [vmem:[%s470 + $0xe90] sm:$0xff] %v5397
          %5654 = vst [vmem:[%s470 + $0xe98] sm:$0xff] %v5398
          %5655 = vst [vmem:[%s470 + $0xea0] sm:$0xff] %v5399
          %5656 = vst [vmem:[%s470 + $0xea8] sm:$0xff] %v5400
          %5657 = vst [vmem:[%s470 + $0xeb0] sm:$0xff] %v5401
          %5658 = vst [vmem:[%s470 + $0xeb8] sm:$0xff] %v5402
          %5659 = vst [vmem:[%s470 + $0xec0] sm:$0xff] %v5403
          %5660 = vst [vmem:[%s470 + $0xec8] sm:$0xff] %v5404
          %5661 = vst [vmem:[%s470 + $0xed0] sm:$0xff] %v5405
          %5662 = vst [vmem:[%s470 + $0xed8] sm:$0xff] %v5406
          %5663 = vst [vmem:[%s470 + $0xee0] sm:$0xff] %v5407
          %5664 = vst [vmem:[%s470 + $0xee8] sm:$0xff] %v5408
          %5665 = vst [vmem:[%s470 + $0xef0] sm:$0xff] %v5409
          %5666 = vst [vmem:[%s470 + $0xef8] sm:$0xff] %v5410
          %5667 = vst [vmem:[%s470 + $0xf80] sm:$0xff] %v5411
          %5668 = vst [vmem:[%s470 + $0xf88] sm:$0xff] %v5412
          %5669 = vst [vmem:[%s470 + $0xf90] sm:$0xff] %v5413
          %5670 = vst [vmem:[%s470 + $0xf98] sm:$0xff] %v5414
          %5671 = vst [vmem:[%s470 + $0xfa0] sm:$0xff] %v5415
          %5672 = vst [vmem:[%s470 + $0xfa8] sm:$0xff] %v5416
          %5673 = vst [vmem:[%s470 + $0xfb0] sm:$0xff] %v5417
          %5674 = vst [vmem:[%s470 + $0xfb8] sm:$0xff] %v5418
          %5675 = vst [vmem:[%s470 + $0xfc0] sm:$0xff] %v5419
          %5676 = vst [vmem:[%s470 + $0xfc8] sm:$0xff] %v5420
          %5677 = vst [vmem:[%s470 + $0xfd0] sm:$0xff] %v5421
          %5678 = vst [vmem:[%s470 + $0xfd8] sm:$0xff] %v5422
          %5679 = vst [vmem:[%s470 + $0xfe0] sm:$0xff] %v5423
          %5680 = vst [vmem:[%s470 + $0xfe8] sm:$0xff] %v5424
          %5681 = vst [vmem:[%s470 + $0xff0] sm:$0xff] %v5425
          %5682 = vst [vmem:[%s470 + $0xff8] sm:$0xff] %v5426
        $region63: #{skipgram_forward.1} parent=50 // pred_fallthru
          _
        %s5683 = sand.u32 %s110, 1
        %s5684 = scalar_lea.sflag [#allocation7], %s5683
        %s5685 = sand.u32 %s110, 1
        %s5686 = smul.addr %s5685, 4096
        %s5687 = scalar_lea.vmem [#allocation6], %s5686
        // Predicated region
        $region64: #{skipgram_forward.1} parent=50 // pred_check
          %p5688 = pneg %p120
        $region65: #{skipgram_forward.1} parent=50 // pred_check_branch
          %5690 = sbr.rel (%p5688) target = $region67
        $region66: #{skipgram_forward.1} parent=50 // pred_region
          %s5691 = smul.u32 16, %s21
          %5693 = vsyncadd %s5684, 0
          %s5694 = smul.addr %s5691, 32
          %s5695 = smul.addr %s5694, 8
          %s5696 = scalar_lea.hbm %s3, %s5695
          %s5697 = sshll.u32 %s5687, 4
          %s5698 = int_to_ptr.vmem [resolvable:$true] %s5697
          %s5699 = sshll.u32 %s5696, 4
          %s5700 = int_to_ptr.hbm [resolvable:$true] %s5699
          %5705 = dma.vmem_to_hbm [thread:$0]  %s5698, 65536, %s5700, %s5684, 4096, 4096, 256
        $region67: #{skipgram_forward.1} parent=50 // pred_fallthru
          _
      $region51: #{skipgram_forward.1} parent=5 // pred_fallthru
        _
      %p5706 = scmp.le.s32.totalorder 2, %s12
      // Predicated region
      $region68: #{skipgram_forward.1} parent=5 // pred_check
        %p5707 = pneg %p5706
      $region69: #{skipgram_forward.1} parent=5 // pred_check_branch
        %5709 = sbr.rel (%p5707) target = $region71
      $region70: #{skipgram_forward.1} parent=5 // pred_region
        %s5710 = ssub.s32 %s12, 2
        // Predicated region
        $region72: #{skipgram_forward.1} parent=70 // pred_check
          %p5711 = pneg %p126
        $region73: #{skipgram_forward.1} parent=70 // pred_check_branch
          %5713 = sbr.rel (%p5711) target = $region75
        $region74: #{skipgram_forward.1} parent=70 // pred_region
          %s5714 = sand.u32 %s111, 1
          %s5715 = scalar_lea.sflag [#allocation7], %s5714
          %s5716 = sand.u32 %s111, 1
          %s5717 = smul.addr %s5716, 4096
          %s5718 = scalar_lea.vmem [#allocation6], %s5717
          %5720 = dma.done %s5715, 65536
        $region75: #{skipgram_forward.1} parent=70 // pred_fallthru
          _
      $region71: #{skipgram_forward.1} parent=5 // pred_fallthru
        _
    $region6: #{skipgram_forward.1} parent=1 // loop_footer
      %s16 = sadd.s32 1, %s12
    $region7: #{skipgram_forward.1} parent=1 // loop_footer_branch
      %11 = sbr.rel target = $region3
    $region8: #{skipgram_forward.1} parent=1 // loop_exit
      _
    %5721 = vsyncpa [#allocation7], 1
    %s5722 = scalar_lea.sflag [#allocation7], 1
    %5723 = vsyncpa %s5722, 1

</llo_original>
